<compile_context>
chip_gen: v7x
topology: tpu7x:2x2x1
jax: 0.10.0
libtpu: 0.0.40
codegen_flags: <defaults>
</compile_context>

<pallas_src>
import functools

import jax
import jax.numpy as jnp
from jax.experimental import pallas as pl
from jax.experimental.pallas import tpu as pltpu


def _tcn_stacks_kernel(x_ref, win_ref, bin_ref,
                       c1w_ref, c1b_ref, c2w_ref, c2b_ref,
                       skw_ref, skb_ref, o_ref,
                       *, M, T, dilations):
    """One grid step: x_ref (Cin, M=Bblk*T) -> o_ref (C, M)."""
    x = x_ref[...]                                          # (Cin, M) bf16

    def mm(w_bf16, a_bf16):                                 # MXU, f32 accumulate
        return jnp.dot(w_bf16, a_bf16, preferred_element_type=jnp.float32)

    # TCNStacks.conv1: CausalConv1d with kernel_size=1 == pointwise conv.
    h = mm(win_ref[...], x) + bin_ref[...]                  # (C, M) f32

    # Hoisted once: local time index of every fused lane (col % T), as a
    # (1, M) row so jnp.where broadcasts it over the C sublanes.  Reused by
    # every causal shift; also prevents roll wrap-around from leaking data
    # across batch-element boundaries inside the fused (Bblk*T) lane axis.
    t_idx = jax.lax.broadcasted_iota(jnp.int32, (1, M), 1) % T

    def causal_conv_k2(inp, w0, w1, b, d):
        # y[:, t] = W_tap0 @ x[:, t-d] + W_tap1 @ x[:, t] + b
        # Two small K=C dots (no lane-axis concat / (2C, M) materialization).
        shifted = jnp.where(t_idx >= d, pltpu.roll(inp, shift=d, axis=1), 0.0)
        return (mm(w0, shifted.astype(jnp.bfloat16)) +
                mm(w1, inp.astype(jnp.bfloat16)) + b)

    # TODO(synk): dropout layers are identity here (TCNStacks default p=0.0 /
    # inference); nonzero-p training-mode dropout is not implemented.
    # Static unroll is fine at L=5; for num_stacks > 1 (L >= 10) switch to
    # lax.fori_loop with dynamic ref indexing to bound vreg live ranges.
    for l, d in enumerate(dilations):
        a = jnp.maximum(
            causal_conv_k2(h, c1w_ref[2 * l], c1w_ref[2 * l + 1],
                           c1b_ref[l], d), 0.0)
        z = jnp.maximum(
            causal_conv_k2(a, c2w_ref[2 * l], c2w_ref[2 * l + 1],
                           c2b_ref[l], d), 0.0)
        skip_out = mm(skw_ref[l], z.astype(jnp.bfloat16)) + skb_ref[l]
        h = jnp.maximum(skip_out + h, 0.0)                  # residual + relu

    o_ref[...] = h.astype(o_ref.dtype)                      # bf16 store


def _pack_params(params):
    """Transpose weights to (cout, cin) for the channels-on-sublanes layout,
    biases to column vectors, and cast matmul operands to bf16."""
    L = params["c1w"].shape[0]
    C = params["w_in"].shape[1]

    def taps(w):    # (L, 2, Cin, Cout) -> (2L, Cout, Cin), l-major tap-minor
        return (jnp.transpose(w, (0, 1, 3, 2))
                .reshape(2 * L, C, C).astype(jnp.bfloat16))

    def col(b):     # (..., 1, C) -> (..., C, 1) f32 column bias
        return jnp.swapaxes(b, -1, -2).astype(jnp.float32)

    return (
        jnp.transpose(params["w_in"]).astype(jnp.bfloat16),      # (C, Cin)
        col(params["b_in"]),                                      # (C, 1)
        taps(params["c1w"]),                                      # (2L, C, C)
        col(params["c1b"]),                                       # (L, C, 1)
        taps(params["c2w"]),                                      # (2L, C, C)
        col(params["c2b"]),                                       # (L, C, 1)
        jnp.transpose(params["skw"], (0, 2, 1)).astype(jnp.bfloat16),  # (L,C,C)
        col(params["skb"]),                                       # (L, C, 1)
    )


def tcn_stacks_forward(x_ncw, params, dilations, *, block_batch=None):
    """x_ncw: [B, Cin, T] (PyTorch NCW). Returns [B, C, T] float32."""
    B, Cin, T = x_ncw.shape
    C = params["w_in"].shape[1]
    L = len(dilations)
    assert C % 8 == 0, "out_channels must be a multiple of 8 sublanes"

    if block_batch is None:
        # Fuse the whole batch into one grid step: best on single-TC v5e/v6e
        # (no per-step overhead, max MXU row occupancy per push).
        block_batch = B
        # On dual-TC v7x, split into >=4 lane-dense steps when sizes allow so
        # both cores get pipelined work.  Guarded: falls back to B otherwise.
        try:
            kind = jax.devices()[0].device_kind.lower()
            if (("v7" in kind or "7x" in kind)
                    and B % 4 == 0 and ((B // 4) * T) % 128 == 0):
                block_batch = B // 4
        except Exception:
            pass
    Bblk = block_batch
    assert B % Bblk == 0, (B, Bblk)
    M = Bblk * T
    assert Bblk == B or M % 128 == 0, (
        "per-step lane extent must be a multiple of 128 when tiling the batch")

    (w_in, b_in, c1w, c1b, c2w, c2b, skw, skb) = _pack_params(params)

    # NCW -> (Cin, B*T) with lanes b-major / t-minor; bf16 operand for the MXU.
    x2d = jnp.transpose(x_ncw, (1, 0, 2)).reshape(Cin, B * T).astype(jnp.bfloat16)

    kernel = functools.partial(_tcn_stacks_kernel, M=M, T=T,
                               dilations=tuple(dilations))

    out2d = pl.pallas_call(
        kernel,
        out_shape=jax.ShapeDtypeStruct((C, B * T), jnp.bfloat16),
        grid_spec=pltpu.PrefetchScalarGridSpec(
            num_scalar_prefetch=0,
            grid=(B // Bblk,),
            in_specs=[
                pl.BlockSpec((Cin, M),      lambda b: (0, b)),       # x rows
                pl.BlockSpec((C, Cin),      lambda b: (0, 0)),       # w_in^T
                pl.BlockSpec((C, 1),        lambda b: (0, 0)),       # b_in
                pl.BlockSpec((2 * L, C, C), lambda b: (0, 0, 0)),    # c1w taps
                pl.BlockSpec((L, C, 1),     lambda b: (0, 0, 0)),    # c1b
                pl.BlockSpec((2 * L, C, C), lambda b: (0, 0, 0)),    # c2w taps
                pl.BlockSpec((L, C, 1),     lambda b: (0, 0, 0)),    # c2b
                pl.BlockSpec((L, C, C),     lambda b: (0, 0, 0)),    # skw^T
                pl.BlockSpec((L, C, 1),     lambda b: (0, 0, 0)),    # skb
            ],
            out_specs=pl.BlockSpec((C, M), lambda b: (0, b)),
        ),
        compiler_params=pltpu.CompilerParams(
            dimension_semantics=("parallel",)),
    )(x2d, w_in, b_in, c1w, c1b, c2w, c2b, skw, skb)

    # (C, B*T) bf16 -> (B, C, T) f32 for the consumer.
    out = out2d.reshape(C, B, T).astype(jnp.float32)
    return jnp.transpose(out, (1, 0, 2))


def tcn_stacks_ref(x_ncw, params, dilations):
    """Pure-JAX f32 reference (same math, no Pallas) for verification."""
    x = jnp.transpose(x_ncw, (0, 2, 1)).astype(jnp.float32)      # [B, T, Cin]
    B, T, _ = x.shape
    C = params["w_in"].shape[1]
    h = jnp.einsum("btk,kc->btc", x, params["w_in"]) + params["b_in"]

    def shift(z, d):
        return jnp.concatenate(
            [jnp.zeros((B, d, C), z.dtype), z[:, :T - d, :]], axis=1)

    for l, d in enumerate(dilations):
        def cconv(z, w, b):
            return (jnp.einsum("btk,kc->btc", shift(z, d), w[0]) +
                    jnp.einsum("btk,kc->btc", z, w[1]) + b)
        a = jax.nn.relu(cconv(h, params["c1w"][l], params["c1b"][l]))
        zz = jax.nn.relu(cconv(a, params["c2w"][l], params["c2b"][l]))
        skip_out = (jnp.einsum("btk,kc->btc", zz, params["skw"][l]) +
                    params["skb"][l])
        h = jax.nn.relu(skip_out + h)
    return jnp.transpose(h, (0, 2, 1))


if __name__ == "__main__":
    # Small shapes consistent with the module: num_inputs=4, out_channels=32,
    # batch=4, sequence length T=32, one stack of dilations (1,2,4,8,16), k=2.
    B, Cin, T, C = 4, 4, 32, 32
    num_stacks = 1
    dilations = (1, 2, 4, 8, 16) * num_stacks
    L = len(dilations)

    key = jax.random.PRNGKey(0)
    keys = jax.random.split(key, 9)
    # Deterministic synthetic weights. Block convs / skip conv use N(0, 0.01)
    # like TemporalBlockWithSkip.init_weights; biases are small randoms.
    # Weights stored as [k, cin, cout] matrices (PyTorch conv weight transposed).
    params = {
        "w_in": 0.05 * jax.random.normal(keys[0], (Cin, C), jnp.float32),
        "b_in": 0.05 * jax.random.normal(keys[1], (1, C), jnp.float32),
        "c1w": 0.01 * jax.random.normal(keys[2], (L, 2, C, C), jnp.float32),
        "c1b": 0.05 * jax.random.normal(keys[3], (L, 1, C), jnp.float32),
        "c2w": 0.01 * jax.random.normal(keys[4], (L, 2, C, C), jnp.float32),
        "c2b": 0.05 * jax.random.normal(keys[5], (L, 1, C), jnp.float32),
        "skw": 0.01 * jax.random.normal(keys[6], (L, C, C), jnp.float32),
        "skb": 0.05 * jax.random.normal(keys[7], (L, 1, C), jnp.float32),
    }
    x = jax.random.normal(keys[8], (B, Cin, T), jnp.float32)     # NCW input

    out = jax.block_until_ready(tcn_stacks_forward(x, params, dilations))
    ref = tcn_stacks_ref(x, params, dilations)

    assert out.shape == (B, C, T), out.shape
    # bf16 MXU operands / bf16 output vs f32 reference -> loosened tolerance.
    if not jnp.allclose(out, ref, atol=2e-2, rtol=2e-2):
        raise AssertionError("Pallas kernel mismatch vs pure-JAX reference")
    print("KERNEL_OK")
</pallas_src>

<mosaic_0001>
module attributes {stable_mosaic.version = 11 : i64} {
  func.func @_tcn_stacks_kernel(%arg0: i32, %arg1: memref<4x128xbf16, #tpu.memory_space<vmem>>, %arg2: memref<32x4xbf16, #tpu.memory_space<vmem>>, %arg3: memref<32x1xf32, #tpu.memory_space<vmem>>, %arg4: memref<10x32x32xbf16, #tpu.memory_space<vmem>>, %arg5: memref<5x32x1xf32, #tpu.memory_space<vmem>>, %arg6: memref<10x32x32xbf16, #tpu.memory_space<vmem>>, %arg7: memref<5x32x1xf32, #tpu.memory_space<vmem>>, %arg8: memref<5x32x32xbf16, #tpu.memory_space<vmem>>, %arg9: memref<5x32x1xf32, #tpu.memory_space<vmem>>, %arg10: memref<32x128xbf16, #tpu.memory_space<vmem>>) attributes {dimension_semantics = [#tpu.dimension_semantics<parallel>], iteration_bounds = array<i64: 1>, scalar_prefetch = 0 : i64, scratch_operands = 0 : i64, tpu.core_type = #tpu.core_type<tc>, window_params = [{transform_indices = @transform_0, window_bounds = array<i64: 4, 128>}, {pipeline_mode = #tpu.pipeline_mode<synchronous>, transform_indices = @transform_1, window_bounds = array<i64: 32, 4>}, {pipeline_mode = #tpu.pipeline_mode<synchronous>, transform_indices = @transform_2, window_bounds = array<i64: 32, 1>}, {pipeline_mode = #tpu.pipeline_mode<synchronous>, transform_indices = @transform_3, window_bounds = array<i64: 10, 32, 32>}, {pipeline_mode = #tpu.pipeline_mode<synchronous>, transform_indices = @transform_4, window_bounds = array<i64: 5, 32, 1>}, {pipeline_mode = #tpu.pipeline_mode<synchronous>, transform_indices = @transform_5, window_bounds = array<i64: 10, 32, 32>}, {pipeline_mode = #tpu.pipeline_mode<synchronous>, transform_indices = @transform_6, window_bounds = array<i64: 5, 32, 1>}, {pipeline_mode = #tpu.pipeline_mode<synchronous>, transform_indices = @transform_7, window_bounds = array<i64: 5, 32, 32>}, {pipeline_mode = #tpu.pipeline_mode<synchronous>, transform_indices = @transform_8, window_bounds = array<i64: 5, 32, 1>}, {transform_indices = @transform_9, window_bounds = array<i64: 32, 128>}]} {
    %c0 = arith.constant 0 : index
    %c0_0 = arith.constant 0 : index
    %0 = vector.load %arg1[%c0, %c0_0] : memref<4x128xbf16, #tpu.memory_space<vmem>>, vector<4x128xbf16>
    %c0_1 = arith.constant 0 : index
    %c0_2 = arith.constant 0 : index
    %1 = vector.load %arg2[%c0_1, %c0_2] : memref<32x4xbf16, #tpu.memory_space<vmem>>, vector<32x4xbf16>
    %cst = arith.constant dense<0.000000e+00> : vector<32x128xf32>
    %2 = tpu.matmul %1, %0, %cst {dimension_numbers = #tpu.dot_dimension_numbers<[1], [0], [0], [1], [0, 0, 1, 1], [], []>} : vector<32x4xbf16>, vector<4x128xbf16>, vector<32x128xf32> -> vector<32x128xf32>
    %c0_3 = arith.constant 0 : index
    %c0_4 = arith.constant 0 : index
    %3 = vector.load %arg3[%c0_3, %c0_4] : memref<32x1xf32, #tpu.memory_space<vmem>>, vector<32x1xf32>
    %4 = vector.broadcast %3 : vector<32x1xf32> to vector<32x128xf32>
    %5 = arith.addf %2, %4 : vector<32x128xf32>
    %6 = tpu.iota {dimensions = array<i32: 1>} : vector<1x128xi32>
    %c32_i32 = arith.constant 32 : i32
    %c0_i32 = arith.constant 0 : i32
    %7 = arith.cmpi eq, %c32_i32, %c0_i32 : i32
    %c1_i32 = arith.constant 1 : i32
    %8 = arith.select %7, %c1_i32, %c32_i32 : i32
    %9 = vector.broadcast %8 : i32 to vector<1x128xi32>
    %10 = arith.remsi %6, %9 : vector<1x128xi32>
    %c0_i32_5 = arith.constant 0 : i32
    %11 = vector.broadcast %c0_i32_5 : i32 to vector<1x128xi32>
    %12 = arith.cmpi ne, %10, %11 : vector<1x128xi32>
    %c0_i32_6 = arith.constant 0 : i32
    %13 = vector.broadcast %c0_i32_6 : i32 to vector<1x128xi32>
    %14 = arith.cmpi slt, %10, %13 : vector<1x128xi32>
    %c0_i32_7 = arith.constant 0 : i32
    %15 = arith.cmpi slt, %8, %c0_i32_7 : i32
    %16 = vector.broadcast %15 : i1 to vector<1x128xi1>
    %17 = vector.broadcast %16 : vector<1x128xi1> to vector<1x128xi1>
    %18 = arith.xori %14, %17 : vector<1x128xi1>
    %19 = arith.andi %18, %12 : vector<1x128xi1>
    %20 = vector.broadcast %8 : i32 to vector<1x128xi32>
    %21 = arith.addi %10, %20 : vector<1x128xi32>
    %22 = arith.select %19, %21, %10 : vector<1x128xi1>, vector<1x128xi32>
    %c0_8 = arith.constant 0 : index
    %c0_9 = arith.constant 0 : index
    %c0_10 = arith.constant 0 : index
    %23 = vector.load %arg4[%c0_8, %c0_9, %c0_10] : memref<10x32x32xbf16, #tpu.memory_space<vmem>>, vector<1x32x32xbf16>
    %24 = vector.shape_cast %23 : vector<1x32x32xbf16> to vector<32x32xbf16>
    %c1 = arith.constant 1 : index
    %c0_11 = arith.constant 0 : index
    %c0_12 = arith.constant 0 : index
    %25 = vector.load %arg4[%c1, %c0_11, %c0_12] : memref<10x32x32xbf16, #tpu.memory_space<vmem>>, vector<1x32x32xbf16>
    %26 = vector.shape_cast %25 : vector<1x32x32xbf16> to vector<32x32xbf16>
    %c0_13 = arith.constant 0 : index
    %c0_14 = arith.constant 0 : index
    %c0_15 = arith.constant 0 : index
    %27 = vector.load %arg5[%c0_13, %c0_14, %c0_15] : memref<5x32x1xf32, #tpu.memory_space<vmem>>, vector<1x32x1xf32>
    %28 = vector.shape_cast %27 : vector<1x32x1xf32> to vector<32x1xf32>
    %c1_i32_16 = arith.constant 1 : i32
    %29 = vector.broadcast %c1_i32_16 : i32 to vector<1x128xi32>
    %30 = arith.cmpi sge, %22, %29 : vector<1x128xi32>
    %c1_i32_17 = arith.constant 1 : i32
    %31 = tpu.dynamic_rotate %5 by %c1_i32_17 dim 1 : vector<32x128xf32>, i32 -> vector<32x128xf32>
    %cst_18 = arith.constant 0.000000e+00 : f32
    %32 = vector.shape_cast %30 : vector<1x128xi1> to vector<1x128xi1>
    %33 = vector.broadcast %32 : vector<1x128xi1> to vector<32x128xi1>
    %34 = vector.broadcast %cst_18 : f32 to vector<32x128xf32>
    %35 = arith.select %33, %31, %34 : vector<32x128xi1>, vector<32x128xf32>
    %36 = arith.truncf %35 : vector<32x128xf32> to vector<32x128xbf16>
    %cst_19 = arith.constant dense<0.000000e+00> : vector<32x128xf32>
    %37 = tpu.matmul %24, %36, %cst_19 {dimension_numbers = #tpu.dot_dimension_numbers<[1], [0], [0], [1], [0, 0, 1, 1], [], []>} : vector<32x32xbf16>, vector<32x128xbf16>, vector<32x128xf32> -> vector<32x128xf32>
    %38 = arith.truncf %5 : vector<32x128xf32> to vector<32x128xbf16>
    %cst_20 = arith.constant dense<0.000000e+00> : vector<32x128xf32>
    %39 = tpu.matmul %26, %38, %cst_20 {dimension_numbers = #tpu.dot_dimension_numbers<[1], [0], [0], [1], [0, 0, 1, 1], [], []>} : vector<32x32xbf16>, vector<32x128xbf16>, vector<32x128xf32> -> vector<32x128xf32>
    %40 = arith.addf %37, %39 : vector<32x128xf32>
    %41 = vector.broadcast %28 : vector<32x1xf32> to vector<32x128xf32>
    %42 = arith.addf %40, %41 : vector<32x128xf32>
    %cst_21 = arith.constant 0.000000e+00 : f32
    %43 = vector.broadcast %cst_21 : f32 to vector<32x128xf32>
    %44 = arith.maximumf %42, %43 : vector<32x128xf32>
    %c0_22 = arith.constant 0 : index
    %c0_23 = arith.constant 0 : index
    %c0_24 = arith.constant 0 : index
    %45 = vector.load %arg6[%c0_22, %c0_23, %c0_24] : memref<10x32x32xbf16, #tpu.memory_space<vmem>>, vector<1x32x32xbf16>
    %46 = vector.shape_cast %45 : vector<1x32x32xbf16> to vector<32x32xbf16>
    %c1_25 = arith.constant 1 : index
    %c0_26 = arith.constant 0 : index
    %c0_27 = arith.constant 0 : index
    %47 = vector.load %arg6[%c1_25, %c0_26, %c0_27] : memref<10x32x32xbf16, #tpu.memory_space<vmem>>, vector<1x32x32xbf16>
    %48 = vector.shape_cast %47 : vector<1x32x32xbf16> to vector<32x32xbf16>
    %c0_28 = arith.constant 0 : index
    %c0_29 = arith.constant 0 : index
    %c0_30 = arith.constant 0 : index
    %49 = vector.load %arg7[%c0_28, %c0_29, %c0_30] : memref<5x32x1xf32, #tpu.memory_space<vmem>>, vector<1x32x1xf32>
    %50 = vector.shape_cast %49 : vector<1x32x1xf32> to vector<32x1xf32>
    %c1_i32_31 = arith.constant 1 : i32
    %51 = vector.broadcast %c1_i32_31 : i32 to vector<1x128xi32>
    %52 = arith.cmpi sge, %22, %51 : vector<1x128xi32>
    %c1_i32_32 = arith.constant 1 : i32
    %53 = tpu.dynamic_rotate %44 by %c1_i32_32 dim 1 : vector<32x128xf32>, i32 -> vector<32x128xf32>
    %cst_33 = arith.constant 0.000000e+00 : f32
    %54 = vector.shape_cast %52 : vector<1x128xi1> to vector<1x128xi1>
    %55 = vector.broadcast %54 : vector<1x128xi1> to vector<32x128xi1>
    %56 = vector.broadcast %cst_33 : f32 to vector<32x128xf32>
    %57 = arith.select %55, %53, %56 : vector<32x128xi1>, vector<32x128xf32>
    %58 = arith.truncf %57 : vector<32x128xf32> to vector<32x128xbf16>
    %cst_34 = arith.constant dense<0.000000e+00> : vector<32x128xf32>
    %59 = tpu.matmul %46, %58, %cst_34 {dimension_numbers = #tpu.dot_dimension_numbers<[1], [0], [0], [1], [0, 0, 1, 1], [], []>} : vector<32x32xbf16>, vector<32x128xbf16>, vector<32x128xf32> -> vector<32x128xf32>
    %60 = arith.truncf %44 : vector<32x128xf32> to vector<32x128xbf16>
    %cst_35 = arith.constant dense<0.000000e+00> : vector<32x128xf32>
    %61 = tpu.matmul %48, %60, %cst_35 {dimension_numbers = #tpu.dot_dimension_numbers<[1], [0], [0], [1], [0, 0, 1, 1], [], []>} : vector<32x32xbf16>, vector<32x128xbf16>, vector<32x128xf32> -> vector<32x128xf32>
    %62 = arith.addf %59, %61 : vector<32x128xf32>
    %63 = vector.broadcast %50 : vector<32x1xf32> to vector<32x128xf32>
    %64 = arith.addf %62, %63 : vector<32x128xf32>
    %cst_36 = arith.constant 0.000000e+00 : f32
    %65 = vector.broadcast %cst_36 : f32 to vector<32x128xf32>
    %66 = arith.maximumf %64, %65 : vector<32x128xf32>
    %c0_37 = arith.constant 0 : index
    %c0_38 = arith.constant 0 : index
    %c0_39 = arith.constant 0 : index
    %67 = vector.load %arg8[%c0_37, %c0_38, %c0_39] : memref<5x32x32xbf16, #tpu.memory_space<vmem>>, vector<1x32x32xbf16>
    %68 = vector.shape_cast %67 : vector<1x32x32xbf16> to vector<32x32xbf16>
    %69 = arith.truncf %66 : vector<32x128xf32> to vector<32x128xbf16>
    %cst_40 = arith.constant dense<0.000000e+00> : vector<32x128xf32>
    %70 = tpu.matmul %68, %69, %cst_40 {dimension_numbers = #tpu.dot_dimension_numbers<[1], [0], [0], [1], [0, 0, 1, 1], [], []>} : vector<32x32xbf16>, vector<32x128xbf16>, vector<32x128xf32> -> vector<32x128xf32>
    %c0_41 = arith.constant 0 : index
    %c0_42 = arith.constant 0 : index
    %c0_43 = arith.constant 0 : index
    %71 = vector.load %arg9[%c0_41, %c0_42, %c0_43] : memref<5x32x1xf32, #tpu.memory_space<vmem>>, vector<1x32x1xf32>
    %72 = vector.shape_cast %71 : vector<1x32x1xf32> to vector<32x1xf32>
    %73 = vector.broadcast %72 : vector<32x1xf32> to vector<32x128xf32>
    %74 = arith.addf %70, %73 : vector<32x128xf32>
    %75 = arith.addf %74, %5 : vector<32x128xf32>
    %cst_44 = arith.constant 0.000000e+00 : f32
    %76 = vector.broadcast %cst_44 : f32 to vector<32x128xf32>
    %77 = arith.maximumf %75, %76 : vector<32x128xf32>
    %c2 = arith.constant 2 : index
    %c0_45 = arith.constant 0 : index
    %c0_46 = arith.constant 0 : index
    %78 = vector.load %arg4[%c2, %c0_45, %c0_46] : memref<10x32x32xbf16, #tpu.memory_space<vmem>>, vector<1x32x32xbf16>
    %79 = vector.shape_cast %78 : vector<1x32x32xbf16> to vector<32x32xbf16>
    %c3 = arith.constant 3 : index
    %c0_47 = arith.constant 0 : index
    %c0_48 = arith.constant 0 : index
    %80 = vector.load %arg4[%c3, %c0_47, %c0_48] : memref<10x32x32xbf16, #tpu.memory_space<vmem>>, vector<1x32x32xbf16>
    %81 = vector.shape_cast %80 : vector<1x32x32xbf16> to vector<32x32xbf16>
    %c1_49 = arith.constant 1 : index
    %c0_50 = arith.constant 0 : index
    %c0_51 = arith.constant 0 : index
    %82 = vector.load %arg5[%c1_49, %c0_50, %c0_51] : memref<5x32x1xf32, #tpu.memory_space<vmem>>, vector<1x32x1xf32>
    %83 = vector.shape_cast %82 : vector<1x32x1xf32> to vector<32x1xf32>
    %c2_i32 = arith.constant 2 : i32
    %84 = vector.broadcast %c2_i32 : i32 to vector<1x128xi32>
    %85 = arith.cmpi sge, %22, %84 : vector<1x128xi32>
    %c2_i32_52 = arith.constant 2 : i32
    %86 = tpu.dynamic_rotate %77 by %c2_i32_52 dim 1 : vector<32x128xf32>, i32 -> vector<32x128xf32>
    %cst_53 = arith.constant 0.000000e+00 : f32
    %87 = vector.shape_cast %85 : vector<1x128xi1> to vector<1x128xi1>
    %88 = vector.broadcast %87 : vector<1x128xi1> to vector<32x128xi1>
    %89 = vector.broadcast %cst_53 : f32 to vector<32x128xf32>
    %90 = arith.select %88, %86, %89 : vector<32x128xi1>, vector<32x128xf32>
    %91 = arith.truncf %90 : vector<32x128xf32> to vector<32x128xbf16>
    %cst_54 = arith.constant dense<0.000000e+00> : vector<32x128xf32>
    %92 = tpu.matmul %79, %91, %cst_54 {dimension_numbers = #tpu.dot_dimension_numbers<[1], [0], [0], [1], [0, 0, 1, 1], [], []>} : vector<32x32xbf16>, vector<32x128xbf16>, vector<32x128xf32> -> vector<32x128xf32>
    %93 = arith.truncf %77 : vector<32x128xf32> to vector<32x128xbf16>
    %cst_55 = arith.constant dense<0.000000e+00> : vector<32x128xf32>
    %94 = tpu.matmul %81, %93, %cst_55 {dimension_numbers = #tpu.dot_dimension_numbers<[1], [0], [0], [1], [0, 0, 1, 1], [], []>} : vector<32x32xbf16>, vector<32x128xbf16>, vector<32x128xf32> -> vector<32x128xf32>
    %95 = arith.addf %92, %94 : vector<32x128xf32>
    %96 = vector.broadcast %83 : vector<32x1xf32> to vector<32x128xf32>
    %97 = arith.addf %95, %96 : vector<32x128xf32>
    %cst_56 = arith.constant 0.000000e+00 : f32
    %98 = vector.broadcast %cst_56 : f32 to vector<32x128xf32>
    %99 = arith.maximumf %97, %98 : vector<32x128xf32>
    %c2_57 = arith.constant 2 : index
    %c0_58 = arith.constant 0 : index
    %c0_59 = arith.constant 0 : index
    %100 = vector.load %arg6[%c2_57, %c0_58, %c0_59] : memref<10x32x32xbf16, #tpu.memory_space<vmem>>, vector<1x32x32xbf16>
    %101 = vector.shape_cast %100 : vector<1x32x32xbf16> to vector<32x32xbf16>
    %c3_60 = arith.constant 3 : index
    %c0_61 = arith.constant 0 : index
    %c0_62 = arith.constant 0 : index
    %102 = vector.load %arg6[%c3_60, %c0_61, %c0_62] : memref<10x32x32xbf16, #tpu.memory_space<vmem>>, vector<1x32x32xbf16>
    %103 = vector.shape_cast %102 : vector<1x32x32xbf16> to vector<32x32xbf16>
    %c1_63 = arith.constant 1 : index
    %c0_64 = arith.constant 0 : index
    %c0_65 = arith.constant 0 : index
    %104 = vector.load %arg7[%c1_63, %c0_64, %c0_65] : memref<5x32x1xf32, #tpu.memory_space<vmem>>, vector<1x32x1xf32>
    %105 = vector.shape_cast %104 : vector<1x32x1xf32> to vector<32x1xf32>
    %c2_i32_66 = arith.constant 2 : i32
    %106 = vector.broadcast %c2_i32_66 : i32 to vector<1x128xi32>
    %107 = arith.cmpi sge, %22, %106 : vector<1x128xi32>
    %c2_i32_67 = arith.constant 2 : i32
    %108 = tpu.dynamic_rotate %99 by %c2_i32_67 dim 1 : vector<32x128xf32>, i32 -> vector<32x128xf32>
    %cst_68 = arith.constant 0.000000e+00 : f32
    %109 = vector.shape_cast %107 : vector<1x128xi1> to vector<1x128xi1>
    %110 = vector.broadcast %109 : vector<1x128xi1> to vector<32x128xi1>
    %111 = vector.broadcast %cst_68 : f32 to vector<32x128xf32>
    %112 = arith.select %110, %108, %111 : vector<32x128xi1>, vector<32x128xf32>
    %113 = arith.truncf %112 : vector<32x128xf32> to vector<32x128xbf16>
    %cst_69 = arith.constant dense<0.000000e+00> : vector<32x128xf32>
    %114 = tpu.matmul %101, %113, %cst_69 {dimension_numbers = #tpu.dot_dimension_numbers<[1], [0], [0], [1], [0, 0, 1, 1], [], []>} : vector<32x32xbf16>, vector<32x128xbf16>, vector<32x128xf32> -> vector<32x128xf32>
    %115 = arith.truncf %99 : vector<32x128xf32> to vector<32x128xbf16>
    %cst_70 = arith.constant dense<0.000000e+00> : vector<32x128xf32>
    %116 = tpu.matmul %103, %115, %cst_70 {dimension_numbers = #tpu.dot_dimension_numbers<[1], [0], [0], [1], [0, 0, 1, 1], [], []>} : vector<32x32xbf16>, vector<32x128xbf16>, vector<32x128xf32> -> vector<32x128xf32>
    %117 = arith.addf %114, %116 : vector<32x128xf32>
    %118 = vector.broadcast %105 : vector<32x1xf32> to vector<32x128xf32>
    %119 = arith.addf %117, %118 : vector<32x128xf32>
    %cst_71 = arith.constant 0.000000e+00 : f32
    %120 = vector.broadcast %cst_71 : f32 to vector<32x128xf32>
    %121 = arith.maximumf %119, %120 : vector<32x128xf32>
    %c1_72 = arith.constant 1 : index
    %c0_73 = arith.constant 0 : index
    %c0_74 = arith.constant 0 : index
    %122 = vector.load %arg8[%c1_72, %c0_73, %c0_74] : memref<5x32x32xbf16, #tpu.memory_space<vmem>>, vector<1x32x32xbf16>
    %123 = vector.shape_cast %122 : vector<1x32x32xbf16> to vector<32x32xbf16>
    %124 = arith.truncf %121 : vector<32x128xf32> to vector<32x128xbf16>
    %cst_75 = arith.constant dense<0.000000e+00> : vector<32x128xf32>
    %125 = tpu.matmul %123, %124, %cst_75 {dimension_numbers = #tpu.dot_dimension_numbers<[1], [0], [0], [1], [0, 0, 1, 1], [], []>} : vector<32x32xbf16>, vector<32x128xbf16>, vector<32x128xf32> -> vector<32x128xf32>
    %c1_76 = arith.constant 1 : index
    %c0_77 = arith.constant 0 : index
    %c0_78 = arith.constant 0 : index
    %126 = vector.load %arg9[%c1_76, %c0_77, %c0_78] : memref<5x32x1xf32, #tpu.memory_space<vmem>>, vector<1x32x1xf32>
    %127 = vector.shape_cast %126 : vector<1x32x1xf32> to vector<32x1xf32>
    %128 = vector.broadcast %127 : vector<32x1xf32> to vector<32x128xf32>
    %129 = arith.addf %125, %128 : vector<32x128xf32>
    %130 = arith.addf %129, %77 : vector<32x128xf32>
    %cst_79 = arith.constant 0.000000e+00 : f32
    %131 = vector.broadcast %cst_79 : f32 to vector<32x128xf32>
    %132 = arith.maximumf %130, %131 : vector<32x128xf32>
    %c4 = arith.constant 4 : index
    %c0_80 = arith.constant 0 : index
    %c0_81 = arith.constant 0 : index
    %133 = vector.load %arg4[%c4, %c0_80, %c0_81] : memref<10x32x32xbf16, #tpu.memory_space<vmem>>, vector<1x32x32xbf16>
    %134 = vector.shape_cast %133 : vector<1x32x32xbf16> to vector<32x32xbf16>
    %c5 = arith.constant 5 : index
    %c0_82 = arith.constant 0 : index
    %c0_83 = arith.constant 0 : index
    %135 = vector.load %arg4[%c5, %c0_82, %c0_83] : memref<10x32x32xbf16, #tpu.memory_space<vmem>>, vector<1x32x32xbf16>
    %136 = vector.shape_cast %135 : vector<1x32x32xbf16> to vector<32x32xbf16>
    %c2_84 = arith.constant 2 : index
    %c0_85 = arith.constant 0 : index
    %c0_86 = arith.constant 0 : index
    %137 = vector.load %arg5[%c2_84, %c0_85, %c0_86] : memref<5x32x1xf32, #tpu.memory_space<vmem>>, vector<1x32x1xf32>
    %138 = vector.shape_cast %137 : vector<1x32x1xf32> to vector<32x1xf32>
    %c4_i32 = arith.constant 4 : i32
    %139 = vector.broadcast %c4_i32 : i32 to vector<1x128xi32>
    %140 = arith.cmpi sge, %22, %139 : vector<1x128xi32>
    %c4_i32_87 = arith.constant 4 : i32
    %141 = tpu.dynamic_rotate %132 by %c4_i32_87 dim 1 : vector<32x128xf32>, i32 -> vector<32x128xf32>
    %cst_88 = arith.constant 0.000000e+00 : f32
    %142 = vector.shape_cast %140 : vector<1x128xi1> to vector<1x128xi1>
    %143 = vector.broadcast %142 : vector<1x128xi1> to vector<32x128xi1>
    %144 = vector.broadcast %cst_88 : f32 to vector<32x128xf32>
    %145 = arith.select %143, %141, %144 : vector<32x128xi1>, vector<32x128xf32>
    %146 = arith.truncf %145 : vector<32x128xf32> to vector<32x128xbf16>
    %cst_89 = arith.constant dense<0.000000e+00> : vector<32x128xf32>
    %147 = tpu.matmul %134, %146, %cst_89 {dimension_numbers = #tpu.dot_dimension_numbers<[1], [0], [0], [1], [0, 0, 1, 1], [], []>} : vector<32x32xbf16>, vector<32x128xbf16>, vector<32x128xf32> -> vector<32x128xf32>
    %148 = arith.truncf %132 : vector<32x128xf32> to vector<32x128xbf16>
    %cst_90 = arith.constant dense<0.000000e+00> : vector<32x128xf32>
    %149 = tpu.matmul %136, %148, %cst_90 {dimension_numbers = #tpu.dot_dimension_numbers<[1], [0], [0], [1], [0, 0, 1, 1], [], []>} : vector<32x32xbf16>, vector<32x128xbf16>, vector<32x128xf32> -> vector<32x128xf32>
    %150 = arith.addf %147, %149 : vector<32x128xf32>
    %151 = vector.broadcast %138 : vector<32x1xf32> to vector<32x128xf32>
    %152 = arith.addf %150, %151 : vector<32x128xf32>
    %cst_91 = arith.constant 0.000000e+00 : f32
    %153 = vector.broadcast %cst_91 : f32 to vector<32x128xf32>
    %154 = arith.maximumf %152, %153 : vector<32x128xf32>
    %c4_92 = arith.constant 4 : index
    %c0_93 = arith.constant 0 : index
    %c0_94 = arith.constant 0 : index
    %155 = vector.load %arg6[%c4_92, %c0_93, %c0_94] : memref<10x32x32xbf16, #tpu.memory_space<vmem>>, vector<1x32x32xbf16>
    %156 = vector.shape_cast %155 : vector<1x32x32xbf16> to vector<32x32xbf16>
    %c5_95 = arith.constant 5 : index
    %c0_96 = arith.constant 0 : index
    %c0_97 = arith.constant 0 : index
    %157 = vector.load %arg6[%c5_95, %c0_96, %c0_97] : memref<10x32x32xbf16, #tpu.memory_space<vmem>>, vector<1x32x32xbf16>
    %158 = vector.shape_cast %157 : vector<1x32x32xbf16> to vector<32x32xbf16>
    %c2_98 = arith.constant 2 : index
    %c0_99 = arith.constant 0 : index
    %c0_100 = arith.constant 0 : index
    %159 = vector.load %arg7[%c2_98, %c0_99, %c0_100] : memref<5x32x1xf32, #tpu.memory_space<vmem>>, vector<1x32x1xf32>
    %160 = vector.shape_cast %159 : vector<1x32x1xf32> to vector<32x1xf32>
    %c4_i32_101 = arith.constant 4 : i32
    %161 = vector.broadcast %c4_i32_101 : i32 to vector<1x128xi32>
    %162 = arith.cmpi sge, %22, %161 : vector<1x128xi32>
    %c4_i32_102 = arith.constant 4 : i32
    %163 = tpu.dynamic_rotate %154 by %c4_i32_102 dim 1 : vector<32x128xf32>, i32 -> vector<32x128xf32>
    %cst_103 = arith.constant 0.000000e+00 : f32
    %164 = vector.shape_cast %162 : vector<1x128xi1> to vector<1x128xi1>
    %165 = vector.broadcast %164 : vector<1x128xi1> to vector<32x128xi1>
    %166 = vector.broadcast %cst_103 : f32 to vector<32x128xf32>
    %167 = arith.select %165, %163, %166 : vector<32x128xi1>, vector<32x128xf32>
    %168 = arith.truncf %167 : vector<32x128xf32> to vector<32x128xbf16>
    %cst_104 = arith.constant dense<0.000000e+00> : vector<32x128xf32>
    %169 = tpu.matmul %156, %168, %cst_104 {dimension_numbers = #tpu.dot_dimension_numbers<[1], [0], [0], [1], [0, 0, 1, 1], [], []>} : vector<32x32xbf16>, vector<32x128xbf16>, vector<32x128xf32> -> vector<32x128xf32>
    %170 = arith.truncf %154 : vector<32x128xf32> to vector<32x128xbf16>
    %cst_105 = arith.constant dense<0.000000e+00> : vector<32x128xf32>
    %171 = tpu.matmul %158, %170, %cst_105 {dimension_numbers = #tpu.dot_dimension_numbers<[1], [0], [0], [1], [0, 0, 1, 1], [], []>} : vector<32x32xbf16>, vector<32x128xbf16>, vector<32x128xf32> -> vector<32x128xf32>
    %172 = arith.addf %169, %171 : vector<32x128xf32>
    %173 = vector.broadcast %160 : vector<32x1xf32> to vector<32x128xf32>
    %174 = arith.addf %172, %173 : vector<32x128xf32>
    %cst_106 = arith.constant 0.000000e+00 : f32
    %175 = vector.broadcast %cst_106 : f32 to vector<32x128xf32>
    %176 = arith.maximumf %174, %175 : vector<32x128xf32>
    %c2_107 = arith.constant 2 : index
    %c0_108 = arith.constant 0 : index
    %c0_109 = arith.constant 0 : index
    %177 = vector.load %arg8[%c2_107, %c0_108, %c0_109] : memref<5x32x32xbf16, #tpu.memory_space<vmem>>, vector<1x32x32xbf16>
    %178 = vector.shape_cast %177 : vector<1x32x32xbf16> to vector<32x32xbf16>
    %179 = arith.truncf %176 : vector<32x128xf32> to vector<32x128xbf16>
    %cst_110 = arith.constant dense<0.000000e+00> : vector<32x128xf32>
    %180 = tpu.matmul %178, %179, %cst_110 {dimension_numbers = #tpu.dot_dimension_numbers<[1], [0], [0], [1], [0, 0, 1, 1], [], []>} : vector<32x32xbf16>, vector<32x128xbf16>, vector<32x128xf32> -> vector<32x128xf32>
    %c2_111 = arith.constant 2 : index
    %c0_112 = arith.constant 0 : index
    %c0_113 = arith.constant 0 : index
    %181 = vector.load %arg9[%c2_111, %c0_112, %c0_113] : memref<5x32x1xf32, #tpu.memory_space<vmem>>, vector<1x32x1xf32>
    %182 = vector.shape_cast %181 : vector<1x32x1xf32> to vector<32x1xf32>
    %183 = vector.broadcast %182 : vector<32x1xf32> to vector<32x128xf32>
    %184 = arith.addf %180, %183 : vector<32x128xf32>
    %185 = arith.addf %184, %132 : vector<32x128xf32>
    %cst_114 = arith.constant 0.000000e+00 : f32
    %186 = vector.broadcast %cst_114 : f32 to vector<32x128xf32>
    %187 = arith.maximumf %185, %186 : vector<32x128xf32>
    %c6 = arith.constant 6 : index
    %c0_115 = arith.constant 0 : index
    %c0_116 = arith.constant 0 : index
    %188 = vector.load %arg4[%c6, %c0_115, %c0_116] : memref<10x32x32xbf16, #tpu.memory_space<vmem>>, vector<1x32x32xbf16>
    %189 = vector.shape_cast %188 : vector<1x32x32xbf16> to vector<32x32xbf16>
    %c7 = arith.constant 7 : index
    %c0_117 = arith.constant 0 : index
    %c0_118 = arith.constant 0 : index
    %190 = vector.load %arg4[%c7, %c0_117, %c0_118] : memref<10x32x32xbf16, #tpu.memory_space<vmem>>, vector<1x32x32xbf16>
    %191 = vector.shape_cast %190 : vector<1x32x32xbf16> to vector<32x32xbf16>
    %c3_119 = arith.constant 3 : index
    %c0_120 = arith.constant 0 : index
    %c0_121 = arith.constant 0 : index
    %192 = vector.load %arg5[%c3_119, %c0_120, %c0_121] : memref<5x32x1xf32, #tpu.memory_space<vmem>>, vector<1x32x1xf32>
    %193 = vector.shape_cast %192 : vector<1x32x1xf32> to vector<32x1xf32>
    %c8_i32 = arith.constant 8 : i32
    %194 = vector.broadcast %c8_i32 : i32 to vector<1x128xi32>
    %195 = arith.cmpi sge, %22, %194 : vector<1x128xi32>
    %c8_i32_122 = arith.constant 8 : i32
    %196 = tpu.dynamic_rotate %187 by %c8_i32_122 dim 1 : vector<32x128xf32>, i32 -> vector<32x128xf32>
    %cst_123 = arith.constant 0.000000e+00 : f32
    %197 = vector.shape_cast %195 : vector<1x128xi1> to vector<1x128xi1>
    %198 = vector.broadcast %197 : vector<1x128xi1> to vector<32x128xi1>
    %199 = vector.broadcast %cst_123 : f32 to vector<32x128xf32>
    %200 = arith.select %198, %196, %199 : vector<32x128xi1>, vector<32x128xf32>
    %201 = arith.truncf %200 : vector<32x128xf32> to vector<32x128xbf16>
    %cst_124 = arith.constant dense<0.000000e+00> : vector<32x128xf32>
    %202 = tpu.matmul %189, %201, %cst_124 {dimension_numbers = #tpu.dot_dimension_numbers<[1], [0], [0], [1], [0, 0, 1, 1], [], []>} : vector<32x32xbf16>, vector<32x128xbf16>, vector<32x128xf32> -> vector<32x128xf32>
    %203 = arith.truncf %187 : vector<32x128xf32> to vector<32x128xbf16>
    %cst_125 = arith.constant dense<0.000000e+00> : vector<32x128xf32>
    %204 = tpu.matmul %191, %203, %cst_125 {dimension_numbers = #tpu.dot_dimension_numbers<[1], [0], [0], [1], [0, 0, 1, 1], [], []>} : vector<32x32xbf16>, vector<32x128xbf16>, vector<32x128xf32> -> vector<32x128xf32>
    %205 = arith.addf %202, %204 : vector<32x128xf32>
    %206 = vector.broadcast %193 : vector<32x1xf32> to vector<32x128xf32>
    %207 = arith.addf %205, %206 : vector<32x128xf32>
    %cst_126 = arith.constant 0.000000e+00 : f32
    %208 = vector.broadcast %cst_126 : f32 to vector<32x128xf32>
    %209 = arith.maximumf %207, %208 : vector<32x128xf32>
    %c6_127 = arith.constant 6 : index
    %c0_128 = arith.constant 0 : index
    %c0_129 = arith.constant 0 : index
    %210 = vector.load %arg6[%c6_127, %c0_128, %c0_129] : memref<10x32x32xbf16, #tpu.memory_space<vmem>>, vector<1x32x32xbf16>
    %211 = vector.shape_cast %210 : vector<1x32x32xbf16> to vector<32x32xbf16>
    %c7_130 = arith.constant 7 : index
    %c0_131 = arith.constant 0 : index
    %c0_132 = arith.constant 0 : index
    %212 = vector.load %arg6[%c7_130, %c0_131, %c0_132] : memref<10x32x32xbf16, #tpu.memory_space<vmem>>, vector<1x32x32xbf16>
    %213 = vector.shape_cast %212 : vector<1x32x32xbf16> to vector<32x32xbf16>
    %c3_133 = arith.constant 3 : index
    %c0_134 = arith.constant 0 : index
    %c0_135 = arith.constant 0 : index
    %214 = vector.load %arg7[%c3_133, %c0_134, %c0_135] : memref<5x32x1xf32, #tpu.memory_space<vmem>>, vector<1x32x1xf32>
    %215 = vector.shape_cast %214 : vector<1x32x1xf32> to vector<32x1xf32>
    %c8_i32_136 = arith.constant 8 : i32
    %216 = vector.broadcast %c8_i32_136 : i32 to vector<1x128xi32>
    %217 = arith.cmpi sge, %22, %216 : vector<1x128xi32>
    %c8_i32_137 = arith.constant 8 : i32
    %218 = tpu.dynamic_rotate %209 by %c8_i32_137 dim 1 : vector<32x128xf32>, i32 -> vector<32x128xf32>
    %cst_138 = arith.constant 0.000000e+00 : f32
    %219 = vector.shape_cast %217 : vector<1x128xi1> to vector<1x128xi1>
    %220 = vector.broadcast %219 : vector<1x128xi1> to vector<32x128xi1>
    %221 = vector.broadcast %cst_138 : f32 to vector<32x128xf32>
    %222 = arith.select %220, %218, %221 : vector<32x128xi1>, vector<32x128xf32>
    %223 = arith.truncf %222 : vector<32x128xf32> to vector<32x128xbf16>
    %cst_139 = arith.constant dense<0.000000e+00> : vector<32x128xf32>
    %224 = tpu.matmul %211, %223, %cst_139 {dimension_numbers = #tpu.dot_dimension_numbers<[1], [0], [0], [1], [0, 0, 1, 1], [], []>} : vector<32x32xbf16>, vector<32x128xbf16>, vector<32x128xf32> -> vector<32x128xf32>
    %225 = arith.truncf %209 : vector<32x128xf32> to vector<32x128xbf16>
    %cst_140 = arith.constant dense<0.000000e+00> : vector<32x128xf32>
    %226 = tpu.matmul %213, %225, %cst_140 {dimension_numbers = #tpu.dot_dimension_numbers<[1], [0], [0], [1], [0, 0, 1, 1], [], []>} : vector<32x32xbf16>, vector<32x128xbf16>, vector<32x128xf32> -> vector<32x128xf32>
    %227 = arith.addf %224, %226 : vector<32x128xf32>
    %228 = vector.broadcast %215 : vector<32x1xf32> to vector<32x128xf32>
    %229 = arith.addf %227, %228 : vector<32x128xf32>
    %cst_141 = arith.constant 0.000000e+00 : f32
    %230 = vector.broadcast %cst_141 : f32 to vector<32x128xf32>
    %231 = arith.maximumf %229, %230 : vector<32x128xf32>
    %c3_142 = arith.constant 3 : index
    %c0_143 = arith.constant 0 : index
    %c0_144 = arith.constant 0 : index
    %232 = vector.load %arg8[%c3_142, %c0_143, %c0_144] : memref<5x32x32xbf16, #tpu.memory_space<vmem>>, vector<1x32x32xbf16>
    %233 = vector.shape_cast %232 : vector<1x32x32xbf16> to vector<32x32xbf16>
    %234 = arith.truncf %231 : vector<32x128xf32> to vector<32x128xbf16>
    %cst_145 = arith.constant dense<0.000000e+00> : vector<32x128xf32>
    %235 = tpu.matmul %233, %234, %cst_145 {dimension_numbers = #tpu.dot_dimension_numbers<[1], [0], [0], [1], [0, 0, 1, 1], [], []>} : vector<32x32xbf16>, vector<32x128xbf16>, vector<32x128xf32> -> vector<32x128xf32>
    %c3_146 = arith.constant 3 : index
    %c0_147 = arith.constant 0 : index
    %c0_148 = arith.constant 0 : index
    %236 = vector.load %arg9[%c3_146, %c0_147, %c0_148] : memref<5x32x1xf32, #tpu.memory_space<vmem>>, vector<1x32x1xf32>
    %237 = vector.shape_cast %236 : vector<1x32x1xf32> to vector<32x1xf32>
    %238 = vector.broadcast %237 : vector<32x1xf32> to vector<32x128xf32>
    %239 = arith.addf %235, %238 : vector<32x128xf32>
    %240 = arith.addf %239, %187 : vector<32x128xf32>
    %cst_149 = arith.constant 0.000000e+00 : f32
    %241 = vector.broadcast %cst_149 : f32 to vector<32x128xf32>
    %242 = arith.maximumf %240, %241 : vector<32x128xf32>
    %c8 = arith.constant 8 : index
    %c0_150 = arith.constant 0 : index
    %c0_151 = arith.constant 0 : index
    %243 = vector.load %arg4[%c8, %c0_150, %c0_151] : memref<10x32x32xbf16, #tpu.memory_space<vmem>>, vector<1x32x32xbf16>
    %244 = vector.shape_cast %243 : vector<1x32x32xbf16> to vector<32x32xbf16>
    %c9 = arith.constant 9 : index
    %c0_152 = arith.constant 0 : index
    %c0_153 = arith.constant 0 : index
    %245 = vector.load %arg4[%c9, %c0_152, %c0_153] : memref<10x32x32xbf16, #tpu.memory_space<vmem>>, vector<1x32x32xbf16>
    %246 = vector.shape_cast %245 : vector<1x32x32xbf16> to vector<32x32xbf16>
    %c4_154 = arith.constant 4 : index
    %c0_155 = arith.constant 0 : index
    %c0_156 = arith.constant 0 : index
    %247 = vector.load %arg5[%c4_154, %c0_155, %c0_156] : memref<5x32x1xf32, #tpu.memory_space<vmem>>, vector<1x32x1xf32>
    %248 = vector.shape_cast %247 : vector<1x32x1xf32> to vector<32x1xf32>
    %c16_i32 = arith.constant 16 : i32
    %249 = vector.broadcast %c16_i32 : i32 to vector<1x128xi32>
    %250 = arith.cmpi sge, %22, %249 : vector<1x128xi32>
    %c16_i32_157 = arith.constant 16 : i32
    %251 = tpu.dynamic_rotate %242 by %c16_i32_157 dim 1 : vector<32x128xf32>, i32 -> vector<32x128xf32>
    %cst_158 = arith.constant 0.000000e+00 : f32
    %252 = vector.shape_cast %250 : vector<1x128xi1> to vector<1x128xi1>
    %253 = vector.broadcast %252 : vector<1x128xi1> to vector<32x128xi1>
    %254 = vector.broadcast %cst_158 : f32 to vector<32x128xf32>
    %255 = arith.select %253, %251, %254 : vector<32x128xi1>, vector<32x128xf32>
    %256 = arith.truncf %255 : vector<32x128xf32> to vector<32x128xbf16>
    %cst_159 = arith.constant dense<0.000000e+00> : vector<32x128xf32>
    %257 = tpu.matmul %244, %256, %cst_159 {dimension_numbers = #tpu.dot_dimension_numbers<[1], [0], [0], [1], [0, 0, 1, 1], [], []>} : vector<32x32xbf16>, vector<32x128xbf16>, vector<32x128xf32> -> vector<32x128xf32>
    %258 = arith.truncf %242 : vector<32x128xf32> to vector<32x128xbf16>
    %cst_160 = arith.constant dense<0.000000e+00> : vector<32x128xf32>
    %259 = tpu.matmul %246, %258, %cst_160 {dimension_numbers = #tpu.dot_dimension_numbers<[1], [0], [0], [1], [0, 0, 1, 1], [], []>} : vector<32x32xbf16>, vector<32x128xbf16>, vector<32x128xf32> -> vector<32x128xf32>
    %260 = arith.addf %257, %259 : vector<32x128xf32>
    %261 = vector.broadcast %248 : vector<32x1xf32> to vector<32x128xf32>
    %262 = arith.addf %260, %261 : vector<32x128xf32>
    %cst_161 = arith.constant 0.000000e+00 : f32
    %263 = vector.broadcast %cst_161 : f32 to vector<32x128xf32>
    %264 = arith.maximumf %262, %263 : vector<32x128xf32>
    %c8_162 = arith.constant 8 : index
    %c0_163 = arith.constant 0 : index
    %c0_164 = arith.constant 0 : index
    %265 = vector.load %arg6[%c8_162, %c0_163, %c0_164] : memref<10x32x32xbf16, #tpu.memory_space<vmem>>, vector<1x32x32xbf16>
    %266 = vector.shape_cast %265 : vector<1x32x32xbf16> to vector<32x32xbf16>
    %c9_165 = arith.constant 9 : index
    %c0_166 = arith.constant 0 : index
    %c0_167 = arith.constant 0 : index
    %267 = vector.load %arg6[%c9_165, %c0_166, %c0_167] : memref<10x32x32xbf16, #tpu.memory_space<vmem>>, vector<1x32x32xbf16>
    %268 = vector.shape_cast %267 : vector<1x32x32xbf16> to vector<32x32xbf16>
    %c4_168 = arith.constant 4 : index
    %c0_169 = arith.constant 0 : index
    %c0_170 = arith.constant 0 : index
    %269 = vector.load %arg7[%c4_168, %c0_169, %c0_170] : memref<5x32x1xf32, #tpu.memory_space<vmem>>, vector<1x32x1xf32>
    %270 = vector.shape_cast %269 : vector<1x32x1xf32> to vector<32x1xf32>
    %c16_i32_171 = arith.constant 16 : i32
    %271 = vector.broadcast %c16_i32_171 : i32 to vector<1x128xi32>
    %272 = arith.cmpi sge, %22, %271 : vector<1x128xi32>
    %c16_i32_172 = arith.constant 16 : i32
    %273 = tpu.dynamic_rotate %264 by %c16_i32_172 dim 1 : vector<32x128xf32>, i32 -> vector<32x128xf32>
    %cst_173 = arith.constant 0.000000e+00 : f32
    %274 = vector.shape_cast %272 : vector<1x128xi1> to vector<1x128xi1>
    %275 = vector.broadcast %274 : vector<1x128xi1> to vector<32x128xi1>
    %276 = vector.broadcast %cst_173 : f32 to vector<32x128xf32>
    %277 = arith.select %275, %273, %276 : vector<32x128xi1>, vector<32x128xf32>
    %278 = arith.truncf %277 : vector<32x128xf32> to vector<32x128xbf16>
    %cst_174 = arith.constant dense<0.000000e+00> : vector<32x128xf32>
    %279 = tpu.matmul %266, %278, %cst_174 {dimension_numbers = #tpu.dot_dimension_numbers<[1], [0], [0], [1], [0, 0, 1, 1], [], []>} : vector<32x32xbf16>, vector<32x128xbf16>, vector<32x128xf32> -> vector<32x128xf32>
    %280 = arith.truncf %264 : vector<32x128xf32> to vector<32x128xbf16>
    %cst_175 = arith.constant dense<0.000000e+00> : vector<32x128xf32>
    %281 = tpu.matmul %268, %280, %cst_175 {dimension_numbers = #tpu.dot_dimension_numbers<[1], [0], [0], [1], [0, 0, 1, 1], [], []>} : vector<32x32xbf16>, vector<32x128xbf16>, vector<32x128xf32> -> vector<32x128xf32>
    %282 = arith.addf %279, %281 : vector<32x128xf32>
    %283 = vector.broadcast %270 : vector<32x1xf32> to vector<32x128xf32>
    %284 = arith.addf %282, %283 : vector<32x128xf32>
    %cst_176 = arith.constant 0.000000e+00 : f32
    %285 = vector.broadcast %cst_176 : f32 to vector<32x128xf32>
    %286 = arith.maximumf %284, %285 : vector<32x128xf32>
    %c4_177 = arith.constant 4 : index
    %c0_178 = arith.constant 0 : index
    %c0_179 = arith.constant 0 : index
    %287 = vector.load %arg8[%c4_177, %c0_178, %c0_179] : memref<5x32x32xbf16, #tpu.memory_space<vmem>>, vector<1x32x32xbf16>
    %288 = vector.shape_cast %287 : vector<1x32x32xbf16> to vector<32x32xbf16>
    %289 = arith.truncf %286 : vector<32x128xf32> to vector<32x128xbf16>
    %cst_180 = arith.constant dense<0.000000e+00> : vector<32x128xf32>
    %290 = tpu.matmul %288, %289, %cst_180 {dimension_numbers = #tpu.dot_dimension_numbers<[1], [0], [0], [1], [0, 0, 1, 1], [], []>} : vector<32x32xbf16>, vector<32x128xbf16>, vector<32x128xf32> -> vector<32x128xf32>
    %c4_181 = arith.constant 4 : index
    %c0_182 = arith.constant 0 : index
    %c0_183 = arith.constant 0 : index
    %291 = vector.load %arg9[%c4_181, %c0_182, %c0_183] : memref<5x32x1xf32, #tpu.memory_space<vmem>>, vector<1x32x1xf32>
    %292 = vector.shape_cast %291 : vector<1x32x1xf32> to vector<32x1xf32>
    %293 = vector.broadcast %292 : vector<32x1xf32> to vector<32x128xf32>
    %294 = arith.addf %290, %293 : vector<32x128xf32>
    %295 = arith.addf %294, %242 : vector<32x128xf32>
    %cst_184 = arith.constant 0.000000e+00 : f32
    %296 = vector.broadcast %cst_184 : f32 to vector<32x128xf32>
    %297 = arith.maximumf %295, %296 : vector<32x128xf32>
    %298 = arith.truncf %297 : vector<32x128xf32> to vector<32x128xbf16>
    %c0_185 = arith.constant 0 : index
    %c0_186 = arith.constant 0 : index
    %299 = vector.load %arg10[%c0_185, %c0_186] : memref<32x128xbf16, #tpu.memory_space<vmem>>, vector<32x128xbf16>
    tpu.vector_store %arg10[%c0_185, %c0_186], %298 {strides = array<i32>} : memref<32x128xbf16, #tpu.memory_space<vmem>>, vector<32x128xbf16>,
    return
  }
  func.func @transform_0(%arg0: i32) -> (i32, i32) {
    %c0_i32 = arith.constant 0 : i32
    %c0_i32_0 = arith.constant 0 : i32
    return %c0_i32, %arg0 : i32, i32
  }
  func.func @transform_1(%arg0: i32) -> (i32, i32) {
    %c0_i32 = arith.constant 0 : i32
    %c0_i32_0 = arith.constant 0 : i32
    %c0_i32_1 = arith.constant 0 : i32
    return %c0_i32, %c0_i32_0 : i32, i32
  }
  func.func @transform_2(%arg0: i32) -> (i32, i32) {
    %c0_i32 = arith.constant 0 : i32
    %c0_i32_0 = arith.constant 0 : i32
    %c0_i32_1 = arith.constant 0 : i32
    return %c0_i32, %c0_i32_0 : i32, i32
  }
  func.func @transform_3(%arg0: i32) -> (i32, i32, i32) {
    %c0_i32 = arith.constant 0 : i32
    %c0_i32_0 = arith.constant 0 : i32
    %c0_i32_1 = arith.constant 0 : i32
    %c0_i32_2 = arith.constant 0 : i32
    return %c0_i32, %c0_i32_0, %c0_i32_1 : i32, i32, i32
  }
  func.func @transform_4(%arg0: i32) -> (i32, i32, i32) {
    %c0_i32 = arith.constant 0 : i32
    %c0_i32_0 = arith.constant 0 : i32
    %c0_i32_1 = arith.constant 0 : i32
    %c0_i32_2 = arith.constant 0 : i32
    return %c0_i32, %c0_i32_0, %c0_i32_1 : i32, i32, i32
  }
  func.func @transform_5(%arg0: i32) -> (i32, i32, i32) {
    %c0_i32 = arith.constant 0 : i32
    %c0_i32_0 = arith.constant 0 : i32
    %c0_i32_1 = arith.constant 0 : i32
    %c0_i32_2 = arith.constant 0 : i32
    return %c0_i32, %c0_i32_0, %c0_i32_1 : i32, i32, i32
  }
  func.func @transform_6(%arg0: i32) -> (i32, i32, i32) {
    %c0_i32 = arith.constant 0 : i32
    %c0_i32_0 = arith.constant 0 : i32
    %c0_i32_1 = arith.constant 0 : i32
    %c0_i32_2 = arith.constant 0 : i32
    return %c0_i32, %c0_i32_0, %c0_i32_1 : i32, i32, i32
  }
  func.func @transform_7(%arg0: i32) -> (i32, i32, i32) {
    %c0_i32 = arith.constant 0 : i32
    %c0_i32_0 = arith.constant 0 : i32
    %c0_i32_1 = arith.constant 0 : i32
    %c0_i32_2 = arith.constant 0 : i32
    return %c0_i32, %c0_i32_0, %c0_i32_1 : i32, i32, i32
  }
  func.func @transform_8(%arg0: i32) -> (i32, i32, i32) {
    %c0_i32 = arith.constant 0 : i32
    %c0_i32_0 = arith.constant 0 : i32
    %c0_i32_1 = arith.constant 0 : i32
    %c0_i32_2 = arith.constant 0 : i32
    return %c0_i32, %c0_i32_0, %c0_i32_1 : i32, i32, i32
  }
  func.func @transform_9(%arg0: i32) -> (i32, i32) {
    %c0_i32 = arith.constant 0 : i32
    %c0_i32_0 = arith.constant 0 : i32
    return %c0_i32, %arg0 : i32, i32
  }
}

</mosaic_0001>

<llo_original>
// kernel: tpu_custom_call.1
$region0: #{tpu_custom_call.1}
  #allocation0 [shape = 'u32[]', space=smem, size = 0x4, offset = 0x4, fixed_abs, tag = 'smem constant byte address 0x4 - core index']
  #allocation1 [shape = 'u32[144,128]{1,0:T(1,128)}', space=vmem, size = 0x12000, scoped, tag = 'internal scratch']
  %s0 = inlined_call_operand.vmem [shape: bf16[4,128], index: 0, kind: input, shape index: {}]
  %s1 = inlined_call_operand.vmem [shape: bf16[32,4], index: 1, kind: input, shape index: {}]
  %s2 = inlined_call_operand.vmem [shape: f32[32,1], index: 2, kind: input, shape index: {}]
  %s3 = inlined_call_operand.vmem [shape: bf16[10,32,32], index: 3, kind: input, shape index: {}]
  %s4 = inlined_call_operand.vmem [shape: f32[5,32,1], index: 4, kind: input, shape index: {}]
  %s5 = inlined_call_operand.vmem [shape: bf16[10,32,32], index: 5, kind: input, shape index: {}]
  %s6 = inlined_call_operand.vmem [shape: f32[5,32,1], index: 6, kind: input, shape index: {}]
  %s7 = inlined_call_operand.vmem [shape: bf16[5,32,32], index: 7, kind: input, shape index: {}]
  %s8 = inlined_call_operand.vmem [shape: f32[5,32,1], index: 8, kind: input, shape index: {}]
  %s9 = inlined_call_operand.hbm [shape: bf16[32,128], index: 9, kind: output, shape index: {}]
  %s10 = sld [smem:[#allocation0]]
  $region46: #{tpu_custom_call.1} parent=0
    _
  %s12 = ssub.s32 1, %s10
  %s13 = scalar_select 0, %s12, %s10
  $region1: #{tpu_custom_call.1} parent=0
    #allocation2 [shape = 'u8[8192]{0}', space=vmem, size = 0x2000, scoped, tag = 'output window, operand 0, single buffered']
    #allocation3 [shape = 's32[1]{0}', space=sflag, size = 0x4, scoped, tag = 'scoped memory for tpu_custom_call.1']
    %14 = vsyncpa [#allocation3], 0
    // Predicated region
    $region2: #{tpu_custom_call.1} parent=1 // pred_check
      _
    $region3: #{tpu_custom_call.1} parent=1 // pred_check_branch
      %16 = sbr.rel (0) target = $region5
    $region4: #{tpu_custom_call.1} parent=1 // pred_region
      _
    $region5: #{tpu_custom_call.1} parent=1 // pred_fallthru
      _
    // Predicated region
    $region6: #{tpu_custom_call.1} parent=1 // pred_check
      _
    $region7: #{tpu_custom_call.1} parent=1 // pred_check_branch
      %18 = sbr.rel (0) target = $region9
    $region8: #{tpu_custom_call.1} parent=1 // pred_region
      _
    $region9: #{tpu_custom_call.1} parent=1 // pred_fallthru
      _
    // Predicated region
    $region10: #{tpu_custom_call.1} parent=1 // pred_check
      _
    $region11: #{tpu_custom_call.1} parent=1 // pred_check_branch
      %20 = sbr.rel (0) target = $region13
    $region12: #{tpu_custom_call.1} parent=1 // pred_region
      _
    $region13: #{tpu_custom_call.1} parent=1 // pred_fallthru
      _
    // Predicated region
    $region14: #{tpu_custom_call.1} parent=1 // pred_check
      _
    $region15: #{tpu_custom_call.1} parent=1 // pred_check_branch
      %22 = sbr.rel (0) target = $region17
    $region16: #{tpu_custom_call.1} parent=1 // pred_region
      _
    $region17: #{tpu_custom_call.1} parent=1 // pred_fallthru
      _
    // Predicated region
    $region18: #{tpu_custom_call.1} parent=1 // pred_check
      _
    $region19: #{tpu_custom_call.1} parent=1 // pred_check_branch
      %24 = sbr.rel (0) target = $region21
    $region20: #{tpu_custom_call.1} parent=1 // pred_region
      _
    $region21: #{tpu_custom_call.1} parent=1 // pred_fallthru
      _
    // Predicated region
    $region22: #{tpu_custom_call.1} parent=1 // pred_check
      _
    $region23: #{tpu_custom_call.1} parent=1 // pred_check_branch
      %26 = sbr.rel (0) target = $region25
    $region24: #{tpu_custom_call.1} parent=1 // pred_region
      _
    $region25: #{tpu_custom_call.1} parent=1 // pred_fallthru
      _
    // Predicated region
    $region26: #{tpu_custom_call.1} parent=1 // pred_check
      _
    $region27: #{tpu_custom_call.1} parent=1 // pred_check_branch
      %28 = sbr.rel (0) target = $region29
    $region28: #{tpu_custom_call.1} parent=1 // pred_region
      _
    $region29: #{tpu_custom_call.1} parent=1 // pred_fallthru
      _
    // Predicated region
    $region30: #{tpu_custom_call.1} parent=1 // pred_check
      _
    $region31: #{tpu_custom_call.1} parent=1 // pred_check_branch
      %30 = sbr.rel (0) target = $region33
    $region32: #{tpu_custom_call.1} parent=1 // pred_region
      _
    $region33: #{tpu_custom_call.1} parent=1 // pred_fallthru
      _
    // Predicated region
    $region34: #{tpu_custom_call.1} parent=1 // pred_check
      _
    $region35: #{tpu_custom_call.1} parent=1 // pred_check_branch
      %32 = sbr.rel (0) target = $region37
    $region36: #{tpu_custom_call.1} parent=1 // pred_region
      _
    $region37: #{tpu_custom_call.1} parent=1 // pred_fallthru
      _
    %v34 = vld [vmem:[%s0] sm:$0x3]
    %v35 = vld [vmem:[%s1] sm:$0xf]
    %v36 = vld [vmem:[%s1 + $0x4] sm:$0xf]
    %v37 = vld [vmem:[%s1 + $0x8] sm:$0xf]
    %v38 = vld [vmem:[%s1 + $0xc] sm:$0xf]
    %v39 = vld [vmem:[%s2] sm:$0xff]
    %v40 = vld [vmem:[%s2 + $0x8] sm:$0xff]
    %v41 = vld [vmem:[%s2 + $0x10] sm:$0xff]
    %v42 = vld [vmem:[%s2 + $0x18] sm:$0xff]
    %44 = vset.pattern.permute.xlu0 0
    %45 = vperm.xlu0 %44, %v39
    %v46 = vpop.permute.xlu0 %45
    %49 = vset.pattern.permute.xlu0 0
    %50 = vperm.xlu0 %49, %v40
    %v51 = vpop.permute.xlu0 %50
    %54 = vset.pattern.permute.xlu0 0
    %55 = vperm.xlu0 %54, %v41
    %v56 = vpop.permute.xlu0 %55
    %59 = vset.pattern.permute.xlu0 0
    %60 = vperm.xlu0 %59, %v42
    %v61 = vpop.permute.xlu0 %60
    %v67 = vunpack.c.l.b16 %v35
    %v68 = vunpack.c.l.b16 %v36
    %v69 = vunpack.c.l.b16 %v37
    %v70 = vunpack.c.l.b16 %v38
    %v71 = vpack.c.b16 %v68, %v67
    %v72 = vpack.c.b16 %v70, %v69
    %vm73 = vcmask 31744
    %v75 = vsel %vm73, %v71, 0
    %v78 = vsel %vm73, %v72, 0
    %vm80 = vcmask 1041408
    %v82 = vsel %vm80, %v34, 0
    %84 = vmatprep.subr.bf16.mxu0 0
    %85 = vmatpush1.bf16.msra.mxu0 %v82
    %86 = vmatprep.subr.bf16.mxu0 0
    %87 = vmatpush1.bf16.msra.mxu0 0
    %88 = vmatprep.subr.bf16.mxu0 0
    %89 = vmatpush1.bf16.msra.mxu0 0
    %90 = vmatprep.subr.bf16.mxu0 0
    %91 = vmatpush1.bf16.msra.mxu0 0
    %92 = vmatprep.subr.bf16.mxu0 0
    %93 = vmatpush1.bf16.msra.mxu0 0
    %94 = vmatprep.subr.bf16.mxu0 0
    %95 = vmatpush1.bf16.msra.mxu0 0
    %96 = vmatprep.subr.bf16.mxu0 0
    %97 = vmatpush1.bf16.msra.mxu0 0
    %98 = vmatprep.subr.bf16.mxu0 0
    %99 = vmatpush1.bf16.msra.mxu0 0
    %100 = vmatprep.subr.bf16.mxu0 0
    %101 = vmatpush1.bf16.msra.mxu0 0
    %102 = vmatprep.subr.bf16.mxu0 0
    %103 = vmatpush1.bf16.msra.mxu0 0
    %104 = vmatprep.subr.bf16.mxu0 0
    %105 = vmatpush1.bf16.msra.mxu0 0
    %106 = vmatprep.subr.bf16.mxu0 0
    %107 = vmatpush1.bf16.msra.mxu0 0
    %108 = vmatprep.subr.bf16.mxu0 0
    %109 = vmatpush1.bf16.msra.mxu0 0
    %110 = vmatprep.subr.bf16.mxu0 0
    %111 = vmatpush1.bf16.msra.mxu0 0
    %112 = vmatprep.subr.bf16.mxu0 0
    %113 = vmatpush1.bf16.msra.mxu0 0
    %114 = vmatprep.subr.bf16.mxu0 0
    %115 = vmatpush1.bf16.msra.mxu0 0
    %116 = vmatprep.mubr.bf16.mxu0 0
    %117 = vmatmul.mubr.bf16.gmra.mrb[0].mxu0 %v75
    %v118 = vpop.f32.mrb[0].mxu0
    %v119 = vadd.f32 %v46, %v118
    %v120 = vpop.f32.mrb[0].mxu0
    %v121 = vpop.f32.mrb[0].mxu0
    %v122 = vadd.f32 %v51, %v121
    %v123 = vpop.f32.mrb[0].mxu0
    %124 = vmatprep.mubr.bf16.mxu0 0
    %125 = vmatmul.mubr.bf16.gmra.mrb[0].mxu0 %v78
    %v126 = vpop.f32.mrb[0].mxu0
    %v127 = vadd.f32 %v56, %v126
    %v128 = vpop.f32.mrb[0].mxu0
    %v129 = vpop.f32.mrb[0].mxu0
    %v130 = vadd.f32 %v61, %v129
    %v131 = vpop.f32.mrb[0].mxu0
    %132 = vdwg.mxu0
    %v133 = vlaneseq
    %v134 = vand.u32 %v133, 127
    %vm135 = vcmp.lt.s32.totalorder %v134, 0
    %v136 = vsub.s32 0, %v134
    %v137 = vsel %vm135, %v136, %v134
    %v138 = vshrl.u32 %v137, 5
    %v139 = vand.u32 %v137, 31
    %v140 = vsub.s32 0, %v139
    %v141 = vsel %vm135, %v140, %v139
    %vm142 = vcmp.ne.s32.totalorder %v141, 0
    %vm143 = vcmp.lt.s32.totalorder %v141, 0
    %vm144 = vmand %vm143, %vm142
    %v145 = vadd.s32 %v141, 32
    %v146 = vsel %vm144, %v145, %v141
    %v147 = vld [vmem:[%s3] sm:$0xf]
    %v148 = vld [vmem:[%s3 + $0x4] sm:$0xf]
    %v149 = vld [vmem:[%s3 + $0x8] sm:$0xf]
    %v150 = vld [vmem:[%s3 + $0xc] sm:$0xf]
    %s151 = scalar_lea.vmem %s3, 16
    %v152 = vld [vmem:[%s151] sm:$0xf]
    %v153 = vld [vmem:[%s151 + $0x4] sm:$0xf]
    %v154 = vld [vmem:[%s151 + $0x8] sm:$0xf]
    %v155 = vld [vmem:[%s151 + $0xc] sm:$0xf]
    %v156 = vld [vmem:[%s4] sm:$0xff]
    %v157 = vld [vmem:[%s4 + $0x8] sm:$0xff]
    %v158 = vld [vmem:[%s4 + $0x10] sm:$0xff]
    %v159 = vld [vmem:[%s4 + $0x18] sm:$0xff]
    %vm160 = vcmp.ge.s32.totalorder %v146, 1
    %161 = vrot.lane.b32.xlu0 %v119, 1
    %v162 = vpop.permute.xlu0 %161
    %163 = vrot.lane.b32.xlu0 %v122, 1
    %v164 = vpop.permute.xlu0 %163
    %165 = vrot.lane.b32.xlu0 %v127, 1
    %v166 = vpop.permute.xlu0 %165
    %167 = vrot.lane.b32.xlu0 %v130, 1
    %v168 = vpop.permute.xlu0 %167
    %v169 = vsel %vm160, 1, 0
    %vm170 = vcmp.eq.s32.totalorder %v169, 1
    %v171 = vsel %vm170, %v162, 0.0
    %v172 = vsel %vm170, %v164, 0.0
    %v173 = vsel %vm170, %v166, 0.0
    %v174 = vsel %vm170, %v168, 0.0
    %v175 = vpack.c.bf16 %v172, %v171
    %v176 = vpack.c.bf16 %v174, %v173
    %v177 = vpack.c.bf16 %v122, %v119
    %v178 = vpack.c.bf16 %v130, %v127
    %v183 = vunpack.c.l.b16 %v152
    %v184 = vunpack.c.l.b16 %v153
    %v185 = vunpack.c.l.b16 %v154
    %v186 = vunpack.c.l.b16 %v155
    %v187 = vpack.c.b16 %v184, %v183
    %v188 = vpack.c.b16 %v186, %v185
    %vm189 = vcmask 261120
    %v191 = vsel %vm189, %v187, 0
    %v194 = vsel %vm189, %v188, 0
    %196 = vmatprep.subr.bf16.mxu0 0
    %197 = vmatpush1.bf16.msra.mxu0 %v177
    %198 = vmatprep.subr.bf16.mxu0 0
    %199 = vmatpush1.bf16.msra.mxu0 %v178
    %200 = vmatprep.subr.bf16.mxu0 0
    %201 = vmatpush1.bf16.msra.mxu0 0
    %202 = vmatprep.subr.bf16.mxu0 0
    %203 = vmatpush1.bf16.msra.mxu0 0
    %204 = vmatprep.subr.bf16.mxu0 0
    %205 = vmatpush1.bf16.msra.mxu0 0
    %206 = vmatprep.subr.bf16.mxu0 0
    %207 = vmatpush1.bf16.msra.mxu0 0
    %208 = vmatprep.subr.bf16.mxu0 0
    %209 = vmatpush1.bf16.msra.mxu0 0
    %210 = vmatprep.subr.bf16.mxu0 0
    %211 = vmatpush1.bf16.msra.mxu0 0
    %212 = vmatprep.subr.bf16.mxu0 0
    %213 = vmatpush1.bf16.msra.mxu0 0
    %214 = vmatprep.subr.bf16.mxu0 0
    %215 = vmatpush1.bf16.msra.mxu0 0
    %216 = vmatprep.subr.bf16.mxu0 0
    %217 = vmatpush1.bf16.msra.mxu0 0
    %218 = vmatprep.subr.bf16.mxu0 0
    %219 = vmatpush1.bf16.msra.mxu0 0
    %220 = vmatprep.subr.bf16.mxu0 0
    %221 = vmatpush1.bf16.msra.mxu0 0
    %222 = vmatprep.subr.bf16.mxu0 0
    %223 = vmatpush1.bf16.msra.mxu0 0
    %224 = vmatprep.subr.bf16.mxu0 0
    %225 = vmatpush1.bf16.msra.mxu0 0
    %226 = vmatprep.subr.bf16.mxu0 0
    %227 = vmatpush1.bf16.msra.mxu0 0
    %228 = vmatprep.mubr.bf16.mxu0 0
    %229 = vmatmul.mubr.bf16.gmra.mrb[0].mxu0 %v191
    %v230 = vpop.f32.mrb[0].mxu0
    %v231 = vadd.f32 0.0, %v230
    %v232 = vpop.f32.mrb[0].mxu0
    %v233 = vpop.f32.mrb[0].mxu0
    %v234 = vadd.f32 0.0, %v233
    %v235 = vpop.f32.mrb[0].mxu0
    %236 = vmatprep.mubr.bf16.mxu0 0
    %237 = vmatmul.mubr.bf16.gmra.mrb[0].mxu0 %v194
    %v238 = vpop.f32.mrb[0].mxu0
    %v239 = vadd.f32 0.0, %v238
    %v240 = vpop.f32.mrb[0].mxu0
    %v241 = vpop.f32.mrb[0].mxu0
    %v242 = vadd.f32 0.0, %v241
    %v243 = vpop.f32.mrb[0].mxu0
    %244 = vdwg.mxu0
    %v249 = vunpack.c.l.b16 %v147
    %v250 = vunpack.c.l.b16 %v148
    %v251 = vunpack.c.l.b16 %v149
    %v252 = vunpack.c.l.b16 %v150
    %v253 = vpack.c.b16 %v250, %v249
    %v254 = vpack.c.b16 %v252, %v251
    %v256 = vsel %vm189, %v253, 0
    %v259 = vsel %vm189, %v254, 0
    %261 = vmatprep.subr.bf16.mxu0 0
    %262 = vmatpush1.bf16.msra.mxu0 %v175
    %263 = vmatprep.subr.bf16.mxu0 0
    %264 = vmatpush1.bf16.msra.mxu0 %v176
    %265 = vmatprep.subr.bf16.mxu0 0
    %266 = vmatpush1.bf16.msra.mxu0 0
    %267 = vmatprep.subr.bf16.mxu0 0
    %268 = vmatpush1.bf16.msra.mxu0 0
    %269 = vmatprep.subr.bf16.mxu0 0
    %270 = vmatpush1.bf16.msra.mxu0 0
    %271 = vmatprep.subr.bf16.mxu0 0
    %272 = vmatpush1.bf16.msra.mxu0 0
    %273 = vmatprep.subr.bf16.mxu0 0
    %274 = vmatpush1.bf16.msra.mxu0 0
    %275 = vmatprep.subr.bf16.mxu0 0
    %276 = vmatpush1.bf16.msra.mxu0 0
    %277 = vmatprep.subr.bf16.mxu0 0
    %278 = vmatpush1.bf16.msra.mxu0 0
    %279 = vmatprep.subr.bf16.mxu0 0
    %280 = vmatpush1.bf16.msra.mxu0 0
    %281 = vmatprep.subr.bf16.mxu0 0
    %282 = vmatpush1.bf16.msra.mxu0 0
    %283 = vmatprep.subr.bf16.mxu0 0
    %284 = vmatpush1.bf16.msra.mxu0 0
    %285 = vmatprep.subr.bf16.mxu0 0
    %286 = vmatpush1.bf16.msra.mxu0 0
    %287 = vmatprep.subr.bf16.mxu0 0
    %288 = vmatpush1.bf16.msra.mxu0 0
    %289 = vmatprep.subr.bf16.mxu0 0
    %290 = vmatpush1.bf16.msra.mxu0 0
    %291 = vmatprep.subr.bf16.mxu0 0
    %292 = vmatpush1.bf16.msra.mxu0 0
    %293 = vmatprep.mubr.bf16.mxu0 0
    %294 = vmatmul.mubr.bf16.gmra.mrb[0].mxu0 %v256
    %v295 = vpop.f32.mrb[0].mxu0
    %v296 = vadd.f32 %v231, %v295
    %v297 = vpop.f32.mrb[0].mxu0
    %v298 = vpop.f32.mrb[0].mxu0
    %v299 = vadd.f32 %v234, %v298
    %v300 = vpop.f32.mrb[0].mxu0
    %301 = vmatprep.mubr.bf16.mxu0 0
    %302 = vmatmul.mubr.bf16.gmra.mrb[0].mxu0 %v259
    %v303 = vpop.f32.mrb[0].mxu0
    %v304 = vadd.f32 %v239, %v303
    %v305 = vpop.f32.mrb[0].mxu0
    %v306 = vpop.f32.mrb[0].mxu0
    %v307 = vadd.f32 %v242, %v306
    %v308 = vpop.f32.mrb[0].mxu0
    %309 = vdwg.mxu0
    %311 = vset.pattern.permute.xlu0 0
    %312 = vperm.xlu0 %311, %v156
    %v313 = vpop.permute.xlu0 %312
    %316 = vset.pattern.permute.xlu0 0
    %317 = vperm.xlu0 %316, %v157
    %v318 = vpop.permute.xlu0 %317
    %321 = vset.pattern.permute.xlu0 0
    %322 = vperm.xlu0 %321, %v158
    %v323 = vpop.permute.xlu0 %322
    %326 = vset.pattern.permute.xlu0 0
    %327 = vperm.xlu0 %326, %v159
    %v328 = vpop.permute.xlu0 %327
    %v330 = vadd.f32 %v296, %v313
    %v331 = vadd.f32 %v299, %v318
    %v332 = vadd.f32 %v304, %v323
    %v333 = vadd.f32 %v307, %v328
    %v334 = vmax.f32 %v330, 0.0
    %v335 = vmax.f32 %v331, 0.0
    %v336 = vmax.f32 %v332, 0.0
    %v337 = vmax.f32 %v333, 0.0
    %v338 = vld [vmem:[%s5] sm:$0xf]
    %v339 = vld [vmem:[%s5 + $0x4] sm:$0xf]
    %v340 = vld [vmem:[%s5 + $0x8] sm:$0xf]
    %v341 = vld [vmem:[%s5 + $0xc] sm:$0xf]
    %s342 = scalar_lea.vmem %s5, 16
    %v343 = vld [vmem:[%s342] sm:$0xf]
    %v344 = vld [vmem:[%s342 + $0x4] sm:$0xf]
    %v345 = vld [vmem:[%s342 + $0x8] sm:$0xf]
    %v346 = vld [vmem:[%s342 + $0xc] sm:$0xf]
    %v347 = vld [vmem:[%s6] sm:$0xff]
    %v348 = vld [vmem:[%s6 + $0x8] sm:$0xff]
    %v349 = vld [vmem:[%s6 + $0x10] sm:$0xff]
    %v350 = vld [vmem:[%s6 + $0x18] sm:$0xff]
    %351 = vrot.lane.b32.xlu0 %v334, 1
    %v352 = vpop.permute.xlu0 %351
    %353 = vrot.lane.b32.xlu0 %v335, 1
    %v354 = vpop.permute.xlu0 %353
    %355 = vrot.lane.b32.xlu0 %v336, 1
    %v356 = vpop.permute.xlu0 %355
    %357 = vrot.lane.b32.xlu0 %v337, 1
    %v358 = vpop.permute.xlu0 %357
    %v359 = vsel %vm170, %v352, 0.0
    %v360 = vsel %vm170, %v354, 0.0
    %v361 = vsel %vm170, %v356, 0.0
    %v362 = vsel %vm170, %v358, 0.0
    %v363 = vpack.c.bf16 %v360, %v359
    %v364 = vpack.c.bf16 %v362, %v361
    %v365 = vpack.c.bf16 %v335, %v334
    %v366 = vpack.c.bf16 %v337, %v336
    %v371 = vunpack.c.l.b16 %v343
    %v372 = vunpack.c.l.b16 %v344
    %v373 = vunpack.c.l.b16 %v345
    %v374 = vunpack.c.l.b16 %v346
    %v375 = vpack.c.b16 %v372, %v371
    %v376 = vpack.c.b16 %v374, %v373
    %v378 = vsel %vm189, %v375, 0
    %v381 = vsel %vm189, %v376, 0
    %383 = vmatprep.subr.bf16.mxu0 0
    %384 = vmatpush1.bf16.msra.mxu0 %v365
    %385 = vmatprep.subr.bf16.mxu0 0
    %386 = vmatpush1.bf16.msra.mxu0 %v366
    %387 = vmatprep.subr.bf16.mxu0 0
    %388 = vmatpush1.bf16.msra.mxu0 0
    %389 = vmatprep.subr.bf16.mxu0 0
    %390 = vmatpush1.bf16.msra.mxu0 0
    %391 = vmatprep.subr.bf16.mxu0 0
    %392 = vmatpush1.bf16.msra.mxu0 0
    %393 = vmatprep.subr.bf16.mxu0 0
    %394 = vmatpush1.bf16.msra.mxu0 0
    %395 = vmatprep.subr.bf16.mxu0 0
    %396 = vmatpush1.bf16.msra.mxu0 0
    %397 = vmatprep.subr.bf16.mxu0 0
    %398 = vmatpush1.bf16.msra.mxu0 0
    %399 = vmatprep.subr.bf16.mxu0 0
    %400 = vmatpush1.bf16.msra.mxu0 0
    %401 = vmatprep.subr.bf16.mxu0 0
    %402 = vmatpush1.bf16.msra.mxu0 0
    %403 = vmatprep.subr.bf16.mxu0 0
    %404 = vmatpush1.bf16.msra.mxu0 0
    %405 = vmatprep.subr.bf16.mxu0 0
    %406 = vmatpush1.bf16.msra.mxu0 0
    %407 = vmatprep.subr.bf16.mxu0 0
    %408 = vmatpush1.bf16.msra.mxu0 0
    %409 = vmatprep.subr.bf16.mxu0 0
    %410 = vmatpush1.bf16.msra.mxu0 0
    %411 = vmatprep.subr.bf16.mxu0 0
    %412 = vmatpush1.bf16.msra.mxu0 0
    %413 = vmatprep.subr.bf16.mxu0 0
    %414 = vmatpush1.bf16.msra.mxu0 0
    %415 = vmatprep.mubr.bf16.mxu0 0
    %416 = vmatmul.mubr.bf16.gmra.mrb[0].mxu0 %v378
    %v417 = vpop.f32.mrb[0].mxu0
    %v418 = vadd.f32 0.0, %v417
    %v419 = vpop.f32.mrb[0].mxu0
    %v420 = vpop.f32.mrb[0].mxu0
    %v421 = vadd.f32 0.0, %v420
    %v422 = vpop.f32.mrb[0].mxu0
    %423 = vmatprep.mubr.bf16.mxu0 0
    %424 = vmatmul.mubr.bf16.gmra.mrb[0].mxu0 %v381
    %v425 = vpop.f32.mrb[0].mxu0
    %v426 = vadd.f32 0.0, %v425
    %v427 = vpop.f32.mrb[0].mxu0
    %v428 = vpop.f32.mrb[0].mxu0
    %v429 = vadd.f32 0.0, %v428
    %v430 = vpop.f32.mrb[0].mxu0
    %431 = vdwg.mxu0
    %v436 = vunpack.c.l.b16 %v338
    %v437 = vunpack.c.l.b16 %v339
    %v438 = vunpack.c.l.b16 %v340
    %v439 = vunpack.c.l.b16 %v341
    %v440 = vpack.c.b16 %v437, %v436
    %v441 = vpack.c.b16 %v439, %v438
    %v443 = vsel %vm189, %v440, 0
    %v446 = vsel %vm189, %v441, 0
    %448 = vmatprep.subr.bf16.mxu0 0
    %449 = vmatpush1.bf16.msra.mxu0 %v363
    %450 = vmatprep.subr.bf16.mxu0 0
    %451 = vmatpush1.bf16.msra.mxu0 %v364
    %452 = vmatprep.subr.bf16.mxu0 0
    %453 = vmatpush1.bf16.msra.mxu0 0
    %454 = vmatprep.subr.bf16.mxu0 0
    %455 = vmatpush1.bf16.msra.mxu0 0
    %456 = vmatprep.subr.bf16.mxu0 0
    %457 = vmatpush1.bf16.msra.mxu0 0
    %458 = vmatprep.subr.bf16.mxu0 0
    %459 = vmatpush1.bf16.msra.mxu0 0
    %460 = vmatprep.subr.bf16.mxu0 0
    %461 = vmatpush1.bf16.msra.mxu0 0
    %462 = vmatprep.subr.bf16.mxu0 0
    %463 = vmatpush1.bf16.msra.mxu0 0
    %464 = vmatprep.subr.bf16.mxu0 0
    %465 = vmatpush1.bf16.msra.mxu0 0
    %466 = vmatprep.subr.bf16.mxu0 0
    %467 = vmatpush1.bf16.msra.mxu0 0
    %468 = vmatprep.subr.bf16.mxu0 0
    %469 = vmatpush1.bf16.msra.mxu0 0
    %470 = vmatprep.subr.bf16.mxu0 0
    %471 = vmatpush1.bf16.msra.mxu0 0
    %472 = vmatprep.subr.bf16.mxu0 0
    %473 = vmatpush1.bf16.msra.mxu0 0
    %474 = vmatprep.subr.bf16.mxu0 0
    %475 = vmatpush1.bf16.msra.mxu0 0
    %476 = vmatprep.subr.bf16.mxu0 0
    %477 = vmatpush1.bf16.msra.mxu0 0
    %478 = vmatprep.subr.bf16.mxu0 0
    %479 = vmatpush1.bf16.msra.mxu0 0
    %480 = vmatprep.mubr.bf16.mxu0 0
    %481 = vmatmul.mubr.bf16.gmra.mrb[0].mxu0 %v443
    %v482 = vpop.f32.mrb[0].mxu0
    %v483 = vadd.f32 %v418, %v482
    %v484 = vpop.f32.mrb[0].mxu0
    %v485 = vpop.f32.mrb[0].mxu0
    %v486 = vadd.f32 %v421, %v485
    %v487 = vpop.f32.mrb[0].mxu0
    %488 = vmatprep.mubr.bf16.mxu0 0
    %489 = vmatmul.mubr.bf16.gmra.mrb[0].mxu0 %v446
    %v490 = vpop.f32.mrb[0].mxu0
    %v491 = vadd.f32 %v426, %v490
    %v492 = vpop.f32.mrb[0].mxu0
    %v493 = vpop.f32.mrb[0].mxu0
    %v494 = vadd.f32 %v429, %v493
    %v495 = vpop.f32.mrb[0].mxu0
    %496 = vdwg.mxu0
    %498 = vset.pattern.permute.xlu0 0
    %499 = vperm.xlu0 %498, %v347
    %v500 = vpop.permute.xlu0 %499
    %503 = vset.pattern.permute.xlu0 0
    %504 = vperm.xlu0 %503, %v348
    %v505 = vpop.permute.xlu0 %504
    %508 = vset.pattern.permute.xlu0 0
    %509 = vperm.xlu0 %508, %v349
    %v510 = vpop.permute.xlu0 %509
    %513 = vset.pattern.permute.xlu0 0
    %514 = vperm.xlu0 %513, %v350
    %v515 = vpop.permute.xlu0 %514
    %v517 = vadd.f32 %v483, %v500
    %v518 = vadd.f32 %v486, %v505
    %v519 = vadd.f32 %v491, %v510
    %v520 = vadd.f32 %v494, %v515
    %v521 = vmax.f32 %v517, 0.0
    %v522 = vmax.f32 %v518, 0.0
    %v523 = vmax.f32 %v519, 0.0
    %v524 = vmax.f32 %v520, 0.0
    %v525 = vld [vmem:[%s7] sm:$0xf]
    %v526 = vld [vmem:[%s7 + $0x4] sm:$0xf]
    %v527 = vld [vmem:[%s7 + $0x8] sm:$0xf]
    %v528 = vld [vmem:[%s7 + $0xc] sm:$0xf]
    %v529 = vpack.c.bf16 %v522, %v521
    %v530 = vpack.c.bf16 %v524, %v523
    %v531 = vld [vmem:[%s8] sm:$0xff]
    %v532 = vld [vmem:[%s8 + $0x8] sm:$0xff]
    %v533 = vld [vmem:[%s8 + $0x10] sm:$0xff]
    %v534 = vld [vmem:[%s8 + $0x18] sm:$0xff]
    %536 = vset.pattern.permute.xlu0 0
    %537 = vperm.xlu0 %536, %v531
    %v538 = vpop.permute.xlu0 %537
    %541 = vset.pattern.permute.xlu0 0
    %542 = vperm.xlu0 %541, %v532
    %v543 = vpop.permute.xlu0 %542
    %546 = vset.pattern.permute.xlu0 0
    %547 = vperm.xlu0 %546, %v533
    %v548 = vpop.permute.xlu0 %547
    %551 = vset.pattern.permute.xlu0 0
    %552 = vperm.xlu0 %551, %v534
    %v553 = vpop.permute.xlu0 %552
    %v559 = vunpack.c.l.b16 %v525
    %v560 = vunpack.c.l.b16 %v526
    %v561 = vunpack.c.l.b16 %v527
    %v562 = vunpack.c.l.b16 %v528
    %v563 = vpack.c.b16 %v560, %v559
    %v564 = vpack.c.b16 %v562, %v561
    %v566 = vsel %vm189, %v563, 0
    %v569 = vsel %vm189, %v564, 0
    %571 = vmatprep.subr.bf16.mxu0 0
    %572 = vmatpush1.bf16.msra.mxu0 %v529
    %573 = vmatprep.subr.bf16.mxu0 0
    %574 = vmatpush1.bf16.msra.mxu0 %v530
    %575 = vmatprep.subr.bf16.mxu0 0
    %576 = vmatpush1.bf16.msra.mxu0 0
    %577 = vmatprep.subr.bf16.mxu0 0
    %578 = vmatpush1.bf16.msra.mxu0 0
    %579 = vmatprep.subr.bf16.mxu0 0
    %580 = vmatpush1.bf16.msra.mxu0 0
    %581 = vmatprep.subr.bf16.mxu0 0
    %582 = vmatpush1.bf16.msra.mxu0 0
    %583 = vmatprep.subr.bf16.mxu0 0
    %584 = vmatpush1.bf16.msra.mxu0 0
    %585 = vmatprep.subr.bf16.mxu0 0
    %586 = vmatpush1.bf16.msra.mxu0 0
    %587 = vmatprep.subr.bf16.mxu0 0
    %588 = vmatpush1.bf16.msra.mxu0 0
    %589 = vmatprep.subr.bf16.mxu0 0
    %590 = vmatpush1.bf16.msra.mxu0 0
    %591 = vmatprep.subr.bf16.mxu0 0
    %592 = vmatpush1.bf16.msra.mxu0 0
    %593 = vmatprep.subr.bf16.mxu0 0
    %594 = vmatpush1.bf16.msra.mxu0 0
    %595 = vmatprep.subr.bf16.mxu0 0
    %596 = vmatpush1.bf16.msra.mxu0 0
    %597 = vmatprep.subr.bf16.mxu0 0
    %598 = vmatpush1.bf16.msra.mxu0 0
    %599 = vmatprep.subr.bf16.mxu0 0
    %600 = vmatpush1.bf16.msra.mxu0 0
    %601 = vmatprep.subr.bf16.mxu0 0
    %602 = vmatpush1.bf16.msra.mxu0 0
    %603 = vmatprep.mubr.bf16.mxu0 0
    %604 = vmatmul.mubr.bf16.gmra.mrb[0].mxu0 %v566
    %v605 = vpop.f32.mrb[0].mxu0
    %v606 = vadd.f32 %v538, %v605
    %v607 = vpop.f32.mrb[0].mxu0
    %v608 = vpop.f32.mrb[0].mxu0
    %v609 = vadd.f32 %v543, %v608
    %v610 = vpop.f32.mrb[0].mxu0
    %611 = vmatprep.mubr.bf16.mxu0 0
    %612 = vmatmul.mubr.bf16.gmra.mrb[0].mxu0 %v569
    %v613 = vpop.f32.mrb[0].mxu0
    %v614 = vadd.f32 %v548, %v613
    %v615 = vpop.f32.mrb[0].mxu0
    %v616 = vpop.f32.mrb[0].mxu0
    %v617 = vadd.f32 %v553, %v616
    %v618 = vpop.f32.mrb[0].mxu0
    %619 = vdwg.mxu0
    %v620 = vadd.f32 %v606, %v119
    %v621 = vadd.f32 %v609, %v122
    %v622 = vadd.f32 %v614, %v127
    %v623 = vadd.f32 %v617, %v130
    %v624 = vmax.f32 %v620, 0.0
    %v625 = vmax.f32 %v621, 0.0
    %v626 = vmax.f32 %v622, 0.0
    %v627 = vmax.f32 %v623, 0.0
    %s628 = scalar_lea.vmem %s3, 32
    %v629 = vld [vmem:[%s628] sm:$0xf]
    %v630 = vld [vmem:[%s628 + $0x4] sm:$0xf]
    %v631 = vld [vmem:[%s628 + $0x8] sm:$0xf]
    %v632 = vld [vmem:[%s628 + $0xc] sm:$0xf]
    %s633 = scalar_lea.vmem %s3, 48
    %v634 = vld [vmem:[%s633] sm:$0xf]
    %v635 = vld [vmem:[%s633 + $0x4] sm:$0xf]
    %v636 = vld [vmem:[%s633 + $0x8] sm:$0xf]
    %v637 = vld [vmem:[%s633 + $0xc] sm:$0xf]
    %s638 = scalar_lea.vmem %s4, 32
    %v639 = vld [vmem:[%s638] sm:$0xff]
    %v640 = vld [vmem:[%s638 + $0x8] sm:$0xff]
    %v641 = vld [vmem:[%s638 + $0x10] sm:$0xff]
    %v642 = vld [vmem:[%s638 + $0x18] sm:$0xff]
    %vm643 = vcmp.ge.s32.totalorder %v146, 2
    %644 = vrot.lane.b32.xlu0 %v624, 2
    %v645 = vpop.permute.xlu0 %644
    %646 = vrot.lane.b32.xlu0 %v625, 2
    %v647 = vpop.permute.xlu0 %646
    %648 = vrot.lane.b32.xlu0 %v626, 2
    %v649 = vpop.permute.xlu0 %648
    %650 = vrot.lane.b32.xlu0 %v627, 2
    %v651 = vpop.permute.xlu0 %650
    %v652 = vsel %vm643, 1, 0
    %vm653 = vcmp.eq.s32.totalorder %v652, 1
    %v654 = vsel %vm653, %v645, 0.0
    %v655 = vsel %vm653, %v647, 0.0
    %v656 = vsel %vm653, %v649, 0.0
    %v657 = vsel %vm653, %v651, 0.0
    %v658 = vpack.c.bf16 %v655, %v654
    %v659 = vpack.c.bf16 %v657, %v656
    %v660 = vpack.c.bf16 %v625, %v624
    %v661 = vpack.c.bf16 %v627, %v626
    %v666 = vunpack.c.l.b16 %v634
    %v667 = vunpack.c.l.b16 %v635
    %v668 = vunpack.c.l.b16 %v636
    %v669 = vunpack.c.l.b16 %v637
    %v670 = vpack.c.b16 %v667, %v666
    %v671 = vpack.c.b16 %v669, %v668
    %v673 = vsel %vm189, %v670, 0
    %v676 = vsel %vm189, %v671, 0
    %678 = vmatprep.subr.bf16.mxu0 0
    %679 = vmatpush1.bf16.msra.mxu0 %v660
    %680 = vmatprep.subr.bf16.mxu0 0
    %681 = vmatpush1.bf16.msra.mxu0 %v661
    %682 = vmatprep.subr.bf16.mxu0 0
    %683 = vmatpush1.bf16.msra.mxu0 0
    %684 = vmatprep.subr.bf16.mxu0 0
    %685 = vmatpush1.bf16.msra.mxu0 0
    %686 = vmatprep.subr.bf16.mxu0 0
    %687 = vmatpush1.bf16.msra.mxu0 0
    %688 = vmatprep.subr.bf16.mxu0 0
    %689 = vmatpush1.bf16.msra.mxu0 0
    %690 = vmatprep.subr.bf16.mxu0 0
    %691 = vmatpush1.bf16.msra.mxu0 0
    %692 = vmatprep.subr.bf16.mxu0 0
    %693 = vmatpush1.bf16.msra.mxu0 0
    %694 = vmatprep.subr.bf16.mxu0 0
    %695 = vmatpush1.bf16.msra.mxu0 0
    %696 = vmatprep.subr.bf16.mxu0 0
    %697 = vmatpush1.bf16.msra.mxu0 0
    %698 = vmatprep.subr.bf16.mxu0 0
    %699 = vmatpush1.bf16.msra.mxu0 0
    %700 = vmatprep.subr.bf16.mxu0 0
    %701 = vmatpush1.bf16.msra.mxu0 0
    %702 = vmatprep.subr.bf16.mxu0 0
    %703 = vmatpush1.bf16.msra.mxu0 0
    %704 = vmatprep.subr.bf16.mxu0 0
    %705 = vmatpush1.bf16.msra.mxu0 0
    %706 = vmatprep.subr.bf16.mxu0 0
    %707 = vmatpush1.bf16.msra.mxu0 0
    %708 = vmatprep.subr.bf16.mxu0 0
    %709 = vmatpush1.bf16.msra.mxu0 0
    %710 = vmatprep.mubr.bf16.mxu0 0
    %711 = vmatmul.mubr.bf16.gmra.mrb[0].mxu0 %v673
    %v712 = vpop.f32.mrb[0].mxu0
    %v713 = vadd.f32 0.0, %v712
    %v714 = vpop.f32.mrb[0].mxu0
    %v715 = vpop.f32.mrb[0].mxu0
    %v716 = vadd.f32 0.0, %v715
    %v717 = vpop.f32.mrb[0].mxu0
    %718 = vmatprep.mubr.bf16.mxu0 0
    %719 = vmatmul.mubr.bf16.gmra.mrb[0].mxu0 %v676
    %v720 = vpop.f32.mrb[0].mxu0
    %v721 = vadd.f32 0.0, %v720
    %v722 = vpop.f32.mrb[0].mxu0
    %v723 = vpop.f32.mrb[0].mxu0
    %v724 = vadd.f32 0.0, %v723
    %v725 = vpop.f32.mrb[0].mxu0
    %726 = vdwg.mxu0
    %v731 = vunpack.c.l.b16 %v629
    %v732 = vunpack.c.l.b16 %v630
    %v733 = vunpack.c.l.b16 %v631
    %v734 = vunpack.c.l.b16 %v632
    %v735 = vpack.c.b16 %v732, %v731
    %v736 = vpack.c.b16 %v734, %v733
    %v738 = vsel %vm189, %v735, 0
    %v741 = vsel %vm189, %v736, 0
    %743 = vmatprep.subr.bf16.mxu0 0
    %744 = vmatpush1.bf16.msra.mxu0 %v658
    %745 = vmatprep.subr.bf16.mxu0 0
    %746 = vmatpush1.bf16.msra.mxu0 %v659
    %747 = vmatprep.subr.bf16.mxu0 0
    %748 = vmatpush1.bf16.msra.mxu0 0
    %749 = vmatprep.subr.bf16.mxu0 0
    %750 = vmatpush1.bf16.msra.mxu0 0
    %751 = vmatprep.subr.bf16.mxu0 0
    %752 = vmatpush1.bf16.msra.mxu0 0
    %753 = vmatprep.subr.bf16.mxu0 0
    %754 = vmatpush1.bf16.msra.mxu0 0
    %755 = vmatprep.subr.bf16.mxu0 0
    %756 = vmatpush1.bf16.msra.mxu0 0
    %757 = vmatprep.subr.bf16.mxu0 0
    %758 = vmatpush1.bf16.msra.mxu0 0
    %759 = vmatprep.subr.bf16.mxu0 0
    %760 = vmatpush1.bf16.msra.mxu0 0
    %761 = vmatprep.subr.bf16.mxu0 0
    %762 = vmatpush1.bf16.msra.mxu0 0
    %763 = vmatprep.subr.bf16.mxu0 0
    %764 = vmatpush1.bf16.msra.mxu0 0
    %765 = vmatprep.subr.bf16.mxu0 0
    %766 = vmatpush1.bf16.msra.mxu0 0
    %767 = vmatprep.subr.bf16.mxu0 0
    %768 = vmatpush1.bf16.msra.mxu0 0
    %769 = vmatprep.subr.bf16.mxu0 0
    %770 = vmatpush1.bf16.msra.mxu0 0
    %771 = vmatprep.subr.bf16.mxu0 0
    %772 = vmatpush1.bf16.msra.mxu0 0
    %773 = vmatprep.subr.bf16.mxu0 0
    %774 = vmatpush1.bf16.msra.mxu0 0
    %775 = vmatprep.mubr.bf16.mxu0 0
    %776 = vmatmul.mubr.bf16.gmra.mrb[0].mxu0 %v738
    %v777 = vpop.f32.mrb[0].mxu0
    %v778 = vadd.f32 %v713, %v777
    %v779 = vpop.f32.mrb[0].mxu0
    %v780 = vpop.f32.mrb[0].mxu0
    %v781 = vadd.f32 %v716, %v780
    %v782 = vpop.f32.mrb[0].mxu0
    %783 = vmatprep.mubr.bf16.mxu0 0
    %784 = vmatmul.mubr.bf16.gmra.mrb[0].mxu0 %v741
    %v785 = vpop.f32.mrb[0].mxu0
    %v786 = vadd.f32 %v721, %v785
    %v787 = vpop.f32.mrb[0].mxu0
    %v788 = vpop.f32.mrb[0].mxu0
    %v789 = vadd.f32 %v724, %v788
    %v790 = vpop.f32.mrb[0].mxu0
    %791 = vdwg.mxu0
    %793 = vset.pattern.permute.xlu0 0
    %794 = vperm.xlu0 %793, %v639
    %v795 = vpop.permute.xlu0 %794
    %798 = vset.pattern.permute.xlu0 0
    %799 = vperm.xlu0 %798, %v640
    %v800 = vpop.permute.xlu0 %799
    %803 = vset.pattern.permute.xlu0 0
    %804 = vperm.xlu0 %803, %v641
    %v805 = vpop.permute.xlu0 %804
    %808 = vset.pattern.permute.xlu0 0
    %809 = vperm.xlu0 %808, %v642
    %v810 = vpop.permute.xlu0 %809
    %v812 = vadd.f32 %v778, %v795
    %v813 = vadd.f32 %v781, %v800
    %v814 = vadd.f32 %v786, %v805
    %v815 = vadd.f32 %v789, %v810
    %v816 = vmax.f32 %v812, 0.0
    %v817 = vmax.f32 %v813, 0.0
    %v818 = vmax.f32 %v814, 0.0
    %v819 = vmax.f32 %v815, 0.0
    %s820 = scalar_lea.vmem %s5, 32
    %v821 = vld [vmem:[%s820] sm:$0xf]
    %v822 = vld [vmem:[%s820 + $0x4] sm:$0xf]
    %v823 = vld [vmem:[%s820 + $0x8] sm:$0xf]
    %v824 = vld [vmem:[%s820 + $0xc] sm:$0xf]
    %s825 = scalar_lea.vmem %s5, 48
    %v826 = vld [vmem:[%s825] sm:$0xf]
    %v827 = vld [vmem:[%s825 + $0x4] sm:$0xf]
    %v828 = vld [vmem:[%s825 + $0x8] sm:$0xf]
    %v829 = vld [vmem:[%s825 + $0xc] sm:$0xf]
    %s830 = scalar_lea.vmem %s6, 32
    %v831 = vld [vmem:[%s830] sm:$0xff]
    %v832 = vld [vmem:[%s830 + $0x8] sm:$0xff]
    %v833 = vld [vmem:[%s830 + $0x10] sm:$0xff]
    %v834 = vld [vmem:[%s830 + $0x18] sm:$0xff]
    %835 = vrot.lane.b32.xlu0 %v816, 2
    %v836 = vpop.permute.xlu0 %835
    %837 = vrot.lane.b32.xlu0 %v817, 2
    %v838 = vpop.permute.xlu0 %837
    %839 = vrot.lane.b32.xlu0 %v818, 2
    %v840 = vpop.permute.xlu0 %839
    %841 = vrot.lane.b32.xlu0 %v819, 2
    %v842 = vpop.permute.xlu0 %841
    %v843 = vsel %vm653, %v836, 0.0
    %v844 = vsel %vm653, %v838, 0.0
    %v845 = vsel %vm653, %v840, 0.0
    %v846 = vsel %vm653, %v842, 0.0
    %v847 = vpack.c.bf16 %v844, %v843
    %v848 = vpack.c.bf16 %v846, %v845
    %v849 = vpack.c.bf16 %v817, %v816
    %v850 = vpack.c.bf16 %v819, %v818
    %v855 = vunpack.c.l.b16 %v826
    %v856 = vunpack.c.l.b16 %v827
    %v857 = vunpack.c.l.b16 %v828
    %v858 = vunpack.c.l.b16 %v829
    %v859 = vpack.c.b16 %v856, %v855
    %v860 = vpack.c.b16 %v858, %v857
    %v862 = vsel %vm189, %v859, 0
    %v865 = vsel %vm189, %v860, 0
    %867 = vmatprep.subr.bf16.mxu0 0
    %868 = vmatpush1.bf16.msra.mxu0 %v849
    %869 = vmatprep.subr.bf16.mxu0 0
    %870 = vmatpush1.bf16.msra.mxu0 %v850
    %871 = vmatprep.subr.bf16.mxu0 0
    %872 = vmatpush1.bf16.msra.mxu0 0
    %873 = vmatprep.subr.bf16.mxu0 0
    %874 = vmatpush1.bf16.msra.mxu0 0
    %875 = vmatprep.subr.bf16.mxu0 0
    %876 = vmatpush1.bf16.msra.mxu0 0
    %877 = vmatprep.subr.bf16.mxu0 0
    %878 = vmatpush1.bf16.msra.mxu0 0
    %879 = vmatprep.subr.bf16.mxu0 0
    %880 = vmatpush1.bf16.msra.mxu0 0
    %881 = vmatprep.subr.bf16.mxu0 0
    %882 = vmatpush1.bf16.msra.mxu0 0
    %883 = vmatprep.subr.bf16.mxu0 0
    %884 = vmatpush1.bf16.msra.mxu0 0
    %885 = vmatprep.subr.bf16.mxu0 0
    %886 = vmatpush1.bf16.msra.mxu0 0
    %887 = vmatprep.subr.bf16.mxu0 0
    %888 = vmatpush1.bf16.msra.mxu0 0
    %889 = vmatprep.subr.bf16.mxu0 0
    %890 = vmatpush1.bf16.msra.mxu0 0
    %891 = vmatprep.subr.bf16.mxu0 0
    %892 = vmatpush1.bf16.msra.mxu0 0
    %893 = vmatprep.subr.bf16.mxu0 0
    %894 = vmatpush1.bf16.msra.mxu0 0
    %895 = vmatprep.subr.bf16.mxu0 0
    %896 = vmatpush1.bf16.msra.mxu0 0
    %897 = vmatprep.subr.bf16.mxu0 0
    %898 = vmatpush1.bf16.msra.mxu0 0
    %899 = vmatprep.mubr.bf16.mxu0 0
    %900 = vmatmul.mubr.bf16.gmra.mrb[0].mxu0 %v862
    %v901 = vpop.f32.mrb[0].mxu0
    %v902 = vadd.f32 0.0, %v901
    %v903 = vpop.f32.mrb[0].mxu0
    %v904 = vpop.f32.mrb[0].mxu0
    %v905 = vadd.f32 0.0, %v904
    %v906 = vpop.f32.mrb[0].mxu0
    %907 = vmatprep.mubr.bf16.mxu0 0
    %908 = vmatmul.mubr.bf16.gmra.mrb[0].mxu0 %v865
    %v909 = vpop.f32.mrb[0].mxu0
    %v910 = vadd.f32 0.0, %v909
    %v911 = vpop.f32.mrb[0].mxu0
    %v912 = vpop.f32.mrb[0].mxu0
    %v913 = vadd.f32 0.0, %v912
    %v914 = vpop.f32.mrb[0].mxu0
    %915 = vdwg.mxu0
    %v920 = vunpack.c.l.b16 %v821
    %v921 = vunpack.c.l.b16 %v822
    %v922 = vunpack.c.l.b16 %v823
    %v923 = vunpack.c.l.b16 %v824
    %v924 = vpack.c.b16 %v921, %v920
    %v925 = vpack.c.b16 %v923, %v922
    %v927 = vsel %vm189, %v924, 0
    %v930 = vsel %vm189, %v925, 0
    %932 = vmatprep.subr.bf16.mxu0 0
    %933 = vmatpush1.bf16.msra.mxu0 %v847
    %934 = vmatprep.subr.bf16.mxu0 0
    %935 = vmatpush1.bf16.msra.mxu0 %v848
    %936 = vmatprep.subr.bf16.mxu0 0
    %937 = vmatpush1.bf16.msra.mxu0 0
    %938 = vmatprep.subr.bf16.mxu0 0
    %939 = vmatpush1.bf16.msra.mxu0 0
    %940 = vmatprep.subr.bf16.mxu0 0
    %941 = vmatpush1.bf16.msra.mxu0 0
    %942 = vmatprep.subr.bf16.mxu0 0
    %943 = vmatpush1.bf16.msra.mxu0 0
    %944 = vmatprep.subr.bf16.mxu0 0
    %945 = vmatpush1.bf16.msra.mxu0 0
    %946 = vmatprep.subr.bf16.mxu0 0
    %947 = vmatpush1.bf16.msra.mxu0 0
    %948 = vmatprep.subr.bf16.mxu0 0
    %949 = vmatpush1.bf16.msra.mxu0 0
    %950 = vmatprep.subr.bf16.mxu0 0
    %951 = vmatpush1.bf16.msra.mxu0 0
    %952 = vmatprep.subr.bf16.mxu0 0
    %953 = vmatpush1.bf16.msra.mxu0 0
    %954 = vmatprep.subr.bf16.mxu0 0
    %955 = vmatpush1.bf16.msra.mxu0 0
    %956 = vmatprep.subr.bf16.mxu0 0
    %957 = vmatpush1.bf16.msra.mxu0 0
    %958 = vmatprep.subr.bf16.mxu0 0
    %959 = vmatpush1.bf16.msra.mxu0 0
    %960 = vmatprep.subr.bf16.mxu0 0
    %961 = vmatpush1.bf16.msra.mxu0 0
    %962 = vmatprep.subr.bf16.mxu0 0
    %963 = vmatpush1.bf16.msra.mxu0 0
    %964 = vmatprep.mubr.bf16.mxu0 0
    %965 = vmatmul.mubr.bf16.gmra.mrb[0].mxu0 %v927
    %v966 = vpop.f32.mrb[0].mxu0
    %v967 = vadd.f32 %v902, %v966
    %v968 = vpop.f32.mrb[0].mxu0
    %v969 = vpop.f32.mrb[0].mxu0
    %v970 = vadd.f32 %v905, %v969
    %v971 = vpop.f32.mrb[0].mxu0
    %972 = vmatprep.mubr.bf16.mxu0 0
    %973 = vmatmul.mubr.bf16.gmra.mrb[0].mxu0 %v930
    %v974 = vpop.f32.mrb[0].mxu0
    %v975 = vadd.f32 %v910, %v974
    %v976 = vpop.f32.mrb[0].mxu0
    %v977 = vpop.f32.mrb[0].mxu0
    %v978 = vadd.f32 %v913, %v977
    %v979 = vpop.f32.mrb[0].mxu0
    %980 = vdwg.mxu0
    %982 = vset.pattern.permute.xlu0 0
    %983 = vperm.xlu0 %982, %v831
    %v984 = vpop.permute.xlu0 %983
    %987 = vset.pattern.permute.xlu0 0
    %988 = vperm.xlu0 %987, %v832
    %v989 = vpop.permute.xlu0 %988
    %992 = vset.pattern.permute.xlu0 0
    %993 = vperm.xlu0 %992, %v833
    %v994 = vpop.permute.xlu0 %993
    %997 = vset.pattern.permute.xlu0 0
    %998 = vperm.xlu0 %997, %v834
    %v999 = vpop.permute.xlu0 %998
    %v1001 = vadd.f32 %v967, %v984
    %v1002 = vadd.f32 %v970, %v989
    %v1003 = vadd.f32 %v975, %v994
    %v1004 = vadd.f32 %v978, %v999
    %v1005 = vmax.f32 %v1001, 0.0
    %v1006 = vmax.f32 %v1002, 0.0
    %v1007 = vmax.f32 %v1003, 0.0
    %v1008 = vmax.f32 %v1004, 0.0
    %s1009 = scalar_lea.vmem %s7, 16
    %v1010 = vld [vmem:[%s1009] sm:$0xf]
    %v1011 = vld [vmem:[%s1009 + $0x4] sm:$0xf]
    %v1012 = vld [vmem:[%s1009 + $0x8] sm:$0xf]
    %v1013 = vld [vmem:[%s1009 + $0xc] sm:$0xf]
    %v1014 = vpack.c.bf16 %v1006, %v1005
    %v1015 = vpack.c.bf16 %v1008, %v1007
    %s1016 = scalar_lea.vmem %s8, 32
    %v1017 = vld [vmem:[%s1016] sm:$0xff]
    %v1018 = vld [vmem:[%s1016 + $0x8] sm:$0xff]
    %v1019 = vld [vmem:[%s1016 + $0x10] sm:$0xff]
    %v1020 = vld [vmem:[%s1016 + $0x18] sm:$0xff]
    %1022 = vset.pattern.permute.xlu0 0
    %1023 = vperm.xlu0 %1022, %v1017
    %v1024 = vpop.permute.xlu0 %1023
    %1027 = vset.pattern.permute.xlu0 0
    %1028 = vperm.xlu0 %1027, %v1018
    %v1029 = vpop.permute.xlu0 %1028
    %1032 = vset.pattern.permute.xlu0 0
    %1033 = vperm.xlu0 %1032, %v1019
    %v1034 = vpop.permute.xlu0 %1033
    %1037 = vset.pattern.permute.xlu0 0
    %1038 = vperm.xlu0 %1037, %v1020
    %v1039 = vpop.permute.xlu0 %1038
    %v1045 = vunpack.c.l.b16 %v1010
    %v1046 = vunpack.c.l.b16 %v1011
    %v1047 = vunpack.c.l.b16 %v1012
    %v1048 = vunpack.c.l.b16 %v1013
    %v1049 = vpack.c.b16 %v1046, %v1045
    %v1050 = vpack.c.b16 %v1048, %v1047
    %v1052 = vsel %vm189, %v1049, 0
    %v1055 = vsel %vm189, %v1050, 0
    %1057 = vmatprep.subr.bf16.mxu0 0
    %1058 = vmatpush1.bf16.msra.mxu0 %v1014
    %1059 = vmatprep.subr.bf16.mxu0 0
    %1060 = vmatpush1.bf16.msra.mxu0 %v1015
    %1061 = vmatprep.subr.bf16.mxu0 0
    %1062 = vmatpush1.bf16.msra.mxu0 0
    %1063 = vmatprep.subr.bf16.mxu0 0
    %1064 = vmatpush1.bf16.msra.mxu0 0
    %1065 = vmatprep.subr.bf16.mxu0 0
    %1066 = vmatpush1.bf16.msra.mxu0 0
    %1067 = vmatprep.subr.bf16.mxu0 0
    %1068 = vmatpush1.bf16.msra.mxu0 0
    %1069 = vmatprep.subr.bf16.mxu0 0
    %1070 = vmatpush1.bf16.msra.mxu0 0
    %1071 = vmatprep.subr.bf16.mxu0 0
    %1072 = vmatpush1.bf16.msra.mxu0 0
    %1073 = vmatprep.subr.bf16.mxu0 0
    %1074 = vmatpush1.bf16.msra.mxu0 0
    %1075 = vmatprep.subr.bf16.mxu0 0
    %1076 = vmatpush1.bf16.msra.mxu0 0
    %1077 = vmatprep.subr.bf16.mxu0 0
    %1078 = vmatpush1.bf16.msra.mxu0 0
    %1079 = vmatprep.subr.bf16.mxu0 0
    %1080 = vmatpush1.bf16.msra.mxu0 0
    %1081 = vmatprep.subr.bf16.mxu0 0
    %1082 = vmatpush1.bf16.msra.mxu0 0
    %1083 = vmatprep.subr.bf16.mxu0 0
    %1084 = vmatpush1.bf16.msra.mxu0 0
    %1085 = vmatprep.subr.bf16.mxu0 0
    %1086 = vmatpush1.bf16.msra.mxu0 0
    %1087 = vmatprep.subr.bf16.mxu0 0
    %1088 = vmatpush1.bf16.msra.mxu0 0
    %1089 = vmatprep.mubr.bf16.mxu0 0
    %1090 = vmatmul.mubr.bf16.gmra.mrb[0].mxu0 %v1052
    %v1091 = vpop.f32.mrb[0].mxu0
    %v1092 = vadd.f32 %v1024, %v1091
    %v1093 = vpop.f32.mrb[0].mxu0
    %v1094 = vpop.f32.mrb[0].mxu0
    %v1095 = vadd.f32 %v1029, %v1094
    %v1096 = vpop.f32.mrb[0].mxu0
    %1097 = vmatprep.mubr.bf16.mxu0 0
    %1098 = vmatmul.mubr.bf16.gmra.mrb[0].mxu0 %v1055
    %v1099 = vpop.f32.mrb[0].mxu0
    %v1100 = vadd.f32 %v1034, %v1099
    %v1101 = vpop.f32.mrb[0].mxu0
    %v1102 = vpop.f32.mrb[0].mxu0
    %v1103 = vadd.f32 %v1039, %v1102
    %v1104 = vpop.f32.mrb[0].mxu0
    %1105 = vdwg.mxu0
    %v1106 = vadd.f32 %v1092, %v624
    %v1107 = vadd.f32 %v1095, %v625
    %v1108 = vadd.f32 %v1100, %v626
    %v1109 = vadd.f32 %v1103, %v627
    %v1110 = vmax.f32 %v1106, 0.0
    %v1111 = vmax.f32 %v1107, 0.0
    %v1112 = vmax.f32 %v1108, 0.0
    %v1113 = vmax.f32 %v1109, 0.0
    %s1114 = scalar_lea.vmem %s3, 64
    %v1115 = vld [vmem:[%s1114] sm:$0xf]
    %v1116 = vld [vmem:[%s1114 + $0x4] sm:$0xf]
    %v1117 = vld [vmem:[%s1114 + $0x8] sm:$0xf]
    %v1118 = vld [vmem:[%s1114 + $0xc] sm:$0xf]
    %s1119 = scalar_lea.vmem %s3, 80
    %v1120 = vld [vmem:[%s1119] sm:$0xf]
    %v1121 = vld [vmem:[%s1119 + $0x4] sm:$0xf]
    %v1122 = vld [vmem:[%s1119 + $0x8] sm:$0xf]
    %v1123 = vld [vmem:[%s1119 + $0xc] sm:$0xf]
    %s1124 = scalar_lea.vmem %s4, 64
    %v1125 = vld [vmem:[%s1124] sm:$0xff]
    %v1126 = vld [vmem:[%s1124 + $0x8] sm:$0xff]
    %v1127 = vld [vmem:[%s1124 + $0x10] sm:$0xff]
    %v1128 = vld [vmem:[%s1124 + $0x18] sm:$0xff]
    %vm1129 = vcmp.ge.s32.totalorder %v146, 4
    %1130 = vrot.lane.b32.xlu0 %v1110, 4
    %v1131 = vpop.permute.xlu0 %1130
    %1132 = vrot.lane.b32.xlu0 %v1111, 4
    %v1133 = vpop.permute.xlu0 %1132
    %1134 = vrot.lane.b32.xlu0 %v1112, 4
    %v1135 = vpop.permute.xlu0 %1134
    %1136 = vrot.lane.b32.xlu0 %v1113, 4
    %v1137 = vpop.permute.xlu0 %1136
    %v1138 = vsel %vm1129, 1, 0
    %vm1139 = vcmp.eq.s32.totalorder %v1138, 1
    %v1140 = vsel %vm1139, %v1131, 0.0
    %v1141 = vsel %vm1139, %v1133, 0.0
    %v1142 = vsel %vm1139, %v1135, 0.0
    %v1143 = vsel %vm1139, %v1137, 0.0
    %v1144 = vpack.c.bf16 %v1141, %v1140
    %v1145 = vpack.c.bf16 %v1143, %v1142
    %v1146 = vpack.c.bf16 %v1111, %v1110
    %v1147 = vpack.c.bf16 %v1113, %v1112
    %v1152 = vunpack.c.l.b16 %v1120
    %v1153 = vunpack.c.l.b16 %v1121
    %v1154 = vunpack.c.l.b16 %v1122
    %v1155 = vunpack.c.l.b16 %v1123
    %v1156 = vpack.c.b16 %v1153, %v1152
    %v1157 = vpack.c.b16 %v1155, %v1154
    %v1159 = vsel %vm189, %v1156, 0
    %v1162 = vsel %vm189, %v1157, 0
    %1164 = vmatprep.subr.bf16.mxu0 0
    %1165 = vmatpush1.bf16.msra.mxu0 %v1146
    %1166 = vmatprep.subr.bf16.mxu0 0
    %1167 = vmatpush1.bf16.msra.mxu0 %v1147
    %1168 = vmatprep.subr.bf16.mxu0 0
    %1169 = vmatpush1.bf16.msra.mxu0 0
    %1170 = vmatprep.subr.bf16.mxu0 0
    %1171 = vmatpush1.bf16.msra.mxu0 0
    %1172 = vmatprep.subr.bf16.mxu0 0
    %1173 = vmatpush1.bf16.msra.mxu0 0
    %1174 = vmatprep.subr.bf16.mxu0 0
    %1175 = vmatpush1.bf16.msra.mxu0 0
    %1176 = vmatprep.subr.bf16.mxu0 0
    %1177 = vmatpush1.bf16.msra.mxu0 0
    %1178 = vmatprep.subr.bf16.mxu0 0
    %1179 = vmatpush1.bf16.msra.mxu0 0
    %1180 = vmatprep.subr.bf16.mxu0 0
    %1181 = vmatpush1.bf16.msra.mxu0 0
    %1182 = vmatprep.subr.bf16.mxu0 0
    %1183 = vmatpush1.bf16.msra.mxu0 0
    %1184 = vmatprep.subr.bf16.mxu0 0
    %1185 = vmatpush1.bf16.msra.mxu0 0
    %1186 = vmatprep.subr.bf16.mxu0 0
    %1187 = vmatpush1.bf16.msra.mxu0 0
    %1188 = vmatprep.subr.bf16.mxu0 0
    %1189 = vmatpush1.bf16.msra.mxu0 0
    %1190 = vmatprep.subr.bf16.mxu0 0
    %1191 = vmatpush1.bf16.msra.mxu0 0
    %1192 = vmatprep.subr.bf16.mxu0 0
    %1193 = vmatpush1.bf16.msra.mxu0 0
    %1194 = vmatprep.subr.bf16.mxu0 0
    %1195 = vmatpush1.bf16.msra.mxu0 0
    %1196 = vmatprep.mubr.bf16.mxu0 0
    %1197 = vmatmul.mubr.bf16.gmra.mrb[0].mxu0 %v1159
    %v1198 = vpop.f32.mrb[0].mxu0
    %v1199 = vadd.f32 0.0, %v1198
    %v1200 = vpop.f32.mrb[0].mxu0
    %v1201 = vpop.f32.mrb[0].mxu0
    %v1202 = vadd.f32 0.0, %v1201
    %v1203 = vpop.f32.mrb[0].mxu0
    %1204 = vmatprep.mubr.bf16.mxu0 0
    %1205 = vmatmul.mubr.bf16.gmra.mrb[0].mxu0 %v1162
    %v1206 = vpop.f32.mrb[0].mxu0
    %v1207 = vadd.f32 0.0, %v1206
    %v1208 = vpop.f32.mrb[0].mxu0
    %v1209 = vpop.f32.mrb[0].mxu0
    %v1210 = vadd.f32 0.0, %v1209
    %v1211 = vpop.f32.mrb[0].mxu0
    %1212 = vdwg.mxu0
    %v1217 = vunpack.c.l.b16 %v1115
    %v1218 = vunpack.c.l.b16 %v1116
    %v1219 = vunpack.c.l.b16 %v1117
    %v1220 = vunpack.c.l.b16 %v1118
    %v1221 = vpack.c.b16 %v1218, %v1217
    %v1222 = vpack.c.b16 %v1220, %v1219
    %v1224 = vsel %vm189, %v1221, 0
    %v1227 = vsel %vm189, %v1222, 0
    %1229 = vmatprep.subr.bf16.mxu0 0
    %1230 = vmatpush1.bf16.msra.mxu0 %v1144
    %1231 = vmatprep.subr.bf16.mxu0 0
    %1232 = vmatpush1.bf16.msra.mxu0 %v1145
    %1233 = vmatprep.subr.bf16.mxu0 0
    %1234 = vmatpush1.bf16.msra.mxu0 0
    %1235 = vmatprep.subr.bf16.mxu0 0
    %1236 = vmatpush1.bf16.msra.mxu0 0
    %1237 = vmatprep.subr.bf16.mxu0 0
    %1238 = vmatpush1.bf16.msra.mxu0 0
    %1239 = vmatprep.subr.bf16.mxu0 0
    %1240 = vmatpush1.bf16.msra.mxu0 0
    %1241 = vmatprep.subr.bf16.mxu0 0
    %1242 = vmatpush1.bf16.msra.mxu0 0
    %1243 = vmatprep.subr.bf16.mxu0 0
    %1244 = vmatpush1.bf16.msra.mxu0 0
    %1245 = vmatprep.subr.bf16.mxu0 0
    %1246 = vmatpush1.bf16.msra.mxu0 0
    %1247 = vmatprep.subr.bf16.mxu0 0
    %1248 = vmatpush1.bf16.msra.mxu0 0
    %1249 = vmatprep.subr.bf16.mxu0 0
    %1250 = vmatpush1.bf16.msra.mxu0 0
    %1251 = vmatprep.subr.bf16.mxu0 0
    %1252 = vmatpush1.bf16.msra.mxu0 0
    %1253 = vmatprep.subr.bf16.mxu0 0
    %1254 = vmatpush1.bf16.msra.mxu0 0
    %1255 = vmatprep.subr.bf16.mxu0 0
    %1256 = vmatpush1.bf16.msra.mxu0 0
    %1257 = vmatprep.subr.bf16.mxu0 0
    %1258 = vmatpush1.bf16.msra.mxu0 0
    %1259 = vmatprep.subr.bf16.mxu0 0
    %1260 = vmatpush1.bf16.msra.mxu0 0
    %1261 = vmatprep.mubr.bf16.mxu0 0
    %1262 = vmatmul.mubr.bf16.gmra.mrb[0].mxu0 %v1224
    %v1263 = vpop.f32.mrb[0].mxu0
    %v1264 = vadd.f32 %v1199, %v1263
    %v1265 = vpop.f32.mrb[0].mxu0
    %v1266 = vpop.f32.mrb[0].mxu0
    %v1267 = vadd.f32 %v1202, %v1266
    %v1268 = vpop.f32.mrb[0].mxu0
    %1269 = vmatprep.mubr.bf16.mxu0 0
    %1270 = vmatmul.mubr.bf16.gmra.mrb[0].mxu0 %v1227
    %v1271 = vpop.f32.mrb[0].mxu0
    %v1272 = vadd.f32 %v1207, %v1271
    %v1273 = vpop.f32.mrb[0].mxu0
    %v1274 = vpop.f32.mrb[0].mxu0
    %v1275 = vadd.f32 %v1210, %v1274
    %v1276 = vpop.f32.mrb[0].mxu0
    %1277 = vdwg.mxu0
    %1279 = vset.pattern.permute.xlu0 0
    %1280 = vperm.xlu0 %1279, %v1125
    %v1281 = vpop.permute.xlu0 %1280
    %1284 = vset.pattern.permute.xlu0 0
    %1285 = vperm.xlu0 %1284, %v1126
    %v1286 = vpop.permute.xlu0 %1285
    %1289 = vset.pattern.permute.xlu0 0
    %1290 = vperm.xlu0 %1289, %v1127
    %v1291 = vpop.permute.xlu0 %1290
    %1294 = vset.pattern.permute.xlu0 0
    %1295 = vperm.xlu0 %1294, %v1128
    %v1296 = vpop.permute.xlu0 %1295
    %v1298 = vadd.f32 %v1264, %v1281
    %v1299 = vadd.f32 %v1267, %v1286
    %v1300 = vadd.f32 %v1272, %v1291
    %v1301 = vadd.f32 %v1275, %v1296
    %v1302 = vmax.f32 %v1298, 0.0
    %v1303 = vmax.f32 %v1299, 0.0
    %v1304 = vmax.f32 %v1300, 0.0
    %v1305 = vmax.f32 %v1301, 0.0
    %s1306 = scalar_lea.vmem %s5, 64
    %v1307 = vld [vmem:[%s1306] sm:$0xf]
    %v1308 = vld [vmem:[%s1306 + $0x4] sm:$0xf]
    %v1309 = vld [vmem:[%s1306 + $0x8] sm:$0xf]
    %v1310 = vld [vmem:[%s1306 + $0xc] sm:$0xf]
    %s1311 = scalar_lea.vmem %s5, 80
    %v1312 = vld [vmem:[%s1311] sm:$0xf]
    %v1313 = vld [vmem:[%s1311 + $0x4] sm:$0xf]
    %v1314 = vld [vmem:[%s1311 + $0x8] sm:$0xf]
    %v1315 = vld [vmem:[%s1311 + $0xc] sm:$0xf]
    %s1316 = scalar_lea.vmem %s6, 64
    %v1317 = vld [vmem:[%s1316] sm:$0xff]
    %v1318 = vld [vmem:[%s1316 + $0x8] sm:$0xff]
    %v1319 = vld [vmem:[%s1316 + $0x10] sm:$0xff]
    %v1320 = vld [vmem:[%s1316 + $0x18] sm:$0xff]
    %1321 = vrot.lane.b32.xlu0 %v1302, 4
    %v1322 = vpop.permute.xlu0 %1321
    %1323 = vrot.lane.b32.xlu0 %v1303, 4
    %v1324 = vpop.permute.xlu0 %1323
    %1325 = vrot.lane.b32.xlu0 %v1304, 4
    %v1326 = vpop.permute.xlu0 %1325
    %1327 = vrot.lane.b32.xlu0 %v1305, 4
    %v1328 = vpop.permute.xlu0 %1327
    %v1329 = vsel %vm1139, %v1322, 0.0
    %v1330 = vsel %vm1139, %v1324, 0.0
    %v1331 = vsel %vm1139, %v1326, 0.0
    %v1332 = vsel %vm1139, %v1328, 0.0
    %v1333 = vpack.c.bf16 %v1330, %v1329
    %v1334 = vpack.c.bf16 %v1332, %v1331
    %v1335 = vpack.c.bf16 %v1303, %v1302
    %v1336 = vpack.c.bf16 %v1305, %v1304
    %v1341 = vunpack.c.l.b16 %v1312
    %v1342 = vunpack.c.l.b16 %v1313
    %v1343 = vunpack.c.l.b16 %v1314
    %v1344 = vunpack.c.l.b16 %v1315
    %v1345 = vpack.c.b16 %v1342, %v1341
    %v1346 = vpack.c.b16 %v1344, %v1343
    %v1348 = vsel %vm189, %v1345, 0
    %v1351 = vsel %vm189, %v1346, 0
    %1353 = vmatprep.subr.bf16.mxu0 0
    %1354 = vmatpush1.bf16.msra.mxu0 %v1335
    %1355 = vmatprep.subr.bf16.mxu0 0
    %1356 = vmatpush1.bf16.msra.mxu0 %v1336
    %1357 = vmatprep.subr.bf16.mxu0 0
    %1358 = vmatpush1.bf16.msra.mxu0 0
    %1359 = vmatprep.subr.bf16.mxu0 0
    %1360 = vmatpush1.bf16.msra.mxu0 0
    %1361 = vmatprep.subr.bf16.mxu0 0
    %1362 = vmatpush1.bf16.msra.mxu0 0
    %1363 = vmatprep.subr.bf16.mxu0 0
    %1364 = vmatpush1.bf16.msra.mxu0 0
    %1365 = vmatprep.subr.bf16.mxu0 0
    %1366 = vmatpush1.bf16.msra.mxu0 0
    %1367 = vmatprep.subr.bf16.mxu0 0
    %1368 = vmatpush1.bf16.msra.mxu0 0
    %1369 = vmatprep.subr.bf16.mxu0 0
    %1370 = vmatpush1.bf16.msra.mxu0 0
    %1371 = vmatprep.subr.bf16.mxu0 0
    %1372 = vmatpush1.bf16.msra.mxu0 0
    %1373 = vmatprep.subr.bf16.mxu0 0
    %1374 = vmatpush1.bf16.msra.mxu0 0
    %1375 = vmatprep.subr.bf16.mxu0 0
    %1376 = vmatpush1.bf16.msra.mxu0 0
    %1377 = vmatprep.subr.bf16.mxu0 0
    %1378 = vmatpush1.bf16.msra.mxu0 0
    %1379 = vmatprep.subr.bf16.mxu0 0
    %1380 = vmatpush1.bf16.msra.mxu0 0
    %1381 = vmatprep.subr.bf16.mxu0 0
    %1382 = vmatpush1.bf16.msra.mxu0 0
    %1383 = vmatprep.subr.bf16.mxu0 0
    %1384 = vmatpush1.bf16.msra.mxu0 0
    %1385 = vmatprep.mubr.bf16.mxu0 0
    %1386 = vmatmul.mubr.bf16.gmra.mrb[0].mxu0 %v1348
    %v1387 = vpop.f32.mrb[0].mxu0
    %v1388 = vadd.f32 0.0, %v1387
    %v1389 = vpop.f32.mrb[0].mxu0
    %v1390 = vpop.f32.mrb[0].mxu0
    %v1391 = vadd.f32 0.0, %v1390
    %v1392 = vpop.f32.mrb[0].mxu0
    %1393 = vmatprep.mubr.bf16.mxu0 0
    %1394 = vmatmul.mubr.bf16.gmra.mrb[0].mxu0 %v1351
    %v1395 = vpop.f32.mrb[0].mxu0
    %v1396 = vadd.f32 0.0, %v1395
    %v1397 = vpop.f32.mrb[0].mxu0
    %v1398 = vpop.f32.mrb[0].mxu0
    %v1399 = vadd.f32 0.0, %v1398
    %v1400 = vpop.f32.mrb[0].mxu0
    %1401 = vdwg.mxu0
    %v1406 = vunpack.c.l.b16 %v1307
    %v1407 = vunpack.c.l.b16 %v1308
    %v1408 = vunpack.c.l.b16 %v1309
    %v1409 = vunpack.c.l.b16 %v1310
    %v1410 = vpack.c.b16 %v1407, %v1406
    %v1411 = vpack.c.b16 %v1409, %v1408
    %v1413 = vsel %vm189, %v1410, 0
    %v1416 = vsel %vm189, %v1411, 0
    %1418 = vmatprep.subr.bf16.mxu0 0
    %1419 = vmatpush1.bf16.msra.mxu0 %v1333
    %1420 = vmatprep.subr.bf16.mxu0 0
    %1421 = vmatpush1.bf16.msra.mxu0 %v1334
    %1422 = vmatprep.subr.bf16.mxu0 0
    %1423 = vmatpush1.bf16.msra.mxu0 0
    %1424 = vmatprep.subr.bf16.mxu0 0
    %1425 = vmatpush1.bf16.msra.mxu0 0
    %1426 = vmatprep.subr.bf16.mxu0 0
    %1427 = vmatpush1.bf16.msra.mxu0 0
    %1428 = vmatprep.subr.bf16.mxu0 0
    %1429 = vmatpush1.bf16.msra.mxu0 0
    %1430 = vmatprep.subr.bf16.mxu0 0
    %1431 = vmatpush1.bf16.msra.mxu0 0
    %1432 = vmatprep.subr.bf16.mxu0 0
    %1433 = vmatpush1.bf16.msra.mxu0 0
    %1434 = vmatprep.subr.bf16.mxu0 0
    %1435 = vmatpush1.bf16.msra.mxu0 0
    %1436 = vmatprep.subr.bf16.mxu0 0
    %1437 = vmatpush1.bf16.msra.mxu0 0
    %1438 = vmatprep.subr.bf16.mxu0 0
    %1439 = vmatpush1.bf16.msra.mxu0 0
    %1440 = vmatprep.subr.bf16.mxu0 0
    %1441 = vmatpush1.bf16.msra.mxu0 0
    %1442 = vmatprep.subr.bf16.mxu0 0
    %1443 = vmatpush1.bf16.msra.mxu0 0
    %1444 = vmatprep.subr.bf16.mxu0 0
    %1445 = vmatpush1.bf16.msra.mxu0 0
    %1446 = vmatprep.subr.bf16.mxu0 0
    %1447 = vmatpush1.bf16.msra.mxu0 0
    %1448 = vmatprep.subr.bf16.mxu0 0
    %1449 = vmatpush1.bf16.msra.mxu0 0
    %1450 = vmatprep.mubr.bf16.mxu0 0
    %1451 = vmatmul.mubr.bf16.gmra.mrb[0].mxu0 %v1413
    %v1452 = vpop.f32.mrb[0].mxu0
    %v1453 = vadd.f32 %v1388, %v1452
    %v1454 = vpop.f32.mrb[0].mxu0
    %v1455 = vpop.f32.mrb[0].mxu0
    %v1456 = vadd.f32 %v1391, %v1455
    %v1457 = vpop.f32.mrb[0].mxu0
    %1458 = vmatprep.mubr.bf16.mxu0 0
    %1459 = vmatmul.mubr.bf16.gmra.mrb[0].mxu0 %v1416
    %v1460 = vpop.f32.mrb[0].mxu0
    %v1461 = vadd.f32 %v1396, %v1460
    %v1462 = vpop.f32.mrb[0].mxu0
    %v1463 = vpop.f32.mrb[0].mxu0
    %v1464 = vadd.f32 %v1399, %v1463
    %v1465 = vpop.f32.mrb[0].mxu0
    %1466 = vdwg.mxu0
    %1468 = vset.pattern.permute.xlu0 0
    %1469 = vperm.xlu0 %1468, %v1317
    %v1470 = vpop.permute.xlu0 %1469
    %1473 = vset.pattern.permute.xlu0 0
    %1474 = vperm.xlu0 %1473, %v1318
    %v1475 = vpop.permute.xlu0 %1474
    %1478 = vset.pattern.permute.xlu0 0
    %1479 = vperm.xlu0 %1478, %v1319
    %v1480 = vpop.permute.xlu0 %1479
    %1483 = vset.pattern.permute.xlu0 0
    %1484 = vperm.xlu0 %1483, %v1320
    %v1485 = vpop.permute.xlu0 %1484
    %v1487 = vadd.f32 %v1453, %v1470
    %v1488 = vadd.f32 %v1456, %v1475
    %v1489 = vadd.f32 %v1461, %v1480
    %v1490 = vadd.f32 %v1464, %v1485
    %v1491 = vmax.f32 %v1487, 0.0
    %v1492 = vmax.f32 %v1488, 0.0
    %v1493 = vmax.f32 %v1489, 0.0
    %v1494 = vmax.f32 %v1490, 0.0
    %s1495 = scalar_lea.vmem %s7, 32
    %v1496 = vld [vmem:[%s1495] sm:$0xf]
    %v1497 = vld [vmem:[%s1495 + $0x4] sm:$0xf]
    %v1498 = vld [vmem:[%s1495 + $0x8] sm:$0xf]
    %v1499 = vld [vmem:[%s1495 + $0xc] sm:$0xf]
    %v1500 = vpack.c.bf16 %v1492, %v1491
    %v1501 = vpack.c.bf16 %v1494, %v1493
    %s1502 = scalar_lea.vmem %s8, 64
    %v1503 = vld [vmem:[%s1502] sm:$0xff]
    %v1504 = vld [vmem:[%s1502 + $0x8] sm:$0xff]
    %v1505 = vld [vmem:[%s1502 + $0x10] sm:$0xff]
    %v1506 = vld [vmem:[%s1502 + $0x18] sm:$0xff]
    %1508 = vset.pattern.permute.xlu0 0
    %1509 = vperm.xlu0 %1508, %v1503
    %v1510 = vpop.permute.xlu0 %1509
    %1513 = vset.pattern.permute.xlu0 0
    %1514 = vperm.xlu0 %1513, %v1504
    %v1515 = vpop.permute.xlu0 %1514
    %1518 = vset.pattern.permute.xlu0 0
    %1519 = vperm.xlu0 %1518, %v1505
    %v1520 = vpop.permute.xlu0 %1519
    %1523 = vset.pattern.permute.xlu0 0
    %1524 = vperm.xlu0 %1523, %v1506
    %v1525 = vpop.permute.xlu0 %1524
    %v1531 = vunpack.c.l.b16 %v1496
    %v1532 = vunpack.c.l.b16 %v1497
    %v1533 = vunpack.c.l.b16 %v1498
    %v1534 = vunpack.c.l.b16 %v1499
    %v1535 = vpack.c.b16 %v1532, %v1531
    %v1536 = vpack.c.b16 %v1534, %v1533
    %v1538 = vsel %vm189, %v1535, 0
    %v1541 = vsel %vm189, %v1536, 0
    %1543 = vmatprep.subr.bf16.mxu0 0
    %1544 = vmatpush1.bf16.msra.mxu0 %v1500
    %1545 = vmatprep.subr.bf16.mxu0 0
    %1546 = vmatpush1.bf16.msra.mxu0 %v1501
    %1547 = vmatprep.subr.bf16.mxu0 0
    %1548 = vmatpush1.bf16.msra.mxu0 0
    %1549 = vmatprep.subr.bf16.mxu0 0
    %1550 = vmatpush1.bf16.msra.mxu0 0
    %1551 = vmatprep.subr.bf16.mxu0 0
    %1552 = vmatpush1.bf16.msra.mxu0 0
    %1553 = vmatprep.subr.bf16.mxu0 0
    %1554 = vmatpush1.bf16.msra.mxu0 0
    %1555 = vmatprep.subr.bf16.mxu0 0
    %1556 = vmatpush1.bf16.msra.mxu0 0
    %1557 = vmatprep.subr.bf16.mxu0 0
    %1558 = vmatpush1.bf16.msra.mxu0 0
    %1559 = vmatprep.subr.bf16.mxu0 0
    %1560 = vmatpush1.bf16.msra.mxu0 0
    %1561 = vmatprep.subr.bf16.mxu0 0
    %1562 = vmatpush1.bf16.msra.mxu0 0
    %1563 = vmatprep.subr.bf16.mxu0 0
    %1564 = vmatpush1.bf16.msra.mxu0 0
    %1565 = vmatprep.subr.bf16.mxu0 0
    %1566 = vmatpush1.bf16.msra.mxu0 0
    %1567 = vmatprep.subr.bf16.mxu0 0
    %1568 = vmatpush1.bf16.msra.mxu0 0
    %1569 = vmatprep.subr.bf16.mxu0 0
    %1570 = vmatpush1.bf16.msra.mxu0 0
    %1571 = vmatprep.subr.bf16.mxu0 0
    %1572 = vmatpush1.bf16.msra.mxu0 0
    %1573 = vmatprep.subr.bf16.mxu0 0
    %1574 = vmatpush1.bf16.msra.mxu0 0
    %1575 = vmatprep.mubr.bf16.mxu0 0
    %1576 = vmatmul.mubr.bf16.gmra.mrb[0].mxu0 %v1538
    %v1577 = vpop.f32.mrb[0].mxu0
    %v1578 = vadd.f32 %v1510, %v1577
    %v1579 = vpop.f32.mrb[0].mxu0
    %v1580 = vpop.f32.mrb[0].mxu0
    %v1581 = vadd.f32 %v1515, %v1580
    %v1582 = vpop.f32.mrb[0].mxu0
    %1583 = vmatprep.mubr.bf16.mxu0 0
    %1584 = vmatmul.mubr.bf16.gmra.mrb[0].mxu0 %v1541
    %v1585 = vpop.f32.mrb[0].mxu0
    %v1586 = vadd.f32 %v1520, %v1585
    %v1587 = vpop.f32.mrb[0].mxu0
    %v1588 = vpop.f32.mrb[0].mxu0
    %v1589 = vadd.f32 %v1525, %v1588
    %v1590 = vpop.f32.mrb[0].mxu0
    %1591 = vdwg.mxu0
    %v1592 = vadd.f32 %v1578, %v1110
    %v1593 = vadd.f32 %v1581, %v1111
    %v1594 = vadd.f32 %v1586, %v1112
    %v1595 = vadd.f32 %v1589, %v1113
    %v1596 = vmax.f32 %v1592, 0.0
    %v1597 = vmax.f32 %v1593, 0.0
    %v1598 = vmax.f32 %v1594, 0.0
    %v1599 = vmax.f32 %v1595, 0.0
    %s1600 = scalar_lea.vmem %s3, 96
    %v1601 = vld [vmem:[%s1600] sm:$0xf]
    %v1602 = vld [vmem:[%s1600 + $0x4] sm:$0xf]
    %v1603 = vld [vmem:[%s1600 + $0x8] sm:$0xf]
    %v1604 = vld [vmem:[%s1600 + $0xc] sm:$0xf]
    %s1605 = scalar_lea.vmem %s3, 112
    %v1606 = vld [vmem:[%s1605] sm:$0xf]
    %v1607 = vld [vmem:[%s1605 + $0x4] sm:$0xf]
    %v1608 = vld [vmem:[%s1605 + $0x8] sm:$0xf]
    %v1609 = vld [vmem:[%s1605 + $0xc] sm:$0xf]
    %s1610 = scalar_lea.vmem %s4, 96
    %v1611 = vld [vmem:[%s1610] sm:$0xff]
    %v1612 = vld [vmem:[%s1610 + $0x8] sm:$0xff]
    %v1613 = vld [vmem:[%s1610 + $0x10] sm:$0xff]
    %v1614 = vld [vmem:[%s1610 + $0x18] sm:$0xff]
    %vm1615 = vcmp.ge.s32.totalorder %v146, 8
    %1616 = vrot.lane.b32.xlu0 %v1596, 8
    %v1617 = vpop.permute.xlu0 %1616
    %1618 = vrot.lane.b32.xlu0 %v1597, 8
    %v1619 = vpop.permute.xlu0 %1618
    %1620 = vrot.lane.b32.xlu0 %v1598, 8
    %v1621 = vpop.permute.xlu0 %1620
    %1622 = vrot.lane.b32.xlu0 %v1599, 8
    %v1623 = vpop.permute.xlu0 %1622
    %v1624 = vsel %vm1615, 1, 0
    %vm1625 = vcmp.eq.s32.totalorder %v1624, 1
    %v1626 = vsel %vm1625, %v1617, 0.0
    %v1627 = vsel %vm1625, %v1619, 0.0
    %v1628 = vsel %vm1625, %v1621, 0.0
    %v1629 = vsel %vm1625, %v1623, 0.0
    %v1630 = vpack.c.bf16 %v1627, %v1626
    %v1631 = vpack.c.bf16 %v1629, %v1628
    %v1632 = vpack.c.bf16 %v1597, %v1596
    %v1633 = vpack.c.bf16 %v1599, %v1598
    %v1638 = vunpack.c.l.b16 %v1606
    %v1639 = vunpack.c.l.b16 %v1607
    %v1640 = vunpack.c.l.b16 %v1608
    %v1641 = vunpack.c.l.b16 %v1609
    %v1642 = vpack.c.b16 %v1639, %v1638
    %v1643 = vpack.c.b16 %v1641, %v1640
    %v1645 = vsel %vm189, %v1642, 0
    %v1648 = vsel %vm189, %v1643, 0
    %1650 = vmatprep.subr.bf16.mxu0 0
    %1651 = vmatpush1.bf16.msra.mxu0 %v1632
    %1652 = vmatprep.subr.bf16.mxu0 0
    %1653 = vmatpush1.bf16.msra.mxu0 %v1633
    %1654 = vmatprep.subr.bf16.mxu0 0
    %1655 = vmatpush1.bf16.msra.mxu0 0
    %1656 = vmatprep.subr.bf16.mxu0 0
    %1657 = vmatpush1.bf16.msra.mxu0 0
    %1658 = vmatprep.subr.bf16.mxu0 0
    %1659 = vmatpush1.bf16.msra.mxu0 0
    %1660 = vmatprep.subr.bf16.mxu0 0
    %1661 = vmatpush1.bf16.msra.mxu0 0
    %1662 = vmatprep.subr.bf16.mxu0 0
    %1663 = vmatpush1.bf16.msra.mxu0 0
    %1664 = vmatprep.subr.bf16.mxu0 0
    %1665 = vmatpush1.bf16.msra.mxu0 0
    %1666 = vmatprep.subr.bf16.mxu0 0
    %1667 = vmatpush1.bf16.msra.mxu0 0
    %1668 = vmatprep.subr.bf16.mxu0 0
    %1669 = vmatpush1.bf16.msra.mxu0 0
    %1670 = vmatprep.subr.bf16.mxu0 0
    %1671 = vmatpush1.bf16.msra.mxu0 0
    %1672 = vmatprep.subr.bf16.mxu0 0
    %1673 = vmatpush1.bf16.msra.mxu0 0
    %1674 = vmatprep.subr.bf16.mxu0 0
    %1675 = vmatpush1.bf16.msra.mxu0 0
    %1676 = vmatprep.subr.bf16.mxu0 0
    %1677 = vmatpush1.bf16.msra.mxu0 0
    %1678 = vmatprep.subr.bf16.mxu0 0
    %1679 = vmatpush1.bf16.msra.mxu0 0
    %1680 = vmatprep.subr.bf16.mxu0 0
    %1681 = vmatpush1.bf16.msra.mxu0 0
    %1682 = vmatprep.mubr.bf16.mxu0 0
    %1683 = vmatmul.mubr.bf16.gmra.mrb[0].mxu0 %v1645
    %v1684 = vpop.f32.mrb[0].mxu0
    %v1685 = vadd.f32 0.0, %v1684
    %v1686 = vpop.f32.mrb[0].mxu0
    %v1687 = vpop.f32.mrb[0].mxu0
    %v1688 = vadd.f32 0.0, %v1687
    %v1689 = vpop.f32.mrb[0].mxu0
    %1690 = vmatprep.mubr.bf16.mxu0 0
    %1691 = vmatmul.mubr.bf16.gmra.mrb[0].mxu0 %v1648
    %v1692 = vpop.f32.mrb[0].mxu0
    %v1693 = vadd.f32 0.0, %v1692
    %v1694 = vpop.f32.mrb[0].mxu0
    %v1695 = vpop.f32.mrb[0].mxu0
    %v1696 = vadd.f32 0.0, %v1695
    %v1697 = vpop.f32.mrb[0].mxu0
    %1698 = vdwg.mxu0
    %v1703 = vunpack.c.l.b16 %v1601
    %v1704 = vunpack.c.l.b16 %v1602
    %v1705 = vunpack.c.l.b16 %v1603
    %v1706 = vunpack.c.l.b16 %v1604
    %v1707 = vpack.c.b16 %v1704, %v1703
    %v1708 = vpack.c.b16 %v1706, %v1705
    %v1710 = vsel %vm189, %v1707, 0
    %v1713 = vsel %vm189, %v1708, 0
    %1715 = vmatprep.subr.bf16.mxu0 0
    %1716 = vmatpush1.bf16.msra.mxu0 %v1630
    %1717 = vmatprep.subr.bf16.mxu0 0
    %1718 = vmatpush1.bf16.msra.mxu0 %v1631
    %1719 = vmatprep.subr.bf16.mxu0 0
    %1720 = vmatpush1.bf16.msra.mxu0 0
    %1721 = vmatprep.subr.bf16.mxu0 0
    %1722 = vmatpush1.bf16.msra.mxu0 0
    %1723 = vmatprep.subr.bf16.mxu0 0
    %1724 = vmatpush1.bf16.msra.mxu0 0
    %1725 = vmatprep.subr.bf16.mxu0 0
    %1726 = vmatpush1.bf16.msra.mxu0 0
    %1727 = vmatprep.subr.bf16.mxu0 0
    %1728 = vmatpush1.bf16.msra.mxu0 0
    %1729 = vmatprep.subr.bf16.mxu0 0
    %1730 = vmatpush1.bf16.msra.mxu0 0
    %1731 = vmatprep.subr.bf16.mxu0 0
    %1732 = vmatpush1.bf16.msra.mxu0 0
    %1733 = vmatprep.subr.bf16.mxu0 0
    %1734 = vmatpush1.bf16.msra.mxu0 0
    %1735 = vmatprep.subr.bf16.mxu0 0
    %1736 = vmatpush1.bf16.msra.mxu0 0
    %1737 = vmatprep.subr.bf16.mxu0 0
    %1738 = vmatpush1.bf16.msra.mxu0 0
    %1739 = vmatprep.subr.bf16.mxu0 0
    %1740 = vmatpush1.bf16.msra.mxu0 0
    %1741 = vmatprep.subr.bf16.mxu0 0
    %1742 = vmatpush1.bf16.msra.mxu0 0
    %1743 = vmatprep.subr.bf16.mxu0 0
    %1744 = vmatpush1.bf16.msra.mxu0 0
    %1745 = vmatprep.subr.bf16.mxu0 0
    %1746 = vmatpush1.bf16.msra.mxu0 0
    %1747 = vmatprep.mubr.bf16.mxu0 0
    %1748 = vmatmul.mubr.bf16.gmra.mrb[0].mxu0 %v1710
    %v1749 = vpop.f32.mrb[0].mxu0
    %v1750 = vadd.f32 %v1685, %v1749
    %v1751 = vpop.f32.mrb[0].mxu0
    %v1752 = vpop.f32.mrb[0].mxu0
    %v1753 = vadd.f32 %v1688, %v1752
    %v1754 = vpop.f32.mrb[0].mxu0
    %1755 = vmatprep.mubr.bf16.mxu0 0
    %1756 = vmatmul.mubr.bf16.gmra.mrb[0].mxu0 %v1713
    %v1757 = vpop.f32.mrb[0].mxu0
    %v1758 = vadd.f32 %v1693, %v1757
    %v1759 = vpop.f32.mrb[0].mxu0
    %v1760 = vpop.f32.mrb[0].mxu0
    %v1761 = vadd.f32 %v1696, %v1760
    %v1762 = vpop.f32.mrb[0].mxu0
    %1763 = vdwg.mxu0
    %1765 = vset.pattern.permute.xlu0 0
    %1766 = vperm.xlu0 %1765, %v1611
    %v1767 = vpop.permute.xlu0 %1766
    %1770 = vset.pattern.permute.xlu0 0
    %1771 = vperm.xlu0 %1770, %v1612
    %v1772 = vpop.permute.xlu0 %1771
    %1775 = vset.pattern.permute.xlu0 0
    %1776 = vperm.xlu0 %1775, %v1613
    %v1777 = vpop.permute.xlu0 %1776
    %1780 = vset.pattern.permute.xlu0 0
    %1781 = vperm.xlu0 %1780, %v1614
    %v1782 = vpop.permute.xlu0 %1781
    %v1784 = vadd.f32 %v1750, %v1767
    %v1785 = vadd.f32 %v1753, %v1772
    %v1786 = vadd.f32 %v1758, %v1777
    %v1787 = vadd.f32 %v1761, %v1782
    %v1788 = vmax.f32 %v1784, 0.0
    %v1789 = vmax.f32 %v1785, 0.0
    %v1790 = vmax.f32 %v1786, 0.0
    %v1791 = vmax.f32 %v1787, 0.0
    %s1792 = scalar_lea.vmem %s5, 96
    %v1793 = vld [vmem:[%s1792] sm:$0xf]
    %v1794 = vld [vmem:[%s1792 + $0x4] sm:$0xf]
    %v1795 = vld [vmem:[%s1792 + $0x8] sm:$0xf]
    %v1796 = vld [vmem:[%s1792 + $0xc] sm:$0xf]
    %s1797 = scalar_lea.vmem %s5, 112
    %v1798 = vld [vmem:[%s1797] sm:$0xf]
    %v1799 = vld [vmem:[%s1797 + $0x4] sm:$0xf]
    %v1800 = vld [vmem:[%s1797 + $0x8] sm:$0xf]
    %v1801 = vld [vmem:[%s1797 + $0xc] sm:$0xf]
    %s1802 = scalar_lea.vmem %s6, 96
    %v1803 = vld [vmem:[%s1802] sm:$0xff]
    %v1804 = vld [vmem:[%s1802 + $0x8] sm:$0xff]
    %v1805 = vld [vmem:[%s1802 + $0x10] sm:$0xff]
    %v1806 = vld [vmem:[%s1802 + $0x18] sm:$0xff]
    %1807 = vrot.lane.b32.xlu0 %v1788, 8
    %v1808 = vpop.permute.xlu0 %1807
    %1809 = vrot.lane.b32.xlu0 %v1789, 8
    %v1810 = vpop.permute.xlu0 %1809
    %1811 = vrot.lane.b32.xlu0 %v1790, 8
    %v1812 = vpop.permute.xlu0 %1811
    %1813 = vrot.lane.b32.xlu0 %v1791, 8
    %v1814 = vpop.permute.xlu0 %1813
    %v1815 = vsel %vm1625, %v1808, 0.0
    %v1816 = vsel %vm1625, %v1810, 0.0
    %v1817 = vsel %vm1625, %v1812, 0.0
    %v1818 = vsel %vm1625, %v1814, 0.0
    %v1819 = vpack.c.bf16 %v1816, %v1815
    %v1820 = vpack.c.bf16 %v1818, %v1817
    %v1821 = vpack.c.bf16 %v1789, %v1788
    %v1822 = vpack.c.bf16 %v1791, %v1790
    %v1827 = vunpack.c.l.b16 %v1798
    %v1828 = vunpack.c.l.b16 %v1799
    %v1829 = vunpack.c.l.b16 %v1800
    %v1830 = vunpack.c.l.b16 %v1801
    %v1831 = vpack.c.b16 %v1828, %v1827
    %v1832 = vpack.c.b16 %v1830, %v1829
    %v1834 = vsel %vm189, %v1831, 0
    %v1837 = vsel %vm189, %v1832, 0
    %1839 = vmatprep.subr.bf16.mxu0 0
    %1840 = vmatpush1.bf16.msra.mxu0 %v1821
    %1841 = vmatprep.subr.bf16.mxu0 0
    %1842 = vmatpush1.bf16.msra.mxu0 %v1822
    %1843 = vmatprep.subr.bf16.mxu0 0
    %1844 = vmatpush1.bf16.msra.mxu0 0
    %1845 = vmatprep.subr.bf16.mxu0 0
    %1846 = vmatpush1.bf16.msra.mxu0 0
    %1847 = vmatprep.subr.bf16.mxu0 0
    %1848 = vmatpush1.bf16.msra.mxu0 0
    %1849 = vmatprep.subr.bf16.mxu0 0
    %1850 = vmatpush1.bf16.msra.mxu0 0
    %1851 = vmatprep.subr.bf16.mxu0 0
    %1852 = vmatpush1.bf16.msra.mxu0 0
    %1853 = vmatprep.subr.bf16.mxu0 0
    %1854 = vmatpush1.bf16.msra.mxu0 0
    %1855 = vmatprep.subr.bf16.mxu0 0
    %1856 = vmatpush1.bf16.msra.mxu0 0
    %1857 = vmatprep.subr.bf16.mxu0 0
    %1858 = vmatpush1.bf16.msra.mxu0 0
    %1859 = vmatprep.subr.bf16.mxu0 0
    %1860 = vmatpush1.bf16.msra.mxu0 0
    %1861 = vmatprep.subr.bf16.mxu0 0
    %1862 = vmatpush1.bf16.msra.mxu0 0
    %1863 = vmatprep.subr.bf16.mxu0 0
    %1864 = vmatpush1.bf16.msra.mxu0 0
    %1865 = vmatprep.subr.bf16.mxu0 0
    %1866 = vmatpush1.bf16.msra.mxu0 0
    %1867 = vmatprep.subr.bf16.mxu0 0
    %1868 = vmatpush1.bf16.msra.mxu0 0
    %1869 = vmatprep.subr.bf16.mxu0 0
    %1870 = vmatpush1.bf16.msra.mxu0 0
    %1871 = vmatprep.mubr.bf16.mxu0 0
    %1872 = vmatmul.mubr.bf16.gmra.mrb[0].mxu0 %v1834
    %v1873 = vpop.f32.mrb[0].mxu0
    %v1874 = vadd.f32 0.0, %v1873
    %v1875 = vpop.f32.mrb[0].mxu0
    %v1876 = vpop.f32.mrb[0].mxu0
    %v1877 = vadd.f32 0.0, %v1876
    %v1878 = vpop.f32.mrb[0].mxu0
    %1879 = vmatprep.mubr.bf16.mxu0 0
    %1880 = vmatmul.mubr.bf16.gmra.mrb[0].mxu0 %v1837
    %v1881 = vpop.f32.mrb[0].mxu0
    %v1882 = vadd.f32 0.0, %v1881
    %v1883 = vpop.f32.mrb[0].mxu0
    %v1884 = vpop.f32.mrb[0].mxu0
    %v1885 = vadd.f32 0.0, %v1884
    %v1886 = vpop.f32.mrb[0].mxu0
    %1887 = vdwg.mxu0
    %v1892 = vunpack.c.l.b16 %v1793
    %v1893 = vunpack.c.l.b16 %v1794
    %v1894 = vunpack.c.l.b16 %v1795
    %v1895 = vunpack.c.l.b16 %v1796
    %v1896 = vpack.c.b16 %v1893, %v1892
    %v1897 = vpack.c.b16 %v1895, %v1894
    %v1899 = vsel %vm189, %v1896, 0
    %v1902 = vsel %vm189, %v1897, 0
    %1904 = vmatprep.subr.bf16.mxu0 0
    %1905 = vmatpush1.bf16.msra.mxu0 %v1819
    %1906 = vmatprep.subr.bf16.mxu0 0
    %1907 = vmatpush1.bf16.msra.mxu0 %v1820
    %1908 = vmatprep.subr.bf16.mxu0 0
    %1909 = vmatpush1.bf16.msra.mxu0 0
    %1910 = vmatprep.subr.bf16.mxu0 0
    %1911 = vmatpush1.bf16.msra.mxu0 0
    %1912 = vmatprep.subr.bf16.mxu0 0
    %1913 = vmatpush1.bf16.msra.mxu0 0
    %1914 = vmatprep.subr.bf16.mxu0 0
    %1915 = vmatpush1.bf16.msra.mxu0 0
    %1916 = vmatprep.subr.bf16.mxu0 0
    %1917 = vmatpush1.bf16.msra.mxu0 0
    %1918 = vmatprep.subr.bf16.mxu0 0
    %1919 = vmatpush1.bf16.msra.mxu0 0
    %1920 = vmatprep.subr.bf16.mxu0 0
    %1921 = vmatpush1.bf16.msra.mxu0 0
    %1922 = vmatprep.subr.bf16.mxu0 0
    %1923 = vmatpush1.bf16.msra.mxu0 0
    %1924 = vmatprep.subr.bf16.mxu0 0
    %1925 = vmatpush1.bf16.msra.mxu0 0
    %1926 = vmatprep.subr.bf16.mxu0 0
    %1927 = vmatpush1.bf16.msra.mxu0 0
    %1928 = vmatprep.subr.bf16.mxu0 0
    %1929 = vmatpush1.bf16.msra.mxu0 0
    %1930 = vmatprep.subr.bf16.mxu0 0
    %1931 = vmatpush1.bf16.msra.mxu0 0
    %1932 = vmatprep.subr.bf16.mxu0 0
    %1933 = vmatpush1.bf16.msra.mxu0 0
    %1934 = vmatprep.subr.bf16.mxu0 0
    %1935 = vmatpush1.bf16.msra.mxu0 0
    %1936 = vmatprep.mubr.bf16.mxu0 0
    %1937 = vmatmul.mubr.bf16.gmra.mrb[0].mxu0 %v1899
    %v1938 = vpop.f32.mrb[0].mxu0
    %v1939 = vadd.f32 %v1874, %v1938
    %v1940 = vpop.f32.mrb[0].mxu0
    %v1941 = vpop.f32.mrb[0].mxu0
    %v1942 = vadd.f32 %v1877, %v1941
    %v1943 = vpop.f32.mrb[0].mxu0
    %1944 = vmatprep.mubr.bf16.mxu0 0
    %1945 = vmatmul.mubr.bf16.gmra.mrb[0].mxu0 %v1902
    %v1946 = vpop.f32.mrb[0].mxu0
    %v1947 = vadd.f32 %v1882, %v1946
    %v1948 = vpop.f32.mrb[0].mxu0
    %v1949 = vpop.f32.mrb[0].mxu0
    %v1950 = vadd.f32 %v1885, %v1949
    %v1951 = vpop.f32.mrb[0].mxu0
    %1952 = vdwg.mxu0
    %1954 = vset.pattern.permute.xlu0 0
    %1955 = vperm.xlu0 %1954, %v1803
    %v1956 = vpop.permute.xlu0 %1955
    %1959 = vset.pattern.permute.xlu0 0
    %1960 = vperm.xlu0 %1959, %v1804
    %v1961 = vpop.permute.xlu0 %1960
    %1964 = vset.pattern.permute.xlu0 0
    %1965 = vperm.xlu0 %1964, %v1805
    %v1966 = vpop.permute.xlu0 %1965
    %1969 = vset.pattern.permute.xlu0 0
    %1970 = vperm.xlu0 %1969, %v1806
    %v1971 = vpop.permute.xlu0 %1970
    %v1973 = vadd.f32 %v1939, %v1956
    %v1974 = vadd.f32 %v1942, %v1961
    %v1975 = vadd.f32 %v1947, %v1966
    %v1976 = vadd.f32 %v1950, %v1971
    %v1977 = vmax.f32 %v1973, 0.0
    %v1978 = vmax.f32 %v1974, 0.0
    %v1979 = vmax.f32 %v1975, 0.0
    %v1980 = vmax.f32 %v1976, 0.0
    %s1981 = scalar_lea.vmem %s7, 48
    %v1982 = vld [vmem:[%s1981] sm:$0xf]
    %v1983 = vld [vmem:[%s1981 + $0x4] sm:$0xf]
    %v1984 = vld [vmem:[%s1981 + $0x8] sm:$0xf]
    %v1985 = vld [vmem:[%s1981 + $0xc] sm:$0xf]
    %v1986 = vpack.c.bf16 %v1978, %v1977
    %v1987 = vpack.c.bf16 %v1980, %v1979
    %s1988 = scalar_lea.vmem %s8, 96
    %v1989 = vld [vmem:[%s1988] sm:$0xff]
    %v1990 = vld [vmem:[%s1988 + $0x8] sm:$0xff]
    %v1991 = vld [vmem:[%s1988 + $0x10] sm:$0xff]
    %v1992 = vld [vmem:[%s1988 + $0x18] sm:$0xff]
    %1994 = vset.pattern.permute.xlu0 0
    %1995 = vperm.xlu0 %1994, %v1989
    %v1996 = vpop.permute.xlu0 %1995
    %1999 = vset.pattern.permute.xlu0 0
    %2000 = vperm.xlu0 %1999, %v1990
    %v2001 = vpop.permute.xlu0 %2000
    %2004 = vset.pattern.permute.xlu0 0
    %2005 = vperm.xlu0 %2004, %v1991
    %v2006 = vpop.permute.xlu0 %2005
    %2009 = vset.pattern.permute.xlu0 0
    %2010 = vperm.xlu0 %2009, %v1992
    %v2011 = vpop.permute.xlu0 %2010
    %v2017 = vunpack.c.l.b16 %v1982
    %v2018 = vunpack.c.l.b16 %v1983
    %v2019 = vunpack.c.l.b16 %v1984
    %v2020 = vunpack.c.l.b16 %v1985
    %v2021 = vpack.c.b16 %v2018, %v2017
    %v2022 = vpack.c.b16 %v2020, %v2019
    %v2024 = vsel %vm189, %v2021, 0
    %v2027 = vsel %vm189, %v2022, 0
    %2029 = vmatprep.subr.bf16.mxu0 0
    %2030 = vmatpush1.bf16.msra.mxu0 %v1986
    %2031 = vmatprep.subr.bf16.mxu0 0
    %2032 = vmatpush1.bf16.msra.mxu0 %v1987
    %2033 = vmatprep.subr.bf16.mxu0 0
    %2034 = vmatpush1.bf16.msra.mxu0 0
    %2035 = vmatprep.subr.bf16.mxu0 0
    %2036 = vmatpush1.bf16.msra.mxu0 0
    %2037 = vmatprep.subr.bf16.mxu0 0
    %2038 = vmatpush1.bf16.msra.mxu0 0
    %2039 = vmatprep.subr.bf16.mxu0 0
    %2040 = vmatpush1.bf16.msra.mxu0 0
    %2041 = vmatprep.subr.bf16.mxu0 0
    %2042 = vmatpush1.bf16.msra.mxu0 0
    %2043 = vmatprep.subr.bf16.mxu0 0
    %2044 = vmatpush1.bf16.msra.mxu0 0
    %2045 = vmatprep.subr.bf16.mxu0 0
    %2046 = vmatpush1.bf16.msra.mxu0 0
    %2047 = vmatprep.subr.bf16.mxu0 0
    %2048 = vmatpush1.bf16.msra.mxu0 0
    %2049 = vmatprep.subr.bf16.mxu0 0
    %2050 = vmatpush1.bf16.msra.mxu0 0
    %2051 = vmatprep.subr.bf16.mxu0 0
    %2052 = vmatpush1.bf16.msra.mxu0 0
    %2053 = vmatprep.subr.bf16.mxu0 0
    %2054 = vmatpush1.bf16.msra.mxu0 0
    %2055 = vmatprep.subr.bf16.mxu0 0
    %2056 = vmatpush1.bf16.msra.mxu0 0
    %2057 = vmatprep.subr.bf16.mxu0 0
    %2058 = vmatpush1.bf16.msra.mxu0 0
    %2059 = vmatprep.subr.bf16.mxu0 0
    %2060 = vmatpush1.bf16.msra.mxu0 0
    %2061 = vmatprep.mubr.bf16.mxu0 0
    %2062 = vmatmul.mubr.bf16.gmra.mrb[0].mxu0 %v2024
    %v2063 = vpop.f32.mrb[0].mxu0
    %v2064 = vadd.f32 %v1996, %v2063
    %v2065 = vpop.f32.mrb[0].mxu0
    %v2066 = vpop.f32.mrb[0].mxu0
    %v2067 = vadd.f32 %v2001, %v2066
    %v2068 = vpop.f32.mrb[0].mxu0
    %2069 = vmatprep.mubr.bf16.mxu0 0
    %2070 = vmatmul.mubr.bf16.gmra.mrb[0].mxu0 %v2027
    %v2071 = vpop.f32.mrb[0].mxu0
    %v2072 = vadd.f32 %v2006, %v2071
    %v2073 = vpop.f32.mrb[0].mxu0
    %v2074 = vpop.f32.mrb[0].mxu0
    %v2075 = vadd.f32 %v2011, %v2074
    %v2076 = vpop.f32.mrb[0].mxu0
    %2077 = vdwg.mxu0
    %v2078 = vadd.f32 %v2064, %v1596
    %v2079 = vadd.f32 %v2067, %v1597
    %v2080 = vadd.f32 %v2072, %v1598
    %v2081 = vadd.f32 %v2075, %v1599
    %v2082 = vmax.f32 %v2078, 0.0
    %v2083 = vmax.f32 %v2079, 0.0
    %v2084 = vmax.f32 %v2080, 0.0
    %v2085 = vmax.f32 %v2081, 0.0
    %s2086 = scalar_lea.vmem %s3, 128
    %v2087 = vld [vmem:[%s2086] sm:$0xf]
    %v2088 = vld [vmem:[%s2086 + $0x4] sm:$0xf]
    %v2089 = vld [vmem:[%s2086 + $0x8] sm:$0xf]
    %v2090 = vld [vmem:[%s2086 + $0xc] sm:$0xf]
    %s2091 = scalar_lea.vmem %s3, 144
    %v2092 = vld [vmem:[%s2091] sm:$0xf]
    %v2093 = vld [vmem:[%s2091 + $0x4] sm:$0xf]
    %v2094 = vld [vmem:[%s2091 + $0x8] sm:$0xf]
    %v2095 = vld [vmem:[%s2091 + $0xc] sm:$0xf]
    %s2096 = scalar_lea.vmem %s4, 128
    %v2097 = vld [vmem:[%s2096] sm:$0xff]
    %v2098 = vld [vmem:[%s2096 + $0x8] sm:$0xff]
    %v2099 = vld [vmem:[%s2096 + $0x10] sm:$0xff]
    %v2100 = vld [vmem:[%s2096 + $0x18] sm:$0xff]
    %vm2101 = vcmp.ge.s32.totalorder %v146, 16
    %2102 = vrot.lane.b32.xlu0 %v2082, 16
    %v2103 = vpop.permute.xlu0 %2102
    %2104 = vrot.lane.b32.xlu0 %v2083, 16
    %v2105 = vpop.permute.xlu0 %2104
    %2106 = vrot.lane.b32.xlu0 %v2084, 16
    %v2107 = vpop.permute.xlu0 %2106
    %2108 = vrot.lane.b32.xlu0 %v2085, 16
    %v2109 = vpop.permute.xlu0 %2108
    %v2110 = vsel %vm2101, 1, 0
    %vm2111 = vcmp.eq.s32.totalorder %v2110, 1
    %v2112 = vsel %vm2111, %v2103, 0.0
    %v2113 = vsel %vm2111, %v2105, 0.0
    %v2114 = vsel %vm2111, %v2107, 0.0
    %v2115 = vsel %vm2111, %v2109, 0.0
    %v2116 = vpack.c.bf16 %v2113, %v2112
    %v2117 = vpack.c.bf16 %v2115, %v2114
    %v2118 = vpack.c.bf16 %v2083, %v2082
    %v2119 = vpack.c.bf16 %v2085, %v2084
    %v2124 = vunpack.c.l.b16 %v2092
    %v2125 = vunpack.c.l.b16 %v2093
    %v2126 = vunpack.c.l.b16 %v2094
    %v2127 = vunpack.c.l.b16 %v2095
    %v2128 = vpack.c.b16 %v2125, %v2124
    %v2129 = vpack.c.b16 %v2127, %v2126
    %v2131 = vsel %vm189, %v2128, 0
    %v2134 = vsel %vm189, %v2129, 0
    %2136 = vmatprep.subr.bf16.mxu0 0
    %2137 = vmatpush1.bf16.msra.mxu0 %v2118
    %2138 = vmatprep.subr.bf16.mxu0 0
    %2139 = vmatpush1.bf16.msra.mxu0 %v2119
    %2140 = vmatprep.subr.bf16.mxu0 0
    %2141 = vmatpush1.bf16.msra.mxu0 0
    %2142 = vmatprep.subr.bf16.mxu0 0
    %2143 = vmatpush1.bf16.msra.mxu0 0
    %2144 = vmatprep.subr.bf16.mxu0 0
    %2145 = vmatpush1.bf16.msra.mxu0 0
    %2146 = vmatprep.subr.bf16.mxu0 0
    %2147 = vmatpush1.bf16.msra.mxu0 0
    %2148 = vmatprep.subr.bf16.mxu0 0
    %2149 = vmatpush1.bf16.msra.mxu0 0
    %2150 = vmatprep.subr.bf16.mxu0 0
    %2151 = vmatpush1.bf16.msra.mxu0 0
    %2152 = vmatprep.subr.bf16.mxu0 0
    %2153 = vmatpush1.bf16.msra.mxu0 0
    %2154 = vmatprep.subr.bf16.mxu0 0
    %2155 = vmatpush1.bf16.msra.mxu0 0
    %2156 = vmatprep.subr.bf16.mxu0 0
    %2157 = vmatpush1.bf16.msra.mxu0 0
    %2158 = vmatprep.subr.bf16.mxu0 0
    %2159 = vmatpush1.bf16.msra.mxu0 0
    %2160 = vmatprep.subr.bf16.mxu0 0
    %2161 = vmatpush1.bf16.msra.mxu0 0
    %2162 = vmatprep.subr.bf16.mxu0 0
    %2163 = vmatpush1.bf16.msra.mxu0 0
    %2164 = vmatprep.subr.bf16.mxu0 0
    %2165 = vmatpush1.bf16.msra.mxu0 0
    %2166 = vmatprep.subr.bf16.mxu0 0
    %2167 = vmatpush1.bf16.msra.mxu0 0
    %2168 = vmatprep.mubr.bf16.mxu0 0
    %2169 = vmatmul.mubr.bf16.gmra.mrb[0].mxu0 %v2131
    %v2170 = vpop.f32.mrb[0].mxu0
    %v2171 = vadd.f32 0.0, %v2170
    %v2172 = vpop.f32.mrb[0].mxu0
    %v2173 = vpop.f32.mrb[0].mxu0
    %v2174 = vadd.f32 0.0, %v2173
    %v2175 = vpop.f32.mrb[0].mxu0
    %2176 = vmatprep.mubr.bf16.mxu0 0
    %2177 = vmatmul.mubr.bf16.gmra.mrb[0].mxu0 %v2134
    %v2178 = vpop.f32.mrb[0].mxu0
    %v2179 = vadd.f32 0.0, %v2178
    %v2180 = vpop.f32.mrb[0].mxu0
    %v2181 = vpop.f32.mrb[0].mxu0
    %v2182 = vadd.f32 0.0, %v2181
    %v2183 = vpop.f32.mrb[0].mxu0
    %2184 = vdwg.mxu0
    %v2189 = vunpack.c.l.b16 %v2087
    %v2190 = vunpack.c.l.b16 %v2088
    %v2191 = vunpack.c.l.b16 %v2089
    %v2192 = vunpack.c.l.b16 %v2090
    %v2193 = vpack.c.b16 %v2190, %v2189
    %v2194 = vpack.c.b16 %v2192, %v2191
    %v2196 = vsel %vm189, %v2193, 0
    %v2199 = vsel %vm189, %v2194, 0
    %2201 = vmatprep.subr.bf16.mxu0 0
    %2202 = vmatpush1.bf16.msra.mxu0 %v2116
    %2203 = vmatprep.subr.bf16.mxu0 0
    %2204 = vmatpush1.bf16.msra.mxu0 %v2117
    %2205 = vmatprep.subr.bf16.mxu0 0
    %2206 = vmatpush1.bf16.msra.mxu0 0
    %2207 = vmatprep.subr.bf16.mxu0 0
    %2208 = vmatpush1.bf16.msra.mxu0 0
    %2209 = vmatprep.subr.bf16.mxu0 0
    %2210 = vmatpush1.bf16.msra.mxu0 0
    %2211 = vmatprep.subr.bf16.mxu0 0
    %2212 = vmatpush1.bf16.msra.mxu0 0
    %2213 = vmatprep.subr.bf16.mxu0 0
    %2214 = vmatpush1.bf16.msra.mxu0 0
    %2215 = vmatprep.subr.bf16.mxu0 0
    %2216 = vmatpush1.bf16.msra.mxu0 0
    %2217 = vmatprep.subr.bf16.mxu0 0
    %2218 = vmatpush1.bf16.msra.mxu0 0
    %2219 = vmatprep.subr.bf16.mxu0 0
    %2220 = vmatpush1.bf16.msra.mxu0 0
    %2221 = vmatprep.subr.bf16.mxu0 0
    %2222 = vmatpush1.bf16.msra.mxu0 0
    %2223 = vmatprep.subr.bf16.mxu0 0
    %2224 = vmatpush1.bf16.msra.mxu0 0
    %2225 = vmatprep.subr.bf16.mxu0 0
    %2226 = vmatpush1.bf16.msra.mxu0 0
    %2227 = vmatprep.subr.bf16.mxu0 0
    %2228 = vmatpush1.bf16.msra.mxu0 0
    %2229 = vmatprep.subr.bf16.mxu0 0
    %2230 = vmatpush1.bf16.msra.mxu0 0
    %2231 = vmatprep.subr.bf16.mxu0 0
    %2232 = vmatpush1.bf16.msra.mxu0 0
    %2233 = vmatprep.mubr.bf16.mxu0 0
    %2234 = vmatmul.mubr.bf16.gmra.mrb[0].mxu0 %v2196
    %v2235 = vpop.f32.mrb[0].mxu0
    %v2236 = vadd.f32 %v2171, %v2235
    %v2237 = vpop.f32.mrb[0].mxu0
    %v2238 = vpop.f32.mrb[0].mxu0
    %v2239 = vadd.f32 %v2174, %v2238
    %v2240 = vpop.f32.mrb[0].mxu0
    %2241 = vmatprep.mubr.bf16.mxu0 0
    %2242 = vmatmul.mubr.bf16.gmra.mrb[0].mxu0 %v2199
    %v2243 = vpop.f32.mrb[0].mxu0
    %v2244 = vadd.f32 %v2179, %v2243
    %v2245 = vpop.f32.mrb[0].mxu0
    %v2246 = vpop.f32.mrb[0].mxu0
    %v2247 = vadd.f32 %v2182, %v2246
    %v2248 = vpop.f32.mrb[0].mxu0
    %2249 = vdwg.mxu0
    %2251 = vset.pattern.permute.xlu0 0
    %2252 = vperm.xlu0 %2251, %v2097
    %v2253 = vpop.permute.xlu0 %2252
    %2256 = vset.pattern.permute.xlu0 0
    %2257 = vperm.xlu0 %2256, %v2098
    %v2258 = vpop.permute.xlu0 %2257
    %2261 = vset.pattern.permute.xlu0 0
    %2262 = vperm.xlu0 %2261, %v2099
    %v2263 = vpop.permute.xlu0 %2262
    %2266 = vset.pattern.permute.xlu0 0
    %2267 = vperm.xlu0 %2266, %v2100
    %v2268 = vpop.permute.xlu0 %2267
    %v2270 = vadd.f32 %v2236, %v2253
    %v2271 = vadd.f32 %v2239, %v2258
    %v2272 = vadd.f32 %v2244, %v2263
    %v2273 = vadd.f32 %v2247, %v2268
    %v2274 = vmax.f32 %v2270, 0.0
    %v2275 = vmax.f32 %v2271, 0.0
    %v2276 = vmax.f32 %v2272, 0.0
    %v2277 = vmax.f32 %v2273, 0.0
    %s2278 = scalar_lea.vmem %s5, 128
    %v2279 = vld [vmem:[%s2278] sm:$0xf]
    %v2280 = vld [vmem:[%s2278 + $0x4] sm:$0xf]
    %v2281 = vld [vmem:[%s2278 + $0x8] sm:$0xf]
    %v2282 = vld [vmem:[%s2278 + $0xc] sm:$0xf]
    %s2283 = scalar_lea.vmem %s5, 144
    %v2284 = vld [vmem:[%s2283] sm:$0xf]
    %v2285 = vld [vmem:[%s2283 + $0x4] sm:$0xf]
    %v2286 = vld [vmem:[%s2283 + $0x8] sm:$0xf]
    %v2287 = vld [vmem:[%s2283 + $0xc] sm:$0xf]
    %s2288 = scalar_lea.vmem %s6, 128
    %v2289 = vld [vmem:[%s2288] sm:$0xff]
    %v2290 = vld [vmem:[%s2288 + $0x8] sm:$0xff]
    %v2291 = vld [vmem:[%s2288 + $0x10] sm:$0xff]
    %v2292 = vld [vmem:[%s2288 + $0x18] sm:$0xff]
    %2293 = vrot.lane.b32.xlu0 %v2274, 16
    %v2294 = vpop.permute.xlu0 %2293
    %2295 = vrot.lane.b32.xlu0 %v2275, 16
    %v2296 = vpop.permute.xlu0 %2295
    %2297 = vrot.lane.b32.xlu0 %v2276, 16
    %v2298 = vpop.permute.xlu0 %2297
    %2299 = vrot.lane.b32.xlu0 %v2277, 16
    %v2300 = vpop.permute.xlu0 %2299
    %v2301 = vsel %vm2111, %v2294, 0.0
    %v2302 = vsel %vm2111, %v2296, 0.0
    %v2303 = vsel %vm2111, %v2298, 0.0
    %v2304 = vsel %vm2111, %v2300, 0.0
    %v2305 = vpack.c.bf16 %v2302, %v2301
    %v2306 = vpack.c.bf16 %v2304, %v2303
    %v2307 = vpack.c.bf16 %v2275, %v2274
    %v2308 = vpack.c.bf16 %v2277, %v2276
    %v2313 = vunpack.c.l.b16 %v2284
    %v2314 = vunpack.c.l.b16 %v2285
    %v2315 = vunpack.c.l.b16 %v2286
    %v2316 = vunpack.c.l.b16 %v2287
    %v2317 = vpack.c.b16 %v2314, %v2313
    %v2318 = vpack.c.b16 %v2316, %v2315
    %v2320 = vsel %vm189, %v2317, 0
    %v2323 = vsel %vm189, %v2318, 0
    %2325 = vmatprep.subr.bf16.mxu0 0
    %2326 = vmatpush1.bf16.msra.mxu0 %v2307
    %2327 = vmatprep.subr.bf16.mxu0 0
    %2328 = vmatpush1.bf16.msra.mxu0 %v2308
    %2329 = vmatprep.subr.bf16.mxu0 0
    %2330 = vmatpush1.bf16.msra.mxu0 0
    %2331 = vmatprep.subr.bf16.mxu0 0
    %2332 = vmatpush1.bf16.msra.mxu0 0
    %2333 = vmatprep.subr.bf16.mxu0 0
    %2334 = vmatpush1.bf16.msra.mxu0 0
    %2335 = vmatprep.subr.bf16.mxu0 0
    %2336 = vmatpush1.bf16.msra.mxu0 0
    %2337 = vmatprep.subr.bf16.mxu0 0
    %2338 = vmatpush1.bf16.msra.mxu0 0
    %2339 = vmatprep.subr.bf16.mxu0 0
    %2340 = vmatpush1.bf16.msra.mxu0 0
    %2341 = vmatprep.subr.bf16.mxu0 0
    %2342 = vmatpush1.bf16.msra.mxu0 0
    %2343 = vmatprep.subr.bf16.mxu0 0
    %2344 = vmatpush1.bf16.msra.mxu0 0
    %2345 = vmatprep.subr.bf16.mxu0 0
    %2346 = vmatpush1.bf16.msra.mxu0 0
    %2347 = vmatprep.subr.bf16.mxu0 0
    %2348 = vmatpush1.bf16.msra.mxu0 0
    %2349 = vmatprep.subr.bf16.mxu0 0
    %2350 = vmatpush1.bf16.msra.mxu0 0
    %2351 = vmatprep.subr.bf16.mxu0 0
    %2352 = vmatpush1.bf16.msra.mxu0 0
    %2353 = vmatprep.subr.bf16.mxu0 0
    %2354 = vmatpush1.bf16.msra.mxu0 0
    %2355 = vmatprep.subr.bf16.mxu0 0
    %2356 = vmatpush1.bf16.msra.mxu0 0
    %2357 = vmatprep.mubr.bf16.mxu0 0
    %2358 = vmatmul.mubr.bf16.gmra.mrb[0].mxu0 %v2320
    %v2359 = vpop.f32.mrb[0].mxu0
    %v2360 = vadd.f32 0.0, %v2359
    %v2361 = vpop.f32.mrb[0].mxu0
    %v2362 = vpop.f32.mrb[0].mxu0
    %v2363 = vadd.f32 0.0, %v2362
    %v2364 = vpop.f32.mrb[0].mxu0
    %2365 = vmatprep.mubr.bf16.mxu0 0
    %2366 = vmatmul.mubr.bf16.gmra.mrb[0].mxu0 %v2323
    %v2367 = vpop.f32.mrb[0].mxu0
    %v2368 = vadd.f32 0.0, %v2367
    %v2369 = vpop.f32.mrb[0].mxu0
    %v2370 = vpop.f32.mrb[0].mxu0
    %v2371 = vadd.f32 0.0, %v2370
    %v2372 = vpop.f32.mrb[0].mxu0
    %2373 = vdwg.mxu0
    %v2378 = vunpack.c.l.b16 %v2279
    %v2379 = vunpack.c.l.b16 %v2280
    %v2380 = vunpack.c.l.b16 %v2281
    %v2381 = vunpack.c.l.b16 %v2282
    %v2382 = vpack.c.b16 %v2379, %v2378
    %v2383 = vpack.c.b16 %v2381, %v2380
    %v2385 = vsel %vm189, %v2382, 0
    %v2388 = vsel %vm189, %v2383, 0
    %2390 = vmatprep.subr.bf16.mxu0 0
    %2391 = vmatpush1.bf16.msra.mxu0 %v2305
    %2392 = vmatprep.subr.bf16.mxu0 0
    %2393 = vmatpush1.bf16.msra.mxu0 %v2306
    %2394 = vmatprep.subr.bf16.mxu0 0
    %2395 = vmatpush1.bf16.msra.mxu0 0
    %2396 = vmatprep.subr.bf16.mxu0 0
    %2397 = vmatpush1.bf16.msra.mxu0 0
    %2398 = vmatprep.subr.bf16.mxu0 0
    %2399 = vmatpush1.bf16.msra.mxu0 0
    %2400 = vmatprep.subr.bf16.mxu0 0
    %2401 = vmatpush1.bf16.msra.mxu0 0
    %2402 = vmatprep.subr.bf16.mxu0 0
    %2403 = vmatpush1.bf16.msra.mxu0 0
    %2404 = vmatprep.subr.bf16.mxu0 0
    %2405 = vmatpush1.bf16.msra.mxu0 0
    %2406 = vmatprep.subr.bf16.mxu0 0
    %2407 = vmatpush1.bf16.msra.mxu0 0
    %2408 = vmatprep.subr.bf16.mxu0 0
    %2409 = vmatpush1.bf16.msra.mxu0 0
    %2410 = vmatprep.subr.bf16.mxu0 0
    %2411 = vmatpush1.bf16.msra.mxu0 0
    %2412 = vmatprep.subr.bf16.mxu0 0
    %2413 = vmatpush1.bf16.msra.mxu0 0
    %2414 = vmatprep.subr.bf16.mxu0 0
    %2415 = vmatpush1.bf16.msra.mxu0 0
    %2416 = vmatprep.subr.bf16.mxu0 0
    %2417 = vmatpush1.bf16.msra.mxu0 0
    %2418 = vmatprep.subr.bf16.mxu0 0
    %2419 = vmatpush1.bf16.msra.mxu0 0
    %2420 = vmatprep.subr.bf16.mxu0 0
    %2421 = vmatpush1.bf16.msra.mxu0 0
    %2422 = vmatprep.mubr.bf16.mxu0 0
    %2423 = vmatmul.mubr.bf16.gmra.mrb[0].mxu0 %v2385
    %v2424 = vpop.f32.mrb[0].mxu0
    %v2425 = vadd.f32 %v2360, %v2424
    %v2426 = vpop.f32.mrb[0].mxu0
    %v2427 = vpop.f32.mrb[0].mxu0
    %v2428 = vadd.f32 %v2363, %v2427
    %v2429 = vpop.f32.mrb[0].mxu0
    %2430 = vmatprep.mubr.bf16.mxu0 0
    %2431 = vmatmul.mubr.bf16.gmra.mrb[0].mxu0 %v2388
    %v2432 = vpop.f32.mrb[0].mxu0
    %v2433 = vadd.f32 %v2368, %v2432
    %v2434 = vpop.f32.mrb[0].mxu0
    %v2435 = vpop.f32.mrb[0].mxu0
    %v2436 = vadd.f32 %v2371, %v2435
    %v2437 = vpop.f32.mrb[0].mxu0
    %2438 = vdwg.mxu0
    %2440 = vset.pattern.permute.xlu0 0
    %2441 = vperm.xlu0 %2440, %v2289
    %v2442 = vpop.permute.xlu0 %2441
    %2445 = vset.pattern.permute.xlu0 0
    %2446 = vperm.xlu0 %2445, %v2290
    %v2447 = vpop.permute.xlu0 %2446
    %2450 = vset.pattern.permute.xlu0 0
    %2451 = vperm.xlu0 %2450, %v2291
    %v2452 = vpop.permute.xlu0 %2451
    %2455 = vset.pattern.permute.xlu0 0
    %2456 = vperm.xlu0 %2455, %v2292
    %v2457 = vpop.permute.xlu0 %2456
    %v2459 = vadd.f32 %v2425, %v2442
    %v2460 = vadd.f32 %v2428, %v2447
    %v2461 = vadd.f32 %v2433, %v2452
    %v2462 = vadd.f32 %v2436, %v2457
    %v2463 = vmax.f32 %v2459, 0.0
    %v2464 = vmax.f32 %v2460, 0.0
    %v2465 = vmax.f32 %v2461, 0.0
    %v2466 = vmax.f32 %v2462, 0.0
    %s2467 = scalar_lea.vmem %s7, 64
    %v2468 = vld [vmem:[%s2467] sm:$0xf]
    %v2469 = vld [vmem:[%s2467 + $0x4] sm:$0xf]
    %v2470 = vld [vmem:[%s2467 + $0x8] sm:$0xf]
    %v2471 = vld [vmem:[%s2467 + $0xc] sm:$0xf]
    %v2472 = vpack.c.bf16 %v2464, %v2463
    %v2473 = vpack.c.bf16 %v2466, %v2465
    %s2474 = scalar_lea.vmem %s8, 128
    %v2475 = vld [vmem:[%s2474] sm:$0xff]
    %v2476 = vld [vmem:[%s2474 + $0x8] sm:$0xff]
    %v2477 = vld [vmem:[%s2474 + $0x10] sm:$0xff]
    %v2478 = vld [vmem:[%s2474 + $0x18] sm:$0xff]
    %2480 = vset.pattern.permute.xlu0 0
    %2481 = vperm.xlu0 %2480, %v2475
    %v2482 = vpop.permute.xlu0 %2481
    %2485 = vset.pattern.permute.xlu0 0
    %2486 = vperm.xlu0 %2485, %v2476
    %v2487 = vpop.permute.xlu0 %2486
    %2490 = vset.pattern.permute.xlu0 0
    %2491 = vperm.xlu0 %2490, %v2477
    %v2492 = vpop.permute.xlu0 %2491
    %2495 = vset.pattern.permute.xlu0 0
    %2496 = vperm.xlu0 %2495, %v2478
    %v2497 = vpop.permute.xlu0 %2496
    %v2503 = vunpack.c.l.b16 %v2468
    %v2504 = vunpack.c.l.b16 %v2469
    %v2505 = vunpack.c.l.b16 %v2470
    %v2506 = vunpack.c.l.b16 %v2471
    %v2507 = vpack.c.b16 %v2504, %v2503
    %v2508 = vpack.c.b16 %v2506, %v2505
    %v2510 = vsel %vm189, %v2507, 0
    %v2513 = vsel %vm189, %v2508, 0
    %2515 = vmatprep.subr.bf16.mxu0 0
    %2516 = vmatpush1.bf16.msra.mxu0 %v2472
    %2517 = vmatprep.subr.bf16.mxu0 0
    %2518 = vmatpush1.bf16.msra.mxu0 %v2473
    %2519 = vmatprep.subr.bf16.mxu0 0
    %2520 = vmatpush1.bf16.msra.mxu0 0
    %2521 = vmatprep.subr.bf16.mxu0 0
    %2522 = vmatpush1.bf16.msra.mxu0 0
    %2523 = vmatprep.subr.bf16.mxu0 0
    %2524 = vmatpush1.bf16.msra.mxu0 0
    %2525 = vmatprep.subr.bf16.mxu0 0
    %2526 = vmatpush1.bf16.msra.mxu0 0
    %2527 = vmatprep.subr.bf16.mxu0 0
    %2528 = vmatpush1.bf16.msra.mxu0 0
    %2529 = vmatprep.subr.bf16.mxu0 0
    %2530 = vmatpush1.bf16.msra.mxu0 0
    %2531 = vmatprep.subr.bf16.mxu0 0
    %2532 = vmatpush1.bf16.msra.mxu0 0
    %2533 = vmatprep.subr.bf16.mxu0 0
    %2534 = vmatpush1.bf16.msra.mxu0 0
    %2535 = vmatprep.subr.bf16.mxu0 0
    %2536 = vmatpush1.bf16.msra.mxu0 0
    %2537 = vmatprep.subr.bf16.mxu0 0
    %2538 = vmatpush1.bf16.msra.mxu0 0
    %2539 = vmatprep.subr.bf16.mxu0 0
    %2540 = vmatpush1.bf16.msra.mxu0 0
    %2541 = vmatprep.subr.bf16.mxu0 0
    %2542 = vmatpush1.bf16.msra.mxu0 0
    %2543 = vmatprep.subr.bf16.mxu0 0
    %2544 = vmatpush1.bf16.msra.mxu0 0
    %2545 = vmatprep.subr.bf16.mxu0 0
    %2546 = vmatpush1.bf16.msra.mxu0 0
    %2547 = vmatprep.mubr.bf16.mxu0 0
    %2548 = vmatmul.mubr.bf16.gmra.mrb[0].mxu0 %v2510
    %v2549 = vpop.f32.mrb[0].mxu0
    %v2550 = vadd.f32 %v2482, %v2549
    %v2551 = vpop.f32.mrb[0].mxu0
    %v2552 = vpop.f32.mrb[0].mxu0
    %v2553 = vadd.f32 %v2487, %v2552
    %v2554 = vpop.f32.mrb[0].mxu0
    %2555 = vmatprep.mubr.bf16.mxu0 0
    %2556 = vmatmul.mubr.bf16.gmra.mrb[0].mxu0 %v2513
    %v2557 = vpop.f32.mrb[0].mxu0
    %v2558 = vadd.f32 %v2492, %v2557
    %v2559 = vpop.f32.mrb[0].mxu0
    %v2560 = vpop.f32.mrb[0].mxu0
    %v2561 = vadd.f32 %v2497, %v2560
    %v2562 = vpop.f32.mrb[0].mxu0
    %2563 = vdwg.mxu0
    %v2564 = vadd.f32 %v2550, %v2082
    %v2565 = vadd.f32 %v2553, %v2083
    %v2566 = vadd.f32 %v2558, %v2084
    %v2567 = vadd.f32 %v2561, %v2085
    %v2568 = vmax.f32 %v2564, 0.0
    %v2569 = vmax.f32 %v2565, 0.0
    %v2570 = vmax.f32 %v2566, 0.0
    %v2571 = vmax.f32 %v2567, 0.0
    %v2572 = vpack.c.bf16 %v2569, %v2568
    %v2573 = vpack.c.bf16 %v2571, %v2570
    %v2576 = vunpack.c.l.b16 %v2572
    %v2577 = vunpack.c.h.b16 %v2572
    %v2578 = vunpack.c.l.b16 %v2573
    %v2579 = vunpack.c.h.b16 %v2573
    %v2580 = vpack.c.b16 %v2576, %v2576
    %v2581 = vpack.c.b16 %v2577, %v2577
    %v2582 = vpack.c.b16 %v2578, %v2578
    %v2583 = vpack.c.b16 %v2579, %v2579
    %2588 = vst [vmem:[#allocation2] sm:$0xf] %v2580
    %2589 = vst [vmem:[#allocation2 + $0x4] sm:$0xf] %v2581
    %2590 = vst [vmem:[#allocation2 + $0x8] sm:$0xf] %v2582
    %2591 = vst [vmem:[#allocation2 + $0xc] sm:$0xf] %v2583
    // Predicated region
    $region38: #{tpu_custom_call.1} parent=1 // pred_check
      _
    $region39: #{tpu_custom_call.1} parent=1 // pred_check_branch
      %2593 = sbr.rel (0) target = $region41
    $region40: #{tpu_custom_call.1} parent=1 // pred_region
      %s2595 = ssub.s32 256, 256
      %2596 = vsyncadd [#allocation3], %s2595
      %s2597 = sshll.u32 [#allocation2], 4
      %s2598 = int_to_ptr.vmem [resolvable:$true] %s2597
      %2603 = dma.vmem_to_hbm [thread:$0]  %s2598, 256, %s9, [#allocation3], 64, 64, 4
    $region41: #{tpu_custom_call.1} parent=1 // pred_fallthru
      _
    // Predicated region
    $region42: #{tpu_custom_call.1} parent=1 // pred_check
      _
    $region43: #{tpu_custom_call.1} parent=1 // pred_check_branch
      %2605 = sbr.rel (0) target = $region45
    $region44: #{tpu_custom_call.1} parent=1 // pred_region
      %2606 = dma.done [#allocation3], 256
    $region45: #{tpu_custom_call.1} parent=1 // pred_fallthru
      _
    %2607 = vsyncpa [#allocation3], 1

</llo_original>
